<compile_context>
chip_gen: v7x
topology: tpu7x:2x2x1
jax: 0.10.0
libtpu: 0.0.40
codegen_flags: <defaults>
</compile_context>

<pallas_src>
import math
from functools import partial

import jax
import jax.numpy as jnp
from jax import lax
from jax.experimental import pallas as pl
from jax.experimental.pallas import tpu as pltpu


# ---------------------------------------------------------------------------
# Pallas kernel: whole transformer block for one batch element
# ---------------------------------------------------------------------------
def _transformer_block_kernel(
    x_ref,        # (1, T, D)   f32
    wqkv_ref,     # (D, 3D)     bf16  [Wq^T | Wk^T | Wv^T]
    wo_ref,       # (D, D)      bf16  out_proj.weight^T
    bo_ref,       # (1, D)      f32   out_proj.bias
    g1_ref,       # (1, D)      f32   norm1.scale
    s1_ref,       # (1, D)      f32   norm1.shift
    g2_ref,       # (1, D)      f32   norm2.scale
    s2_ref,       # (1, D)      f32   norm2.shift
    w1_ref,       # (D, 4D)     bf16  ff.linear1.weight^T
    b1_ref,       # (1, 4D)     f32   ff.linear1.bias
    w2_ref,       # (4D, D)     bf16  ff.linear2.weight^T
    b2_ref,       # (1, D)      f32   ff.linear2.bias
    o_ref,        # (1, T, D)   f32
    q_hs,         # (H, T, hd)  f32 scratch
    k_hs,         # (H, T, hd)  f32 scratch
    v_hs,         # (H, T, hd)  f32 scratch
    ctx_ref,      # (T, D)      f32 scratch
    *,
    num_heads: int,
):
    x = x_ref[0]                      # (T, D), float32
    T, D = x.shape
    hd = D // num_heads
    eps = 1e-5

    def layernorm(v, gamma, beta):
        mean = jnp.mean(v, axis=-1, keepdims=True)
        var = jnp.mean((v - mean) ** 2, axis=-1, keepdims=True)    # unbiased=False
        std = jnp.sqrt(var)
        inv = pl.reciprocal(std + eps, approx=True)                # eps on std (matches module)
        return gamma * ((v - mean) * inv) + beta

    # ---- norm1 -> fused QKV projection (single MXU pass, bf16 in / f32 acc) ----
    xn = layernorm(x, g1_ref[0], s1_ref[0])
    qkv = jnp.dot(xn.astype(jnp.bfloat16), wqkv_ref[...],
                  preferred_element_type=jnp.float32)              # (T, 3D) f32

    # Split into head-major (H, T, hd) scratches; fold 1/sqrt(hd) into q once.
    inv_sqrt_hd = 1.0 / math.sqrt(hd)
    for h in range(num_heads):
        lo = h * hd
        q_hs[h] = qkv[:, lo:lo + hd] * inv_sqrt_hd
        k_hs[h] = qkv[:, D + lo:D + lo + hd]
        v_hs[h] = qkv[:, 2 * D + lo:2 * D + lo + hd]

    # Additive causal bias, built once and shared across all heads (finite, no -inf).
    rows = lax.broadcasted_iota(jnp.int32, (T, T), 0)
    cols = lax.broadcasted_iota(jnp.int32, (T, T), 1)
    causal_bias = jnp.where(rows >= cols, 0.0, -1e30).astype(jnp.float32)   # (T, T)

    # ---- batched multi-head causal attention (all heads in two dot_generals) ----
    q = q_hs[...].astype(jnp.bfloat16)
    k = k_hs[...].astype(jnp.bfloat16)
    v = v_hs[...].astype(jnp.bfloat16)
    scores = jnp.einsum("hqd,hkd->hqk", q, k,
                        preferred_element_type=jnp.float32)        # (H, T, T)
    scores = scores + causal_bias[None, :, :]
    m = jnp.max(scores, axis=-1, keepdims=True)
    p = jnp.exp(scores - m)
    denom = jnp.sum(p, axis=-1, keepdims=True)
    p = p * pl.reciprocal(denom, approx=True)
    ctx_h = jnp.einsum("hqk,hkd->hqd", p.astype(jnp.bfloat16), v,
                       preferred_element_type=jnp.float32)         # (H, T, hd)

    # Scatter heads back into a (T, D) VMEM scratch slab (no concatenate).
    for h in range(num_heads):
        ctx_ref[:, h * hd:(h + 1) * hd] = ctx_h[h]

    attn_out = jnp.dot(ctx_ref[...].astype(jnp.bfloat16), wo_ref[...],
                       preferred_element_type=jnp.float32) + bo_ref[0]
    # drop_shortcut: identity (eval mode)
    x1 = x + attn_out

    # ---- norm2 -> feed forward (Linear -> GELU(tanh) -> Linear) ----
    xn2 = layernorm(x1, g2_ref[0], s2_ref[0])
    h1 = jnp.dot(xn2.astype(jnp.bfloat16), w1_ref[...],
                 preferred_element_type=jnp.float32) + b1_ref[0]   # (T, 4D)
    c = math.sqrt(2.0 / math.pi)
    gelu = 0.5 * h1 * (1.0 + jnp.tanh(c * (h1 + 0.044715 * h1 * h1 * h1)))
    ff = jnp.dot(gelu.astype(jnp.bfloat16), w2_ref[...],
                 preferred_element_type=jnp.float32) + b2_ref[0]   # (T, D)

    o_ref[0] = x1 + ff


# ---------------------------------------------------------------------------
# Wrapper
# ---------------------------------------------------------------------------
def _const_index_map(ndim):
    def index_map(b):
        return (0,) * ndim
    return index_map


def _build_call(B, T, D, num_heads, single_buffer_weights):
    H4 = 4 * D
    hd = D // num_heads

    def const_spec(shape):
        kwargs = {}
        if single_buffer_weights:
            # Block index never changes across the batch grid -> one VMEM copy is enough
            # (default double-buffering would double weight residency for no benefit).
            kwargs["pipeline_mode"] = pl.Buffered(1)
        return pl.BlockSpec(shape, _const_index_map(len(shape)), **kwargs)

    in_specs = [
        pl.BlockSpec((1, T, D), lambda b: (b, 0, 0)),   # x
        const_spec((D, 3 * D)),                         # fused [Wq|Wk|Wv]^T
        const_spec((D, D)),                             # Wo^T
        const_spec((1, D)),                             # bo
        const_spec((1, D)),                             # norm1 scale
        const_spec((1, D)),                             # norm1 shift
        const_spec((1, D)),                             # norm2 scale
        const_spec((1, D)),                             # norm2 shift
        const_spec((D, H4)),                            # W1^T
        const_spec((1, H4)),                            # b1
        const_spec((H4, D)),                            # W2^T
        const_spec((1, D)),                             # b2
    ]

    kernel = partial(_transformer_block_kernel, num_heads=num_heads)

    return pl.pallas_call(
        kernel,
        out_shape=jax.ShapeDtypeStruct((B, T, D), jnp.float32),
        grid_spec=pltpu.PrefetchScalarGridSpec(
            num_scalar_prefetch=0,
            grid=(B,),
            in_specs=in_specs,
            out_specs=pl.BlockSpec((1, T, D), lambda b: (b, 0, 0)),
            scratch_shapes=[
                pltpu.VMEM((num_heads, T, hd), jnp.float32),   # q, head-major
                pltpu.VMEM((num_heads, T, hd), jnp.float32),   # k, head-major
                pltpu.VMEM((num_heads, T, hd), jnp.float32),   # v, head-major
                pltpu.VMEM((T, D), jnp.float32),               # context slab
            ],
        ),
        compiler_params=pltpu.CompilerParams(
            dimension_semantics=("parallel",),
            vmem_limit_bytes=48 * 1024 * 1024,
        ),
    )


def transformer_block(x, params, num_heads):
    B, T, D = x.shape
    # Fuse Q/K/V weights column-wise and ship bf16 weights to the MXU (f32 accumulation
    # is requested inside the kernel via preferred_element_type).
    wqkvT = jnp.concatenate(
        [params["wqT"], params["wkT"], params["wvT"]], axis=1
    ).astype(jnp.bfloat16)                                           # (D, 3D)
    args = (
        x,
        wqkvT,
        params["woT"].astype(jnp.bfloat16),
        params["bo"],
        params["g1"], params["s1"], params["g2"], params["s2"],
        params["w1T"].astype(jnp.bfloat16),
        params["b1"],
        params["w2T"].astype(jnp.bfloat16),
        params["b2"],
    )
    try:
        return _build_call(B, T, D, num_heads, single_buffer_weights=True)(*args)
    except Exception:
        # pl.Buffered(1) pipeline_mode not supported by this JAX version -> fall back to
        # the default (double-buffered) weight specs; kernel body is identical.
        return _build_call(B, T, D, num_heads, single_buffer_weights=False)(*args)


# ---------------------------------------------------------------------------
# Pure-JAX reference (for correctness check)
# ---------------------------------------------------------------------------
def transformer_block_ref(x, p, num_heads):
    eps = 1e-5

    def ln(v, g, b):
        mean = v.mean(-1, keepdims=True)
        std = jnp.sqrt(((v - mean) ** 2).mean(-1, keepdims=True))
        return g * ((v - mean) / (std + eps)) + b

    B, T, D = x.shape
    hd = D // num_heads

    xn = ln(x, p["g1"][0], p["s1"][0])
    q = xn @ p["wqT"]
    k = xn @ p["wkT"]
    v = xn @ p["wvT"]
    q = q.reshape(B, T, num_heads, hd).transpose(0, 2, 1, 3)
    k = k.reshape(B, T, num_heads, hd).transpose(0, 2, 1, 3)
    v = v.reshape(B, T, num_heads, hd).transpose(0, 2, 1, 3)
    scores = jnp.einsum("bhqd,bhkd->bhqk", q, k) / math.sqrt(hd)
    mask = jnp.triu(jnp.ones((T, T), bool), k=1)
    scores = jnp.where(mask, -jnp.inf, scores)
    w = jax.nn.softmax(scores, axis=-1)
    ctx = jnp.einsum("bhqk,bhkd->bhqd", w, v).transpose(0, 2, 1, 3).reshape(B, T, D)
    attn_out = ctx @ p["woT"] + p["bo"][0]
    x1 = x + attn_out

    xn2 = ln(x1, p["g2"][0], p["s2"][0])
    h1 = xn2 @ p["w1T"] + p["b1"][0]
    c = math.sqrt(2.0 / math.pi)
    gelu = 0.5 * h1 * (1 + jnp.tanh(c * (h1 + 0.044715 * h1 ** 3)))
    ff = gelu @ p["w2T"] + p["b2"][0]
    return x1 + ff


# ---------------------------------------------------------------------------
if __name__ == "__main__":
    # cfg: emb_dim=32, context_length=8, n_heads=4, drop_rate=0.0 (identity), qkv_bias=False
    B, T, D, H = 2, 8, 32, 4
    H4 = 4 * D

    key = jax.random.PRNGKey(0)
    keys = jax.random.split(key, 8)

    def w(k, shape, scale=0.1):
        return (scale * jax.random.normal(k, shape)).astype(jnp.float32)

    params = {
        "wqT": w(keys[0], (D, D)),
        "wkT": w(keys[1], (D, D)),
        "wvT": w(keys[2], (D, D)),
        "woT": w(keys[3], (D, D)),
        "bo":  w(keys[4], (1, D), 0.02),
        "g1":  jnp.ones((1, D), jnp.float32),    # LayerNorm init: scale=1
        "s1":  jnp.zeros((1, D), jnp.float32),   # shift=0
        "g2":  jnp.ones((1, D), jnp.float32),
        "s2":  jnp.zeros((1, D), jnp.float32),
        "w1T": w(keys[5], (D, H4)),
        "b1":  jnp.zeros((1, H4), jnp.float32),
        "w2T": w(keys[6], (H4, D)),
        "b2":  jnp.zeros((1, D), jnp.float32),
    }

    x = jax.random.normal(keys[7], (B, T, D), jnp.float32)

    out = transformer_block(x, params, num_heads=H)
    out = jax.block_until_ready(out)

    ref = transformer_block_ref(x, params, num_heads=H)
    assert out.shape == (B, T, D)
    # Tolerance accounts for bf16 MXU operands + approx reciprocals vs. the f32 reference.
    assert jnp.allclose(out, ref, rtol=2e-2, atol=2e-2), "Pallas kernel mismatch vs JAX reference"

    print("KERNEL_OK")
</pallas_src>

<mosaic_0001>
module attributes {stable_mosaic.version = 11 : i64} {
  func.func @_transformer_block_kernel(%arg0: i32, %arg1: memref<1x8x32xf32, #tpu.memory_space<vmem>>, %arg2: memref<32x96xbf16, #tpu.memory_space<vmem>>, %arg3: memref<32x32xbf16, #tpu.memory_space<vmem>>, %arg4: memref<1x32xf32, #tpu.memory_space<vmem>>, %arg5: memref<1x32xf32, #tpu.memory_space<vmem>>, %arg6: memref<1x32xf32, #tpu.memory_space<vmem>>, %arg7: memref<1x32xf32, #tpu.memory_space<vmem>>, %arg8: memref<1x32xf32, #tpu.memory_space<vmem>>, %arg9: memref<32x128xbf16, #tpu.memory_space<vmem>>, %arg10: memref<1x128xf32, #tpu.memory_space<vmem>>, %arg11: memref<128x32xbf16, #tpu.memory_space<vmem>>, %arg12: memref<1x32xf32, #tpu.memory_space<vmem>>, %arg13: memref<1x8x32xf32, #tpu.memory_space<vmem>>, %arg14: memref<4x8x8xf32, #tpu.memory_space<vmem>>, %arg15: memref<4x8x8xf32, #tpu.memory_space<vmem>>, %arg16: memref<4x8x8xf32, #tpu.memory_space<vmem>>, %arg17: memref<8x32xf32, #tpu.memory_space<vmem>>) attributes {dimension_semantics = [#tpu.dimension_semantics<parallel>], iteration_bounds = array<i64: 2>, scalar_prefetch = 0 : i64, scratch_operands = 4 : i64, tpu.core_type = #tpu.core_type<tc>, window_params = [{transform_indices = @transform_0, window_bounds = array<i64: 1, 8, 32>}, {pipeline_mode = #tpu.pipeline_mode<synchronous>, transform_indices = @transform_1, window_bounds = array<i64: 32, 96>}, {pipeline_mode = #tpu.pipeline_mode<synchronous>, transform_indices = @transform_2, window_bounds = array<i64: 32, 32>}, {pipeline_mode = #tpu.pipeline_mode<synchronous>, transform_indices = @transform_3, window_bounds = array<i64: 1, 32>}, {pipeline_mode = #tpu.pipeline_mode<synchronous>, transform_indices = @transform_4, window_bounds = array<i64: 1, 32>}, {pipeline_mode = #tpu.pipeline_mode<synchronous>, transform_indices = @transform_5, window_bounds = array<i64: 1, 32>}, {pipeline_mode = #tpu.pipeline_mode<synchronous>, transform_indices = @transform_6, window_bounds = array<i64: 1, 32>}, {pipeline_mode = #tpu.pipeline_mode<synchronous>, transform_indices = @transform_7, window_bounds = array<i64: 1, 32>}, {pipeline_mode = #tpu.pipeline_mode<synchronous>, transform_indices = @transform_8, window_bounds = array<i64: 32, 128>}, {pipeline_mode = #tpu.pipeline_mode<synchronous>, transform_indices = @transform_9, window_bounds = array<i64: 1, 128>}, {pipeline_mode = #tpu.pipeline_mode<synchronous>, transform_indices = @transform_10, window_bounds = array<i64: 128, 32>}, {pipeline_mode = #tpu.pipeline_mode<synchronous>, transform_indices = @transform_11, window_bounds = array<i64: 1, 32>}, {transform_indices = @transform_12, window_bounds = array<i64: 1, 8, 32>}]} {
    %c0 = arith.constant 0 : index
    %c0_0 = arith.constant 0 : index
    %c0_1 = arith.constant 0 : index
    %0 = vector.load %arg1[%c0, %c0_0, %c0_1] : memref<1x8x32xf32, #tpu.memory_space<vmem>>, vector<1x8x32xf32>
    %1 = vector.shape_cast %0 : vector<1x8x32xf32> to vector<8x32xf32>
    %c0_2 = arith.constant 0 : index
    %c0_3 = arith.constant 0 : index
    %2 = vector.load %arg5[%c0_2, %c0_3] : memref<1x32xf32, #tpu.memory_space<vmem>>, vector<1x32xf32>
    %3 = vector.shape_cast %2 : vector<1x32xf32> to vector<32xf32>
    %c0_4 = arith.constant 0 : index
    %c0_5 = arith.constant 0 : index
    %4 = vector.load %arg6[%c0_4, %c0_5] : memref<1x32xf32, #tpu.memory_space<vmem>>, vector<1x32xf32>
    %5 = vector.shape_cast %4 : vector<1x32xf32> to vector<32xf32>
    %cst = arith.constant dense<0.000000e+00> : vector<8xf32>
    %6 = vector.multi_reduction <add>, %1, %cst [1] : vector<8x32xf32> to vector<8xf32>
    %7 = vector.shape_cast %6 : vector<8xf32> to vector<8x1xf32>
    %cst_6 = arith.constant 3.200000e+01 : f32
    %8 = vector.broadcast %cst_6 : f32 to vector<8x1xf32>
    %9 = arith.divf %7, %8 : vector<8x1xf32>
    %10 = vector.broadcast %9 : vector<8x1xf32> to vector<8x32xf32>
    %11 = arith.subf %1, %10 : vector<8x32xf32>
    %12 = arith.mulf %11, %11 : vector<8x32xf32>
    %cst_7 = arith.constant dense<0.000000e+00> : vector<8xf32>
    %13 = vector.multi_reduction <add>, %12, %cst_7 [1] : vector<8x32xf32> to vector<8xf32>
    %14 = vector.shape_cast %13 : vector<8xf32> to vector<8x1xf32>
    %cst_8 = arith.constant 3.200000e+01 : f32
    %15 = vector.broadcast %cst_8 : f32 to vector<8x1xf32>
    %16 = arith.divf %14, %15 : vector<8x1xf32>
    %17 = math.sqrt %16 : vector<8x1xf32>
    %cst_9 = arith.constant 9.99999974E-6 : f32
    %18 = vector.broadcast %cst_9 : f32 to vector<8x1xf32>
    %19 = arith.addf %17, %18 : vector<8x1xf32>
    %20 = tpu.reciprocal %19 {approx = true} : vector<8x1xf32> -> vector<8x1xf32>
    %21 = vector.broadcast %9 : vector<8x1xf32> to vector<8x32xf32>
    %22 = arith.subf %1, %21 : vector<8x32xf32>
    %23 = vector.broadcast %20 : vector<8x1xf32> to vector<8x32xf32>
    %24 = arith.mulf %22, %23 : vector<8x32xf32>
    %25 = vector.shape_cast %3 : vector<32xf32> to vector<1x32xf32>
    %26 = vector.broadcast %25 : vector<1x32xf32> to vector<8x32xf32>
    %27 = arith.mulf %26, %24 : vector<8x32xf32>
    %28 = vector.shape_cast %5 : vector<32xf32> to vector<1x32xf32>
    %29 = vector.broadcast %28 : vector<1x32xf32> to vector<8x32xf32>
    %30 = arith.addf %27, %29 : vector<8x32xf32>
    %31 = arith.truncf %30 : vector<8x32xf32> to vector<8x32xbf16>
    %c0_10 = arith.constant 0 : index
    %c0_11 = arith.constant 0 : index
    %32 = vector.load %arg2[%c0_10, %c0_11] : memref<32x96xbf16, #tpu.memory_space<vmem>>, vector<32x96xbf16>
    %cst_12 = arith.constant dense<0.000000e+00> : vector<8x96xf32>
    %33 = tpu.matmul %31, %32, %cst_12 {dimension_numbers = #tpu.dot_dimension_numbers<[1], [0], [0], [1], [0, 0, 1, 1], [], []>} : vector<8x32xbf16>, vector<32x96xbf16>, vector<8x96xf32> -> vector<8x96xf32>
    %34 = vector.extract_strided_slice %33 {offsets = [0, 0], sizes = [8, 8], strides = [1, 1]} : vector<8x96xf32> to vector<8x8xf32>
    %cst_13 = arith.constant 0.353553385 : f32
    %35 = vector.broadcast %cst_13 : f32 to vector<8x8xf32>
    %36 = arith.mulf %34, %35 : vector<8x8xf32>
    %c0_14 = arith.constant 0 : index
    %c0_15 = arith.constant 0 : index
    %c0_16 = arith.constant 0 : index
    %37 = vector.load %arg14[%c0_14, %c0_15, %c0_16] : memref<4x8x8xf32, #tpu.memory_space<vmem>>, vector<1x8x8xf32>
    %38 = vector.shape_cast %37 : vector<1x8x8xf32> to vector<8x8xf32>
    %39 = vector.shape_cast %36 : vector<8x8xf32> to vector<1x8x8xf32>
    tpu.vector_store %arg14[%c0_14, %c0_15, %c0_16], %39 {strides = array<i32>} : memref<4x8x8xf32, #tpu.memory_space<vmem>>, vector<1x8x8xf32>,
    %40 = vector.extract_strided_slice %33 {offsets = [0, 32], sizes = [8, 8], strides = [1, 1]} : vector<8x96xf32> to vector<8x8xf32>
    %c0_17 = arith.constant 0 : index
    %c0_18 = arith.constant 0 : index
    %c0_19 = arith.constant 0 : index
    %41 = vector.load %arg15[%c0_17, %c0_18, %c0_19] : memref<4x8x8xf32, #tpu.memory_space<vmem>>, vector<1x8x8xf32>
    %42 = vector.shape_cast %41 : vector<1x8x8xf32> to vector<8x8xf32>
    %43 = vector.shape_cast %40 : vector<8x8xf32> to vector<1x8x8xf32>
    tpu.vector_store %arg15[%c0_17, %c0_18, %c0_19], %43 {strides = array<i32>} : memref<4x8x8xf32, #tpu.memory_space<vmem>>, vector<1x8x8xf32>,
    %44 = vector.extract_strided_slice %33 {offsets = [0, 64], sizes = [8, 8], strides = [1, 1]} : vector<8x96xf32> to vector<8x8xf32>
    %c0_20 = arith.constant 0 : index
    %c0_21 = arith.constant 0 : index
    %c0_22 = arith.constant 0 : index
    %45 = vector.load %arg16[%c0_20, %c0_21, %c0_22] : memref<4x8x8xf32, #tpu.memory_space<vmem>>, vector<1x8x8xf32>
    %46 = vector.shape_cast %45 : vector<1x8x8xf32> to vector<8x8xf32>
    %47 = vector.shape_cast %44 : vector<8x8xf32> to vector<1x8x8xf32>
    tpu.vector_store %arg16[%c0_20, %c0_21, %c0_22], %47 {strides = array<i32>} : memref<4x8x8xf32, #tpu.memory_space<vmem>>, vector<1x8x8xf32>,
    %48 = vector.extract_strided_slice %33 {offsets = [0, 8], sizes = [8, 8], strides = [1, 1]} : vector<8x96xf32> to vector<8x8xf32>
    %cst_23 = arith.constant 0.353553385 : f32
    %49 = vector.broadcast %cst_23 : f32 to vector<8x8xf32>
    %50 = arith.mulf %48, %49 : vector<8x8xf32>
    %c1 = arith.constant 1 : index
    %c0_24 = arith.constant 0 : index
    %c0_25 = arith.constant 0 : index
    %51 = vector.load %arg14[%c1, %c0_24, %c0_25] : memref<4x8x8xf32, #tpu.memory_space<vmem>>, vector<1x8x8xf32>
    %52 = vector.shape_cast %51 : vector<1x8x8xf32> to vector<8x8xf32>
    %53 = vector.shape_cast %50 : vector<8x8xf32> to vector<1x8x8xf32>
    tpu.vector_store %arg14[%c1, %c0_24, %c0_25], %53 {strides = array<i32>} : memref<4x8x8xf32, #tpu.memory_space<vmem>>, vector<1x8x8xf32>,
    %54 = vector.extract_strided_slice %33 {offsets = [0, 40], sizes = [8, 8], strides = [1, 1]} : vector<8x96xf32> to vector<8x8xf32>
    %c1_26 = arith.constant 1 : index
    %c0_27 = arith.constant 0 : index
    %c0_28 = arith.constant 0 : index
    %55 = vector.load %arg15[%c1_26, %c0_27, %c0_28] : memref<4x8x8xf32, #tpu.memory_space<vmem>>, vector<1x8x8xf32>
    %56 = vector.shape_cast %55 : vector<1x8x8xf32> to vector<8x8xf32>
    %57 = vector.shape_cast %54 : vector<8x8xf32> to vector<1x8x8xf32>
    tpu.vector_store %arg15[%c1_26, %c0_27, %c0_28], %57 {strides = array<i32>} : memref<4x8x8xf32, #tpu.memory_space<vmem>>, vector<1x8x8xf32>,
    %58 = vector.extract_strided_slice %33 {offsets = [0, 72], sizes = [8, 8], strides = [1, 1]} : vector<8x96xf32> to vector<8x8xf32>
    %c1_29 = arith.constant 1 : index
    %c0_30 = arith.constant 0 : index
    %c0_31 = arith.constant 0 : index
    %59 = vector.load %arg16[%c1_29, %c0_30, %c0_31] : memref<4x8x8xf32, #tpu.memory_space<vmem>>, vector<1x8x8xf32>
    %60 = vector.shape_cast %59 : vector<1x8x8xf32> to vector<8x8xf32>
    %61 = vector.shape_cast %58 : vector<8x8xf32> to vector<1x8x8xf32>
    tpu.vector_store %arg16[%c1_29, %c0_30, %c0_31], %61 {strides = array<i32>} : memref<4x8x8xf32, #tpu.memory_space<vmem>>, vector<1x8x8xf32>,
    %62 = vector.extract_strided_slice %33 {offsets = [0, 16], sizes = [8, 8], strides = [1, 1]} : vector<8x96xf32> to vector<8x8xf32>
    %cst_32 = arith.constant 0.353553385 : f32
    %63 = vector.broadcast %cst_32 : f32 to vector<8x8xf32>
    %64 = arith.mulf %62, %63 : vector<8x8xf32>
    %c2 = arith.constant 2 : index
    %c0_33 = arith.constant 0 : index
    %c0_34 = arith.constant 0 : index
    %65 = vector.load %arg14[%c2, %c0_33, %c0_34] : memref<4x8x8xf32, #tpu.memory_space<vmem>>, vector<1x8x8xf32>
    %66 = vector.shape_cast %65 : vector<1x8x8xf32> to vector<8x8xf32>
    %67 = vector.shape_cast %64 : vector<8x8xf32> to vector<1x8x8xf32>
    tpu.vector_store %arg14[%c2, %c0_33, %c0_34], %67 {strides = array<i32>} : memref<4x8x8xf32, #tpu.memory_space<vmem>>, vector<1x8x8xf32>,
    %68 = vector.extract_strided_slice %33 {offsets = [0, 48], sizes = [8, 8], strides = [1, 1]} : vector<8x96xf32> to vector<8x8xf32>
    %c2_35 = arith.constant 2 : index
    %c0_36 = arith.constant 0 : index
    %c0_37 = arith.constant 0 : index
    %69 = vector.load %arg15[%c2_35, %c0_36, %c0_37] : memref<4x8x8xf32, #tpu.memory_space<vmem>>, vector<1x8x8xf32>
    %70 = vector.shape_cast %69 : vector<1x8x8xf32> to vector<8x8xf32>
    %71 = vector.shape_cast %68 : vector<8x8xf32> to vector<1x8x8xf32>
    tpu.vector_store %arg15[%c2_35, %c0_36, %c0_37], %71 {strides = array<i32>} : memref<4x8x8xf32, #tpu.memory_space<vmem>>, vector<1x8x8xf32>,
    %72 = vector.extract_strided_slice %33 {offsets = [0, 80], sizes = [8, 8], strides = [1, 1]} : vector<8x96xf32> to vector<8x8xf32>
    %c2_38 = arith.constant 2 : index
    %c0_39 = arith.constant 0 : index
    %c0_40 = arith.constant 0 : index
    %73 = vector.load %arg16[%c2_38, %c0_39, %c0_40] : memref<4x8x8xf32, #tpu.memory_space<vmem>>, vector<1x8x8xf32>
    %74 = vector.shape_cast %73 : vector<1x8x8xf32> to vector<8x8xf32>
    %75 = vector.shape_cast %72 : vector<8x8xf32> to vector<1x8x8xf32>
    tpu.vector_store %arg16[%c2_38, %c0_39, %c0_40], %75 {strides = array<i32>} : memref<4x8x8xf32, #tpu.memory_space<vmem>>, vector<1x8x8xf32>,
    %76 = vector.extract_strided_slice %33 {offsets = [0, 24], sizes = [8, 8], strides = [1, 1]} : vector<8x96xf32> to vector<8x8xf32>
    %cst_41 = arith.constant 0.353553385 : f32
    %77 = vector.broadcast %cst_41 : f32 to vector<8x8xf32>
    %78 = arith.mulf %76, %77 : vector<8x8xf32>
    %c3 = arith.constant 3 : index
    %c0_42 = arith.constant 0 : index
    %c0_43 = arith.constant 0 : index
    %79 = vector.load %arg14[%c3, %c0_42, %c0_43] : memref<4x8x8xf32, #tpu.memory_space<vmem>>, vector<1x8x8xf32>
    %80 = vector.shape_cast %79 : vector<1x8x8xf32> to vector<8x8xf32>
    %81 = vector.shape_cast %78 : vector<8x8xf32> to vector<1x8x8xf32>
    tpu.vector_store %arg14[%c3, %c0_42, %c0_43], %81 {strides = array<i32>} : memref<4x8x8xf32, #tpu.memory_space<vmem>>, vector<1x8x8xf32>,
    %82 = vector.extract_strided_slice %33 {offsets = [0, 56], sizes = [8, 8], strides = [1, 1]} : vector<8x96xf32> to vector<8x8xf32>
    %c3_44 = arith.constant 3 : index
    %c0_45 = arith.constant 0 : index
    %c0_46 = arith.constant 0 : index
    %83 = vector.load %arg15[%c3_44, %c0_45, %c0_46] : memref<4x8x8xf32, #tpu.memory_space<vmem>>, vector<1x8x8xf32>
    %84 = vector.shape_cast %83 : vector<1x8x8xf32> to vector<8x8xf32>
    %85 = vector.shape_cast %82 : vector<8x8xf32> to vector<1x8x8xf32>
    tpu.vector_store %arg15[%c3_44, %c0_45, %c0_46], %85 {strides = array<i32>} : memref<4x8x8xf32, #tpu.memory_space<vmem>>, vector<1x8x8xf32>,
    %86 = vector.extract_strided_slice %33 {offsets = [0, 88], sizes = [8, 8], strides = [1, 1]} : vector<8x96xf32> to vector<8x8xf32>
    %c3_47 = arith.constant 3 : index
    %c0_48 = arith.constant 0 : index
    %c0_49 = arith.constant 0 : index
    %87 = vector.load %arg16[%c3_47, %c0_48, %c0_49] : memref<4x8x8xf32, #tpu.memory_space<vmem>>, vector<1x8x8xf32>
    %88 = vector.shape_cast %87 : vector<1x8x8xf32> to vector<8x8xf32>
    %89 = vector.shape_cast %86 : vector<8x8xf32> to vector<1x8x8xf32>
    tpu.vector_store %arg16[%c3_47, %c0_48, %c0_49], %89 {strides = array<i32>} : memref<4x8x8xf32, #tpu.memory_space<vmem>>, vector<1x8x8xf32>,
    %90 = tpu.iota {dimensions = array<i32: 0>} : vector<8x8xi32>
    %91 = tpu.iota {dimensions = array<i32: 1>} : vector<8x8xi32>
    %92 = arith.cmpi sge, %90, %91 : vector<8x8xi32>
    %cst_50 = arith.constant 0.000000e+00 : f32
    %cst_51 = arith.constant -1.000000e+30 : f32
    %93 = vector.broadcast %cst_50 : f32 to vector<8x8xf32>
    %94 = vector.broadcast %cst_51 : f32 to vector<8x8xf32>
    %95 = arith.select %92, %93, %94 : vector<8x8xi1>, vector<8x8xf32>
    %c0_52 = arith.constant 0 : index
    %c0_53 = arith.constant 0 : index
    %c0_54 = arith.constant 0 : index
    %96 = vector.load %arg14[%c0_52, %c0_53, %c0_54] : memref<4x8x8xf32, #tpu.memory_space<vmem>>, vector<4x8x8xf32>
    %97 = arith.truncf %96 : vector<4x8x8xf32> to vector<4x8x8xbf16>
    %c0_55 = arith.constant 0 : index
    %c0_56 = arith.constant 0 : index
    %c0_57 = arith.constant 0 : index
    %98 = vector.load %arg15[%c0_55, %c0_56, %c0_57] : memref<4x8x8xf32, #tpu.memory_space<vmem>>, vector<4x8x8xf32>
    %99 = arith.truncf %98 : vector<4x8x8xf32> to vector<4x8x8xbf16>
    %c0_58 = arith.constant 0 : index
    %c0_59 = arith.constant 0 : index
    %c0_60 = arith.constant 0 : index
    %100 = vector.load %arg16[%c0_58, %c0_59, %c0_60] : memref<4x8x8xf32, #tpu.memory_space<vmem>>, vector<4x8x8xf32>
    %101 = arith.truncf %100 : vector<4x8x8xf32> to vector<4x8x8xbf16>
    "tpu.trace_start"() <{level = 10 : i32, message = "hqd,hkd->hqk"}> : () -> ()
    %cst_61 = arith.constant dense<0.000000e+00> : vector<4x8x8xf32>
    %102 = tpu.matmul %97, %99, %cst_61 {dimension_numbers = #tpu.dot_dimension_numbers<[2], [2], [1], [1], [0, 0, 0, 1, 1, 1], [0], [0]>} : vector<4x8x8xbf16>, vector<4x8x8xbf16>, vector<4x8x8xf32> -> vector<4x8x8xf32>
    "tpu.trace_stop"() : () -> ()
    %103 = vector.shape_cast %95 : vector<8x8xf32> to vector<1x8x8xf32>
    %104 = vector.broadcast %103 : vector<1x8x8xf32> to vector<4x8x8xf32>
    %105 = arith.addf %102, %104 : vector<4x8x8xf32>
    %cst_62 = arith.constant dense<0xFF800000> : vector<4x8xf32>
    %106 = vector.multi_reduction <maximumf>, %105, %cst_62 [2] : vector<4x8x8xf32> to vector<4x8xf32>
    %107 = vector.shape_cast %106 : vector<4x8xf32> to vector<4x8x1xf32>
    %108 = vector.broadcast %107 : vector<4x8x1xf32> to vector<4x8x8xf32>
    %109 = arith.subf %105, %108 : vector<4x8x8xf32>
    %110 = math.exp %109 : vector<4x8x8xf32>
    %cst_63 = arith.constant dense<0.000000e+00> : vector<4x8xf32>
    %111 = vector.multi_reduction <add>, %110, %cst_63 [2] : vector<4x8x8xf32> to vector<4x8xf32>
    %112 = vector.shape_cast %111 : vector<4x8xf32> to vector<4x8x1xf32>
    %113 = tpu.reciprocal %112 {approx = true} : vector<4x8x1xf32> -> vector<4x8x1xf32>
    %114 = vector.broadcast %113 : vector<4x8x1xf32> to vector<4x8x8xf32>
    %115 = arith.mulf %110, %114 : vector<4x8x8xf32>
    %116 = arith.truncf %115 : vector<4x8x8xf32> to vector<4x8x8xbf16>
    "tpu.trace_start"() <{level = 10 : i32, message = "hqk,hkd->hqd"}> : () -> ()
    %cst_64 = arith.constant dense<0.000000e+00> : vector<4x8x8xf32>
    %117 = tpu.matmul %116, %101, %cst_64 {dimension_numbers = #tpu.dot_dimension_numbers<[2], [1], [1], [2], [0, 0, 0, 1, 1, 2], [0], [0]>} : vector<4x8x8xbf16>, vector<4x8x8xbf16>, vector<4x8x8xf32> -> vector<4x8x8xf32>
    "tpu.trace_stop"() : () -> ()
    %118 = vector.extract_strided_slice %117 {offsets = [0, 0, 0], sizes = [1, 8, 8], strides = [1, 1, 1]} : vector<4x8x8xf32> to vector<1x8x8xf32>
    %119 = vector.shape_cast %118 : vector<1x8x8xf32> to vector<8x8xf32>
    %c0_65 = arith.constant 0 : index
    %c0_66 = arith.constant 0 : index
    %120 = vector.load %arg17[%c0_65, %c0_66] : memref<8x32xf32, #tpu.memory_space<vmem>>, vector<8x8xf32>
    tpu.vector_store %arg17[%c0_65, %c0_66], %119 {strides = array<i32>} : memref<8x32xf32, #tpu.memory_space<vmem>>, vector<8x8xf32>,
    %121 = vector.extract_strided_slice %117 {offsets = [1, 0, 0], sizes = [1, 8, 8], strides = [1, 1, 1]} : vector<4x8x8xf32> to vector<1x8x8xf32>
    %122 = vector.shape_cast %121 : vector<1x8x8xf32> to vector<8x8xf32>
    %c0_67 = arith.constant 0 : index
    %c8 = arith.constant 8 : index
    %123 = vector.load %arg17[%c0_67, %c8] : memref<8x32xf32, #tpu.memory_space<vmem>>, vector<8x8xf32>
    tpu.vector_store %arg17[%c0_67, %c8], %122 {strides = array<i32>} : memref<8x32xf32, #tpu.memory_space<vmem>>, vector<8x8xf32>,
    %124 = vector.extract_strided_slice %117 {offsets = [2, 0, 0], sizes = [1, 8, 8], strides = [1, 1, 1]} : vector<4x8x8xf32> to vector<1x8x8xf32>
    %125 = vector.shape_cast %124 : vector<1x8x8xf32> to vector<8x8xf32>
    %c0_68 = arith.constant 0 : index
    %c16 = arith.constant 16 : index
    %126 = vector.load %arg17[%c0_68, %c16] : memref<8x32xf32, #tpu.memory_space<vmem>>, vector<8x8xf32>
    tpu.vector_store %arg17[%c0_68, %c16], %125 {strides = array<i32>} : memref<8x32xf32, #tpu.memory_space<vmem>>, vector<8x8xf32>,
    %127 = vector.extract_strided_slice %117 {offsets = [3, 0, 0], sizes = [1, 8, 8], strides = [1, 1, 1]} : vector<4x8x8xf32> to vector<1x8x8xf32>
    %128 = vector.shape_cast %127 : vector<1x8x8xf32> to vector<8x8xf32>
    %c0_69 = arith.constant 0 : index
    %c24 = arith.constant 24 : index
    %129 = vector.load %arg17[%c0_69, %c24] : memref<8x32xf32, #tpu.memory_space<vmem>>, vector<8x8xf32>
    tpu.vector_store %arg17[%c0_69, %c24], %128 {strides = array<i32>} : memref<8x32xf32, #tpu.memory_space<vmem>>, vector<8x8xf32>,
    %c0_70 = arith.constant 0 : index
    %c0_71 = arith.constant 0 : index
    %130 = vector.load %arg17[%c0_70, %c0_71] : memref<8x32xf32, #tpu.memory_space<vmem>>, vector<8x32xf32>
    %131 = arith.truncf %130 : vector<8x32xf32> to vector<8x32xbf16>
    %c0_72 = arith.constant 0 : index
    %c0_73 = arith.constant 0 : index
    %132 = vector.load %arg3[%c0_72, %c0_73] : memref<32x32xbf16, #tpu.memory_space<vmem>>, vector<32x32xbf16>
    %cst_74 = arith.constant dense<0.000000e+00> : vector<8x32xf32>
    %133 = tpu.matmul %131, %132, %cst_74 {dimension_numbers = #tpu.dot_dimension_numbers<[1], [0], [0], [1], [0, 0, 1, 1], [], []>} : vector<8x32xbf16>, vector<32x32xbf16>, vector<8x32xf32> -> vector<8x32xf32>
    %c0_75 = arith.constant 0 : index
    %c0_76 = arith.constant 0 : index
    %134 = vector.load %arg4[%c0_75, %c0_76] : memref<1x32xf32, #tpu.memory_space<vmem>>, vector<1x32xf32>
    %135 = vector.shape_cast %134 : vector<1x32xf32> to vector<32xf32>
    %136 = vector.shape_cast %135 : vector<32xf32> to vector<1x32xf32>
    %137 = vector.broadcast %136 : vector<1x32xf32> to vector<8x32xf32>
    %138 = arith.addf %133, %137 : vector<8x32xf32>
    %139 = arith.addf %1, %138 : vector<8x32xf32>
    %c0_77 = arith.constant 0 : index
    %c0_78 = arith.constant 0 : index
    %140 = vector.load %arg7[%c0_77, %c0_78] : memref<1x32xf32, #tpu.memory_space<vmem>>, vector<1x32xf32>
    %141 = vector.shape_cast %140 : vector<1x32xf32> to vector<32xf32>
    %c0_79 = arith.constant 0 : index
    %c0_80 = arith.constant 0 : index
    %142 = vector.load %arg8[%c0_79, %c0_80] : memref<1x32xf32, #tpu.memory_space<vmem>>, vector<1x32xf32>
    %143 = vector.shape_cast %142 : vector<1x32xf32> to vector<32xf32>
    %cst_81 = arith.constant dense<0.000000e+00> : vector<8xf32>
    %144 = vector.multi_reduction <add>, %139, %cst_81 [1] : vector<8x32xf32> to vector<8xf32>
    %145 = vector.shape_cast %144 : vector<8xf32> to vector<8x1xf32>
    %cst_82 = arith.constant 3.200000e+01 : f32
    %146 = vector.broadcast %cst_82 : f32 to vector<8x1xf32>
    %147 = arith.divf %145, %146 : vector<8x1xf32>
    %148 = vector.broadcast %147 : vector<8x1xf32> to vector<8x32xf32>
    %149 = arith.subf %139, %148 : vector<8x32xf32>
    %150 = arith.mulf %149, %149 : vector<8x32xf32>
    %cst_83 = arith.constant dense<0.000000e+00> : vector<8xf32>
    %151 = vector.multi_reduction <add>, %150, %cst_83 [1] : vector<8x32xf32> to vector<8xf32>
    %152 = vector.shape_cast %151 : vector<8xf32> to vector<8x1xf32>
    %cst_84 = arith.constant 3.200000e+01 : f32
    %153 = vector.broadcast %cst_84 : f32 to vector<8x1xf32>
    %154 = arith.divf %152, %153 : vector<8x1xf32>
    %155 = math.sqrt %154 : vector<8x1xf32>
    %cst_85 = arith.constant 9.99999974E-6 : f32
    %156 = vector.broadcast %cst_85 : f32 to vector<8x1xf32>
    %157 = arith.addf %155, %156 : vector<8x1xf32>
    %158 = tpu.reciprocal %157 {approx = true} : vector<8x1xf32> -> vector<8x1xf32>
    %159 = vector.broadcast %147 : vector<8x1xf32> to vector<8x32xf32>
    %160 = arith.subf %139, %159 : vector<8x32xf32>
    %161 = vector.broadcast %158 : vector<8x1xf32> to vector<8x32xf32>
    %162 = arith.mulf %160, %161 : vector<8x32xf32>
    %163 = vector.shape_cast %141 : vector<32xf32> to vector<1x32xf32>
    %164 = vector.broadcast %163 : vector<1x32xf32> to vector<8x32xf32>
    %165 = arith.mulf %164, %162 : vector<8x32xf32>
    %166 = vector.shape_cast %143 : vector<32xf32> to vector<1x32xf32>
    %167 = vector.broadcast %166 : vector<1x32xf32> to vector<8x32xf32>
    %168 = arith.addf %165, %167 : vector<8x32xf32>
    %169 = arith.truncf %168 : vector<8x32xf32> to vector<8x32xbf16>
    %c0_86 = arith.constant 0 : index
    %c0_87 = arith.constant 0 : index
    %170 = vector.load %arg9[%c0_86, %c0_87] : memref<32x128xbf16, #tpu.memory_space<vmem>>, vector<32x128xbf16>
    %cst_88 = arith.constant dense<0.000000e+00> : vector<8x128xf32>
    %171 = tpu.matmul %169, %170, %cst_88 {dimension_numbers = #tpu.dot_dimension_numbers<[1], [0], [0], [1], [0, 0, 1, 1], [], []>} : vector<8x32xbf16>, vector<32x128xbf16>, vector<8x128xf32> -> vector<8x128xf32>
    %c0_89 = arith.constant 0 : index
    %c0_90 = arith.constant 0 : index
    %172 = vector.load %arg10[%c0_89, %c0_90] : memref<1x128xf32, #tpu.memory_space<vmem>>, vector<1x128xf32>
    %173 = vector.shape_cast %172 : vector<1x128xf32> to vector<128xf32>
    %174 = vector.shape_cast %173 : vector<128xf32> to vector<1x128xf32>
    %175 = vector.broadcast %174 : vector<1x128xf32> to vector<8x128xf32>
    %176 = arith.addf %171, %175 : vector<8x128xf32>
    %cst_91 = arith.constant 5.000000e-01 : f32
    %177 = vector.broadcast %cst_91 : f32 to vector<8x128xf32>
    %178 = arith.mulf %177, %176 : vector<8x128xf32>
    %cst_92 = arith.constant 4.471500e-02 : f32
    %179 = vector.broadcast %cst_92 : f32 to vector<8x128xf32>
    %180 = arith.mulf %179, %176 : vector<8x128xf32>
    %181 = arith.mulf %180, %176 : vector<8x128xf32>
    %182 = arith.mulf %181, %176 : vector<8x128xf32>
    %183 = arith.addf %176, %182 : vector<8x128xf32>
    %cst_93 = arith.constant 0.797884583 : f32
    %184 = vector.broadcast %cst_93 : f32 to vector<8x128xf32>
    %185 = arith.mulf %184, %183 : vector<8x128xf32>
    %186 = math.tanh %185 : vector<8x128xf32>
    %cst_94 = arith.constant 1.000000e+00 : f32
    %187 = vector.broadcast %cst_94 : f32 to vector<8x128xf32>
    %188 = arith.addf %187, %186 : vector<8x128xf32>
    %189 = arith.mulf %178, %188 : vector<8x128xf32>
    %190 = arith.truncf %189 : vector<8x128xf32> to vector<8x128xbf16>
    %c0_95 = arith.constant 0 : index
    %c0_96 = arith.constant 0 : index
    %191 = vector.load %arg11[%c0_95, %c0_96] : memref<128x32xbf16, #tpu.memory_space<vmem>>, vector<128x32xbf16>
    %cst_97 = arith.constant dense<0.000000e+00> : vector<8x32xf32>
    %192 = tpu.matmul %190, %191, %cst_97 {dimension_numbers = #tpu.dot_dimension_numbers<[1], [0], [0], [1], [0, 0, 1, 1], [], []>} : vector<8x128xbf16>, vector<128x32xbf16>, vector<8x32xf32> -> vector<8x32xf32>
    %c0_98 = arith.constant 0 : index
    %c0_99 = arith.constant 0 : index
    %193 = vector.load %arg12[%c0_98, %c0_99] : memref<1x32xf32, #tpu.memory_space<vmem>>, vector<1x32xf32>
    %194 = vector.shape_cast %193 : vector<1x32xf32> to vector<32xf32>
    %195 = vector.shape_cast %194 : vector<32xf32> to vector<1x32xf32>
    %196 = vector.broadcast %195 : vector<1x32xf32> to vector<8x32xf32>
    %197 = arith.addf %192, %196 : vector<8x32xf32>
    %198 = arith.addf %139, %197 : vector<8x32xf32>
    %c0_100 = arith.constant 0 : index
    %c0_101 = arith.constant 0 : index
    %c0_102 = arith.constant 0 : index
    %199 = vector.load %arg13[%c0_100, %c0_101, %c0_102] : memref<1x8x32xf32, #tpu.memory_space<vmem>>, vector<1x8x32xf32>
    %200 = vector.shape_cast %199 : vector<1x8x32xf32> to vector<8x32xf32>
    %201 = vector.shape_cast %198 : vector<8x32xf32> to vector<1x8x32xf32>
    tpu.vector_store %arg13[%c0_100, %c0_101, %c0_102], %201 {strides = array<i32>} : memref<1x8x32xf32, #tpu.memory_space<vmem>>, vector<1x8x32xf32>,
    return
  }
  func.func @transform_0(%arg0: i32) -> (i32, i32, i32) {
    %c0_i32 = arith.constant 0 : i32
    %c0_i32_0 = arith.constant 0 : i32
    %c0_i32_1 = arith.constant 0 : i32
    return %arg0, %c0_i32, %c0_i32_0 : i32, i32, i32
  }
  func.func @transform_1(%arg0: i32) -> (i32, i32) {
    %c0_i32 = arith.constant 0 : i32
    %c0_i32_0 = arith.constant 0 : i32
    %c0_i32_1 = arith.constant 0 : i32
    return %c0_i32, %c0_i32_0 : i32, i32
  }
  func.func @transform_2(%arg0: i32) -> (i32, i32) {
    %c0_i32 = arith.constant 0 : i32
    %c0_i32_0 = arith.constant 0 : i32
    %c0_i32_1 = arith.constant 0 : i32
    return %c0_i32, %c0_i32_0 : i32, i32
  }
  func.func @transform_3(%arg0: i32) -> (i32, i32) {
    %c0_i32 = arith.constant 0 : i32
    %c0_i32_0 = arith.constant 0 : i32
    %c0_i32_1 = arith.constant 0 : i32
    return %c0_i32, %c0_i32_0 : i32, i32
  }
  func.func @transform_4(%arg0: i32) -> (i32, i32) {
    %c0_i32 = arith.constant 0 : i32
    %c0_i32_0 = arith.constant 0 : i32
    %c0_i32_1 = arith.constant 0 : i32
    return %c0_i32, %c0_i32_0 : i32, i32
  }
  func.func @transform_5(%arg0: i32) -> (i32, i32) {
    %c0_i32 = arith.constant 0 : i32
    %c0_i32_0 = arith.constant 0 : i32
    %c0_i32_1 = arith.constant 0 : i32
    return %c0_i32, %c0_i32_0 : i32, i32
  }
  func.func @transform_6(%arg0: i32) -> (i32, i32) {
    %c0_i32 = arith.constant 0 : i32
    %c0_i32_0 = arith.constant 0 : i32
    %c0_i32_1 = arith.constant 0 : i32
    return %c0_i32, %c0_i32_0 : i32, i32
  }
  func.func @transform_7(%arg0: i32) -> (i32, i32) {
    %c0_i32 = arith.constant 0 : i32
    %c0_i32_0 = arith.constant 0 : i32
    %c0_i32_1 = arith.constant 0 : i32
    return %c0_i32, %c0_i32_0 : i32, i32
  }
  func.func @transform_8(%arg0: i32) -> (i32, i32) {
    %c0_i32 = arith.constant 0 : i32
    %c0_i32_0 = arith.constant 0 : i32
    %c0_i32_1 = arith.constant 0 : i32
    return %c0_i32, %c0_i32_0 : i32, i32
  }
  func.func @transform_9(%arg0: i32) -> (i32, i32) {
    %c0_i32 = arith.constant 0 : i32
    %c0_i32_0 = arith.constant 0 : i32
    %c0_i32_1 = arith.constant 0 : i32
    return %c0_i32, %c0_i32_0 : i32, i32
  }
  func.func @transform_10(%arg0: i32) -> (i32, i32) {
    %c0_i32 = arith.constant 0 : i32
    %c0_i32_0 = arith.constant 0 : i32
    %c0_i32_1 = arith.constant 0 : i32
    return %c0_i32, %c0_i32_0 : i32, i32
  }
  func.func @transform_11(%arg0: i32) -> (i32, i32) {
    %c0_i32 = arith.constant 0 : i32
    %c0_i32_0 = arith.constant 0 : i32
    %c0_i32_1 = arith.constant 0 : i32
    return %c0_i32, %c0_i32_0 : i32, i32
  }
  func.func @transform_12(%arg0: i32) -> (i32, i32, i32) {
    %c0_i32 = arith.constant 0 : i32
    %c0_i32_0 = arith.constant 0 : i32
    %c0_i32_1 = arith.constant 0 : i32
    return %arg0, %c0_i32, %c0_i32_0 : i32, i32, i32
  }
}

module attributes {stable_mosaic.version = 11 : i64} {
  func.func @_transformer_block_kernel(%arg0: i32, %arg1: memref<1x8x32xf32, #tpu.memory_space<vmem>>, %arg2: memref<32x96xbf16, #tpu.memory_space<vmem>>, %arg3: memref<32x32xbf16, #tpu.memory_space<vmem>>, %arg4: memref<1x32xf32, #tpu.memory_space<vmem>>, %arg5: memref<1x32xf32, #tpu.memory_space<vmem>>, %arg6: memref<1x32xf32, #tpu.memory_space<vmem>>, %arg7: memref<1x32xf32, #tpu.memory_space<vmem>>, %arg8: memref<1x32xf32, #tpu.memory_space<vmem>>, %arg9: memref<32x128xbf16, #tpu.memory_space<vmem>>, %arg10: memref<1x128xf32, #tpu.memory_space<vmem>>, %arg11: memref<128x32xbf16, #tpu.memory_space<vmem>>, %arg12: memref<1x32xf32, #tpu.memory_space<vmem>>, %arg13: memref<1x8x32xf32, #tpu.memory_space<vmem>>, %arg14: memref<4x8x8xf32, #tpu.memory_space<vmem>>, %arg15: memref<4x8x8xf32, #tpu.memory_space<vmem>>, %arg16: memref<4x8x8xf32, #tpu.memory_space<vmem>>, %arg17: memref<8x32xf32, #tpu.memory_space<vmem>>) attributes {dimension_semantics = [#tpu.dimension_semantics<parallel>], iteration_bounds = array<i64: 2>, scalar_prefetch = 0 : i64, scratch_operands = 4 : i64, tpu.core_type = #tpu.core_type<tc>, window_params = [{transform_indices = @transform_0, window_bounds = array<i64: 1, 8, 32>}, {pipeline_mode = #tpu.pipeline_mode<synchronous>, transform_indices = @transform_1, window_bounds = array<i64: 32, 96>}, {pipeline_mode = #tpu.pipeline_mode<synchronous>, transform_indices = @transform_2, window_bounds = array<i64: 32, 32>}, {pipeline_mode = #tpu.pipeline_mode<synchronous>, transform_indices = @transform_3, window_bounds = array<i64: 1, 32>}, {pipeline_mode = #tpu.pipeline_mode<synchronous>, transform_indices = @transform_4, window_bounds = array<i64: 1, 32>}, {pipeline_mode = #tpu.pipeline_mode<synchronous>, transform_indices = @transform_5, window_bounds = array<i64: 1, 32>}, {pipeline_mode = #tpu.pipeline_mode<synchronous>, transform_indices = @transform_6, window_bounds = array<i64: 1, 32>}, {pipeline_mode = #tpu.pipeline_mode<synchronous>, transform_indices = @transform_7, window_bounds = array<i64: 1, 32>}, {pipeline_mode = #tpu.pipeline_mode<synchronous>, transform_indices = @transform_8, window_bounds = array<i64: 32, 128>}, {pipeline_mode = #tpu.pipeline_mode<synchronous>, transform_indices = @transform_9, window_bounds = array<i64: 1, 128>}, {pipeline_mode = #tpu.pipeline_mode<synchronous>, transform_indices = @transform_10, window_bounds = array<i64: 128, 32>}, {pipeline_mode = #tpu.pipeline_mode<synchronous>, transform_indices = @transform_11, window_bounds = array<i64: 1, 32>}, {transform_indices = @transform_12, window_bounds = array<i64: 1, 8, 32>}]} {
    %c0 = arith.constant 0 : index
    %c0_0 = arith.constant 0 : index
    %c0_1 = arith.constant 0 : index
    %0 = vector.load %arg1[%c0, %c0_0, %c0_1] : memref<1x8x32xf32, #tpu.memory_space<vmem>>, vector<1x8x32xf32>
    %1 = vector.shape_cast %0 : vector<1x8x32xf32> to vector<8x32xf32>
    %c0_2 = arith.constant 0 : index
    %c0_3 = arith.constant 0 : index
    %2 = vector.load %arg5[%c0_2, %c0_3] : memref<1x32xf32, #tpu.memory_space<vmem>>, vector<1x32xf32>
    %3 = vector.shape_cast %2 : vector<1x32xf32> to vector<32xf32>
    %c0_4 = arith.constant 0 : index
    %c0_5 = arith.constant 0 : index
    %4 = vector.load %arg6[%c0_4, %c0_5] : memref<1x32xf32, #tpu.memory_space<vmem>>, vector<1x32xf32>
    %5 = vector.shape_cast %4 : vector<1x32xf32> to vector<32xf32>
    %cst = arith.constant dense<0.000000e+00> : vector<8xf32>
    %6 = vector.multi_reduction <add>, %1, %cst [1] : vector<8x32xf32> to vector<8xf32>
    %7 = vector.shape_cast %6 : vector<8xf32> to vector<8x1xf32>
    %cst_6 = arith.constant 3.200000e+01 : f32
    %8 = vector.broadcast %cst_6 : f32 to vector<8x1xf32>
    %9 = arith.divf %7, %8 : vector<8x1xf32>
    %10 = vector.broadcast %9 : vector<8x1xf32> to vector<8x32xf32>
    %11 = arith.subf %1, %10 : vector<8x32xf32>
    %12 = arith.mulf %11, %11 : vector<8x32xf32>
    %cst_7 = arith.constant dense<0.000000e+00> : vector<8xf32>
    %13 = vector.multi_reduction <add>, %12, %cst_7 [1] : vector<8x32xf32> to vector<8xf32>
    %14 = vector.shape_cast %13 : vector<8xf32> to vector<8x1xf32>
    %cst_8 = arith.constant 3.200000e+01 : f32
    %15 = vector.broadcast %cst_8 : f32 to vector<8x1xf32>
    %16 = arith.divf %14, %15 : vector<8x1xf32>
    %17 = math.sqrt %16 : vector<8x1xf32>
    %cst_9 = arith.constant 9.99999974E-6 : f32
    %18 = vector.broadcast %cst_9 : f32 to vector<8x1xf32>
    %19 = arith.addf %17, %18 : vector<8x1xf32>
    %20 = tpu.reciprocal %19 {approx = true} : vector<8x1xf32> -> vector<8x1xf32>
    %21 = vector.broadcast %9 : vector<8x1xf32> to vector<8x32xf32>
    %22 = arith.subf %1, %21 : vector<8x32xf32>
    %23 = vector.broadcast %20 : vector<8x1xf32> to vector<8x32xf32>
    %24 = arith.mulf %22, %23 : vector<8x32xf32>
    %25 = vector.shape_cast %3 : vector<32xf32> to vector<1x32xf32>
    %26 = vector.broadcast %25 : vector<1x32xf32> to vector<8x32xf32>
    %27 = arith.mulf %26, %24 : vector<8x32xf32>
    %28 = vector.shape_cast %5 : vector<32xf32> to vector<1x32xf32>
    %29 = vector.broadcast %28 : vector<1x32xf32> to vector<8x32xf32>
    %30 = arith.addf %27, %29 : vector<8x32xf32>
    %31 = arith.truncf %30 : vector<8x32xf32> to vector<8x32xbf16>
    %c0_10 = arith.constant 0 : index
    %c0_11 = arith.constant 0 : index
    %32 = vector.load %arg2[%c0_10, %c0_11] : memref<32x96xbf16, #tpu.memory_space<vmem>>, vector<32x96xbf16>
    %cst_12 = arith.constant dense<0.000000e+00> : vector<8x96xf32>
    %33 = tpu.matmul %31, %32, %cst_12 {dimension_numbers = #tpu.dot_dimension_numbers<[1], [0], [0], [1], [0, 0, 1, 1], [], []>} : vector<8x32xbf16>, vector<32x96xbf16>, vector<8x96xf32> -> vector<8x96xf32>
    %34 = vector.extract_strided_slice %33 {offsets = [0, 0], sizes = [8, 8], strides = [1, 1]} : vector<8x96xf32> to vector<8x8xf32>
    %cst_13 = arith.constant 0.353553385 : f32
    %35 = vector.broadcast %cst_13 : f32 to vector<8x8xf32>
    %36 = arith.mulf %34, %35 : vector<8x8xf32>
    %c0_14 = arith.constant 0 : index
    %c0_15 = arith.constant 0 : index
    %c0_16 = arith.constant 0 : index
    %37 = vector.load %arg14[%c0_14, %c0_15, %c0_16] : memref<4x8x8xf32, #tpu.memory_space<vmem>>, vector<1x8x8xf32>
    %38 = vector.shape_cast %37 : vector<1x8x8xf32> to vector<8x8xf32>
    %39 = vector.shape_cast %36 : vector<8x8xf32> to vector<1x8x8xf32>
    tpu.vector_store %arg14[%c0_14, %c0_15, %c0_16], %39 {strides = array<i32>} : memref<4x8x8xf32, #tpu.memory_space<vmem>>, vector<1x8x8xf32>,
    %40 = vector.extract_strided_slice %33 {offsets = [0, 32], sizes = [8, 8], strides = [1, 1]} : vector<8x96xf32> to vector<8x8xf32>
    %c0_17 = arith.constant 0 : index
    %c0_18 = arith.constant 0 : index
    %c0_19 = arith.constant 0 : index
    %41 = vector.load %arg15[%c0_17, %c0_18, %c0_19] : memref<4x8x8xf32, #tpu.memory_space<vmem>>, vector<1x8x8xf32>
    %42 = vector.shape_cast %41 : vector<1x8x8xf32> to vector<8x8xf32>
    %43 = vector.shape_cast %40 : vector<8x8xf32> to vector<1x8x8xf32>
    tpu.vector_store %arg15[%c0_17, %c0_18, %c0_19], %43 {strides = array<i32>} : memref<4x8x8xf32, #tpu.memory_space<vmem>>, vector<1x8x8xf32>,
    %44 = vector.extract_strided_slice %33 {offsets = [0, 64], sizes = [8, 8], strides = [1, 1]} : vector<8x96xf32> to vector<8x8xf32>
    %c0_20 = arith.constant 0 : index
    %c0_21 = arith.constant 0 : index
    %c0_22 = arith.constant 0 : index
    %45 = vector.load %arg16[%c0_20, %c0_21, %c0_22] : memref<4x8x8xf32, #tpu.memory_space<vmem>>, vector<1x8x8xf32>
    %46 = vector.shape_cast %45 : vector<1x8x8xf32> to vector<8x8xf32>
    %47 = vector.shape_cast %44 : vector<8x8xf32> to vector<1x8x8xf32>
    tpu.vector_store %arg16[%c0_20, %c0_21, %c0_22], %47 {strides = array<i32>} : memref<4x8x8xf32, #tpu.memory_space<vmem>>, vector<1x8x8xf32>,
    %48 = vector.extract_strided_slice %33 {offsets = [0, 8], sizes = [8, 8], strides = [1, 1]} : vector<8x96xf32> to vector<8x8xf32>
    %cst_23 = arith.constant 0.353553385 : f32
    %49 = vector.broadcast %cst_23 : f32 to vector<8x8xf32>
    %50 = arith.mulf %48, %49 : vector<8x8xf32>
    %c1 = arith.constant 1 : index
    %c0_24 = arith.constant 0 : index
    %c0_25 = arith.constant 0 : index
    %51 = vector.load %arg14[%c1, %c0_24, %c0_25] : memref<4x8x8xf32, #tpu.memory_space<vmem>>, vector<1x8x8xf32>
    %52 = vector.shape_cast %51 : vector<1x8x8xf32> to vector<8x8xf32>
    %53 = vector.shape_cast %50 : vector<8x8xf32> to vector<1x8x8xf32>
    tpu.vector_store %arg14[%c1, %c0_24, %c0_25], %53 {strides = array<i32>} : memref<4x8x8xf32, #tpu.memory_space<vmem>>, vector<1x8x8xf32>,
    %54 = vector.extract_strided_slice %33 {offsets = [0, 40], sizes = [8, 8], strides = [1, 1]} : vector<8x96xf32> to vector<8x8xf32>
    %c1_26 = arith.constant 1 : index
    %c0_27 = arith.constant 0 : index
    %c0_28 = arith.constant 0 : index
    %55 = vector.load %arg15[%c1_26, %c0_27, %c0_28] : memref<4x8x8xf32, #tpu.memory_space<vmem>>, vector<1x8x8xf32>
    %56 = vector.shape_cast %55 : vector<1x8x8xf32> to vector<8x8xf32>
    %57 = vector.shape_cast %54 : vector<8x8xf32> to vector<1x8x8xf32>
    tpu.vector_store %arg15[%c1_26, %c0_27, %c0_28], %57 {strides = array<i32>} : memref<4x8x8xf32, #tpu.memory_space<vmem>>, vector<1x8x8xf32>,
    %58 = vector.extract_strided_slice %33 {offsets = [0, 72], sizes = [8, 8], strides = [1, 1]} : vector<8x96xf32> to vector<8x8xf32>
    %c1_29 = arith.constant 1 : index
    %c0_30 = arith.constant 0 : index
    %c0_31 = arith.constant 0 : index
    %59 = vector.load %arg16[%c1_29, %c0_30, %c0_31] : memref<4x8x8xf32, #tpu.memory_space<vmem>>, vector<1x8x8xf32>
    %60 = vector.shape_cast %59 : vector<1x8x8xf32> to vector<8x8xf32>
    %61 = vector.shape_cast %58 : vector<8x8xf32> to vector<1x8x8xf32>
    tpu.vector_store %arg16[%c1_29, %c0_30, %c0_31], %61 {strides = array<i32>} : memref<4x8x8xf32, #tpu.memory_space<vmem>>, vector<1x8x8xf32>,
    %62 = vector.extract_strided_slice %33 {offsets = [0, 16], sizes = [8, 8], strides = [1, 1]} : vector<8x96xf32> to vector<8x8xf32>
    %cst_32 = arith.constant 0.353553385 : f32
    %63 = vector.broadcast %cst_32 : f32 to vector<8x8xf32>
    %64 = arith.mulf %62, %63 : vector<8x8xf32>
    %c2 = arith.constant 2 : index
    %c0_33 = arith.constant 0 : index
    %c0_34 = arith.constant 0 : index
    %65 = vector.load %arg14[%c2, %c0_33, %c0_34] : memref<4x8x8xf32, #tpu.memory_space<vmem>>, vector<1x8x8xf32>
    %66 = vector.shape_cast %65 : vector<1x8x8xf32> to vector<8x8xf32>
    %67 = vector.shape_cast %64 : vector<8x8xf32> to vector<1x8x8xf32>
    tpu.vector_store %arg14[%c2, %c0_33, %c0_34], %67 {strides = array<i32>} : memref<4x8x8xf32, #tpu.memory_space<vmem>>, vector<1x8x8xf32>,
    %68 = vector.extract_strided_slice %33 {offsets = [0, 48], sizes = [8, 8], strides = [1, 1]} : vector<8x96xf32> to vector<8x8xf32>
    %c2_35 = arith.constant 2 : index
    %c0_36 = arith.constant 0 : index
    %c0_37 = arith.constant 0 : index
    %69 = vector.load %arg15[%c2_35, %c0_36, %c0_37] : memref<4x8x8xf32, #tpu.memory_space<vmem>>, vector<1x8x8xf32>
    %70 = vector.shape_cast %69 : vector<1x8x8xf32> to vector<8x8xf32>
    %71 = vector.shape_cast %68 : vector<8x8xf32> to vector<1x8x8xf32>
    tpu.vector_store %arg15[%c2_35, %c0_36, %c0_37], %71 {strides = array<i32>} : memref<4x8x8xf32, #tpu.memory_space<vmem>>, vector<1x8x8xf32>,
    %72 = vector.extract_strided_slice %33 {offsets = [0, 80], sizes = [8, 8], strides = [1, 1]} : vector<8x96xf32> to vector<8x8xf32>
    %c2_38 = arith.constant 2 : index
    %c0_39 = arith.constant 0 : index
    %c0_40 = arith.constant 0 : index
    %73 = vector.load %arg16[%c2_38, %c0_39, %c0_40] : memref<4x8x8xf32, #tpu.memory_space<vmem>>, vector<1x8x8xf32>
    %74 = vector.shape_cast %73 : vector<1x8x8xf32> to vector<8x8xf32>
    %75 = vector.shape_cast %72 : vector<8x8xf32> to vector<1x8x8xf32>
    tpu.vector_store %arg16[%c2_38, %c0_39, %c0_40], %75 {strides = array<i32>} : memref<4x8x8xf32, #tpu.memory_space<vmem>>, vector<1x8x8xf32>,
    %76 = vector.extract_strided_slice %33 {offsets = [0, 24], sizes = [8, 8], strides = [1, 1]} : vector<8x96xf32> to vector<8x8xf32>
    %cst_41 = arith.constant 0.353553385 : f32
    %77 = vector.broadcast %cst_41 : f32 to vector<8x8xf32>
    %78 = arith.mulf %76, %77 : vector<8x8xf32>
    %c3 = arith.constant 3 : index
    %c0_42 = arith.constant 0 : index
    %c0_43 = arith.constant 0 : index
    %79 = vector.load %arg14[%c3, %c0_42, %c0_43] : memref<4x8x8xf32, #tpu.memory_space<vmem>>, vector<1x8x8xf32>
    %80 = vector.shape_cast %79 : vector<1x8x8xf32> to vector<8x8xf32>
    %81 = vector.shape_cast %78 : vector<8x8xf32> to vector<1x8x8xf32>
    tpu.vector_store %arg14[%c3, %c0_42, %c0_43], %81 {strides = array<i32>} : memref<4x8x8xf32, #tpu.memory_space<vmem>>, vector<1x8x8xf32>,
    %82 = vector.extract_strided_slice %33 {offsets = [0, 56], sizes = [8, 8], strides = [1, 1]} : vector<8x96xf32> to vector<8x8xf32>
    %c3_44 = arith.constant 3 : index
    %c0_45 = arith.constant 0 : index
    %c0_46 = arith.constant 0 : index
    %83 = vector.load %arg15[%c3_44, %c0_45, %c0_46] : memref<4x8x8xf32, #tpu.memory_space<vmem>>, vector<1x8x8xf32>
    %84 = vector.shape_cast %83 : vector<1x8x8xf32> to vector<8x8xf32>
    %85 = vector.shape_cast %82 : vector<8x8xf32> to vector<1x8x8xf32>
    tpu.vector_store %arg15[%c3_44, %c0_45, %c0_46], %85 {strides = array<i32>} : memref<4x8x8xf32, #tpu.memory_space<vmem>>, vector<1x8x8xf32>,
    %86 = vector.extract_strided_slice %33 {offsets = [0, 88], sizes = [8, 8], strides = [1, 1]} : vector<8x96xf32> to vector<8x8xf32>
    %c3_47 = arith.constant 3 : index
    %c0_48 = arith.constant 0 : index
    %c0_49 = arith.constant 0 : index
    %87 = vector.load %arg16[%c3_47, %c0_48, %c0_49] : memref<4x8x8xf32, #tpu.memory_space<vmem>>, vector<1x8x8xf32>
    %88 = vector.shape_cast %87 : vector<1x8x8xf32> to vector<8x8xf32>
    %89 = vector.shape_cast %86 : vector<8x8xf32> to vector<1x8x8xf32>
    tpu.vector_store %arg16[%c3_47, %c0_48, %c0_49], %89 {strides = array<i32>} : memref<4x8x8xf32, #tpu.memory_space<vmem>>, vector<1x8x8xf32>,
    %90 = tpu.iota {dimensions = array<i32: 0>} : vector<8x8xi32>
    %91 = tpu.iota {dimensions = array<i32: 1>} : vector<8x8xi32>
    %92 = arith.cmpi sge, %90, %91 : vector<8x8xi32>
    %cst_50 = arith.constant 0.000000e+00 : f32
    %cst_51 = arith.constant -1.000000e+30 : f32
    %93 = vector.broadcast %cst_50 : f32 to vector<8x8xf32>
    %94 = vector.broadcast %cst_51 : f32 to vector<8x8xf32>
    %95 = arith.select %92, %93, %94 : vector<8x8xi1>, vector<8x8xf32>
    %c0_52 = arith.constant 0 : index
    %c0_53 = arith.constant 0 : index
    %c0_54 = arith.constant 0 : index
    %96 = vector.load %arg14[%c0_52, %c0_53, %c0_54] : memref<4x8x8xf32, #tpu.memory_space<vmem>>, vector<4x8x8xf32>
    %97 = arith.truncf %96 : vector<4x8x8xf32> to vector<4x8x8xbf16>
    %c0_55 = arith.constant 0 : index
    %c0_56 = arith.constant 0 : index
    %c0_57 = arith.constant 0 : index
    %98 = vector.load %arg15[%c0_55, %c0_56, %c0_57] : memref<4x8x8xf32, #tpu.memory_space<vmem>>, vector<4x8x8xf32>
    %99 = arith.truncf %98 : vector<4x8x8xf32> to vector<4x8x8xbf16>
    %c0_58 = arith.constant 0 : index
    %c0_59 = arith.constant 0 : index
    %c0_60 = arith.constant 0 : index
    %100 = vector.load %arg16[%c0_58, %c0_59, %c0_60] : memref<4x8x8xf32, #tpu.memory_space<vmem>>, vector<4x8x8xf32>
    %101 = arith.truncf %100 : vector<4x8x8xf32> to vector<4x8x8xbf16>
    "tpu.trace_start"() <{level = 10 : i32, message = "hqd,hkd->hqk"}> : () -> ()
    %cst_61 = arith.constant dense<0.000000e+00> : vector<4x8x8xf32>
    %102 = tpu.matmul %97, %99, %cst_61 {dimension_numbers = #tpu.dot_dimension_numbers<[2], [2], [1], [1], [0, 0, 0, 1, 1, 1], [0], [0]>} : vector<4x8x8xbf16>, vector<4x8x8xbf16>, vector<4x8x8xf32> -> vector<4x8x8xf32>
    "tpu.trace_stop"() : () -> ()
    %103 = vector.shape_cast %95 : vector<8x8xf32> to vector<1x8x8xf32>
    %104 = vector.broadcast %103 : vector<1x8x8xf32> to vector<4x8x8xf32>
    %105 = arith.addf %102, %104 : vector<4x8x8xf32>
    %cst_62 = arith.constant dense<0xFF800000> : vector<4x8xf32>
    %106 = vector.multi_reduction <maximumf>, %105, %cst_62 [2] : vector<4x8x8xf32> to vector<4x8xf32>
    %107 = vector.shape_cast %106 : vector<4x8xf32> to vector<4x8x1xf32>
    %108 = vector.broadcast %107 : vector<4x8x1xf32> to vector<4x8x8xf32>
    %109 = arith.subf %105, %108 : vector<4x8x8xf32>
    %110 = math.exp %109 : vector<4x8x8xf32>
    %cst_63 = arith.constant dense<0.000000e+00> : vector<4x8xf32>
    %111 = vector.multi_reduction <add>, %110, %cst_63 [2] : vector<4x8x8xf32> to vector<4x8xf32>
    %112 = vector.shape_cast %111 : vector<4x8xf32> to vector<4x8x1xf32>
    %113 = tpu.reciprocal %112 {approx = true} : vector<4x8x1xf32> -> vector<4x8x1xf32>
    %114 = vector.broadcast %113 : vector<4x8x1xf32> to vector<4x8x8xf32>
    %115 = arith.mulf %110, %114 : vector<4x8x8xf32>
    %116 = arith.truncf %115 : vector<4x8x8xf32> to vector<4x8x8xbf16>
    "tpu.trace_start"() <{level = 10 : i32, message = "hqk,hkd->hqd"}> : () -> ()
    %cst_64 = arith.constant dense<0.000000e+00> : vector<4x8x8xf32>
    %117 = tpu.matmul %116, %101, %cst_64 {dimension_numbers = #tpu.dot_dimension_numbers<[2], [1], [1], [2], [0, 0, 0, 1, 1, 2], [0], [0]>} : vector<4x8x8xbf16>, vector<4x8x8xbf16>, vector<4x8x8xf32> -> vector<4x8x8xf32>
    "tpu.trace_stop"() : () -> ()
    %118 = vector.extract_strided_slice %117 {offsets = [0, 0, 0], sizes = [1, 8, 8], strides = [1, 1, 1]} : vector<4x8x8xf32> to vector<1x8x8xf32>
    %119 = vector.shape_cast %118 : vector<1x8x8xf32> to vector<8x8xf32>
    %c0_65 = arith.constant 0 : index
    %c0_66 = arith.constant 0 : index
    %120 = vector.load %arg17[%c0_65, %c0_66] : memref<8x32xf32, #tpu.memory_space<vmem>>, vector<8x8xf32>
    tpu.vector_store %arg17[%c0_65, %c0_66], %119 {strides = array<i32>} : memref<8x32xf32, #tpu.memory_space<vmem>>, vector<8x8xf32>,
    %121 = vector.extract_strided_slice %117 {offsets = [1, 0, 0], sizes = [1, 8, 8], strides = [1, 1, 1]} : vector<4x8x8xf32> to vector<1x8x8xf32>
    %122 = vector.shape_cast %121 : vector<1x8x8xf32> to vector<8x8xf32>
    %c0_67 = arith.constant 0 : index
    %c8 = arith.constant 8 : index
    %123 = vector.load %arg17[%c0_67, %c8] : memref<8x32xf32, #tpu.memory_space<vmem>>, vector<8x8xf32>
    tpu.vector_store %arg17[%c0_67, %c8], %122 {strides = array<i32>} : memref<8x32xf32, #tpu.memory_space<vmem>>, vector<8x8xf32>,
    %124 = vector.extract_strided_slice %117 {offsets = [2, 0, 0], sizes = [1, 8, 8], strides = [1, 1, 1]} : vector<4x8x8xf32> to vector<1x8x8xf32>
    %125 = vector.shape_cast %124 : vector<1x8x8xf32> to vector<8x8xf32>
    %c0_68 = arith.constant 0 : index
    %c16 = arith.constant 16 : index
    %126 = vector.load %arg17[%c0_68, %c16] : memref<8x32xf32, #tpu.memory_space<vmem>>, vector<8x8xf32>
    tpu.vector_store %arg17[%c0_68, %c16], %125 {strides = array<i32>} : memref<8x32xf32, #tpu.memory_space<vmem>>, vector<8x8xf32>,
    %127 = vector.extract_strided_slice %117 {offsets = [3, 0, 0], sizes = [1, 8, 8], strides = [1, 1, 1]} : vector<4x8x8xf32> to vector<1x8x8xf32>
    %128 = vector.shape_cast %127 : vector<1x8x8xf32> to vector<8x8xf32>
    %c0_69 = arith.constant 0 : index
    %c24 = arith.constant 24 : index
    %129 = vector.load %arg17[%c0_69, %c24] : memref<8x32xf32, #tpu.memory_space<vmem>>, vector<8x8xf32>
    tpu.vector_store %arg17[%c0_69, %c24], %128 {strides = array<i32>} : memref<8x32xf32, #tpu.memory_space<vmem>>, vector<8x8xf32>,
    %c0_70 = arith.constant 0 : index
    %c0_71 = arith.constant 0 : index
    %130 = vector.load %arg17[%c0_70, %c0_71] : memref<8x32xf32, #tpu.memory_space<vmem>>, vector<8x32xf32>
    %131 = arith.truncf %130 : vector<8x32xf32> to vector<8x32xbf16>
    %c0_72 = arith.constant 0 : index
    %c0_73 = arith.constant 0 : index
    %132 = vector.load %arg3[%c0_72, %c0_73] : memref<32x32xbf16, #tpu.memory_space<vmem>>, vector<32x32xbf16>
    %cst_74 = arith.constant dense<0.000000e+00> : vector<8x32xf32>
    %133 = tpu.matmul %131, %132, %cst_74 {dimension_numbers = #tpu.dot_dimension_numbers<[1], [0], [0], [1], [0, 0, 1, 1], [], []>} : vector<8x32xbf16>, vector<32x32xbf16>, vector<8x32xf32> -> vector<8x32xf32>
    %c0_75 = arith.constant 0 : index
    %c0_76 = arith.constant 0 : index
    %134 = vector.load %arg4[%c0_75, %c0_76] : memref<1x32xf32, #tpu.memory_space<vmem>>, vector<1x32xf32>
    %135 = vector.shape_cast %134 : vector<1x32xf32> to vector<32xf32>
    %136 = vector.shape_cast %135 : vector<32xf32> to vector<1x32xf32>
    %137 = vector.broadcast %136 : vector<1x32xf32> to vector<8x32xf32>
    %138 = arith.addf %133, %137 : vector<8x32xf32>
    %139 = arith.addf %1, %138 : vector<8x32xf32>
    %c0_77 = arith.constant 0 : index
    %c0_78 = arith.constant 0 : index
    %140 = vector.load %arg7[%c0_77, %c0_78] : memref<1x32xf32, #tpu.memory_space<vmem>>, vector<1x32xf32>
    %141 = vector.shape_cast %140 : vector<1x32xf32> to vector<32xf32>
    %c0_79 = arith.constant 0 : index
    %c0_80 = arith.constant 0 : index
    %142 = vector.load %arg8[%c0_79, %c0_80] : memref<1x32xf32, #tpu.memory_space<vmem>>, vector<1x32xf32>
    %143 = vector.shape_cast %142 : vector<1x32xf32> to vector<32xf32>
    %cst_81 = arith.constant dense<0.000000e+00> : vector<8xf32>
    %144 = vector.multi_reduction <add>, %139, %cst_81 [1] : vector<8x32xf32> to vector<8xf32>
    %145 = vector.shape_cast %144 : vector<8xf32> to vector<8x1xf32>
    %cst_82 = arith.constant 3.200000e+01 : f32
    %146 = vector.broadcast %cst_82 : f32 to vector<8x1xf32>
    %147 = arith.divf %145, %146 : vector<8x1xf32>
    %148 = vector.broadcast %147 : vector<8x1xf32> to vector<8x32xf32>
    %149 = arith.subf %139, %148 : vector<8x32xf32>
    %150 = arith.mulf %149, %149 : vector<8x32xf32>
    %cst_83 = arith.constant dense<0.000000e+00> : vector<8xf32>
    %151 = vector.multi_reduction <add>, %150, %cst_83 [1] : vector<8x32xf32> to vector<8xf32>
    %152 = vector.shape_cast %151 : vector<8xf32> to vector<8x1xf32>
    %cst_84 = arith.constant 3.200000e+01 : f32
    %153 = vector.broadcast %cst_84 : f32 to vector<8x1xf32>
    %154 = arith.divf %152, %153 : vector<8x1xf32>
    %155 = math.sqrt %154 : vector<8x1xf32>
    %cst_85 = arith.constant 9.99999974E-6 : f32
    %156 = vector.broadcast %cst_85 : f32 to vector<8x1xf32>
    %157 = arith.addf %155, %156 : vector<8x1xf32>
    %158 = tpu.reciprocal %157 {approx = true} : vector<8x1xf32> -> vector<8x1xf32>
    %159 = vector.broadcast %147 : vector<8x1xf32> to vector<8x32xf32>
    %160 = arith.subf %139, %159 : vector<8x32xf32>
    %161 = vector.broadcast %158 : vector<8x1xf32> to vector<8x32xf32>
    %162 = arith.mulf %160, %161 : vector<8x32xf32>
    %163 = vector.shape_cast %141 : vector<32xf32> to vector<1x32xf32>
    %164 = vector.broadcast %163 : vector<1x32xf32> to vector<8x32xf32>
    %165 = arith.mulf %164, %162 : vector<8x32xf32>
    %166 = vector.shape_cast %143 : vector<32xf32> to vector<1x32xf32>
    %167 = vector.broadcast %166 : vector<1x32xf32> to vector<8x32xf32>
    %168 = arith.addf %165, %167 : vector<8x32xf32>
    %169 = arith.truncf %168 : vector<8x32xf32> to vector<8x32xbf16>
    %c0_86 = arith.constant 0 : index
    %c0_87 = arith.constant 0 : index
    %170 = vector.load %arg9[%c0_86, %c0_87] : memref<32x128xbf16, #tpu.memory_space<vmem>>, vector<32x128xbf16>
    %cst_88 = arith.constant dense<0.000000e+00> : vector<8x128xf32>
    %171 = tpu.matmul %169, %170, %cst_88 {dimension_numbers = #tpu.dot_dimension_numbers<[1], [0], [0], [1], [0, 0, 1, 1], [], []>} : vector<8x32xbf16>, vector<32x128xbf16>, vector<8x128xf32> -> vector<8x128xf32>
    %c0_89 = arith.constant 0 : index
    %c0_90 = arith.constant 0 : index
    %172 = vector.load %arg10[%c0_89, %c0_90] : memref<1x128xf32, #tpu.memory_space<vmem>>, vector<1x128xf32>
    %173 = vector.shape_cast %172 : vector<1x128xf32> to vector<128xf32>
    %174 = vector.shape_cast %173 : vector<128xf32> to vector<1x128xf32>
    %175 = vector.broadcast %174 : vector<1x128xf32> to vector<8x128xf32>
    %176 = arith.addf %171, %175 : vector<8x128xf32>
    %cst_91 = arith.constant 5.000000e-01 : f32
    %177 = vector.broadcast %cst_91 : f32 to vector<8x128xf32>
    %178 = arith.mulf %177, %176 : vector<8x128xf32>
    %cst_92 = arith.constant 4.471500e-02 : f32
    %179 = vector.broadcast %cst_92 : f32 to vector<8x128xf32>
    %180 = arith.mulf %179, %176 : vector<8x128xf32>
    %181 = arith.mulf %180, %176 : vector<8x128xf32>
    %182 = arith.mulf %181, %176 : vector<8x128xf32>
    %183 = arith.addf %176, %182 : vector<8x128xf32>
    %cst_93 = arith.constant 0.797884583 : f32
    %184 = vector.broadcast %cst_93 : f32 to vector<8x128xf32>
    %185 = arith.mulf %184, %183 : vector<8x128xf32>
    %186 = math.tanh %185 : vector<8x128xf32>
    %cst_94 = arith.constant 1.000000e+00 : f32
    %187 = vector.broadcast %cst_94 : f32 to vector<8x128xf32>
    %188 = arith.addf %187, %186 : vector<8x128xf32>
    %189 = arith.mulf %178, %188 : vector<8x128xf32>
    %190 = arith.truncf %189 : vector<8x128xf32> to vector<8x128xbf16>
    %c0_95 = arith.constant 0 : index
    %c0_96 = arith.constant 0 : index
    %191 = vector.load %arg11[%c0_95, %c0_96] : memref<128x32xbf16, #tpu.memory_space<vmem>>, vector<128x32xbf16>
    %cst_97 = arith.constant dense<0.000000e+00> : vector<8x32xf32>
    %192 = tpu.matmul %190, %191, %cst_97 {dimension_numbers = #tpu.dot_dimension_numbers<[1], [0], [0], [1], [0, 0, 1, 1], [], []>} : vector<8x128xbf16>, vector<128x32xbf16>, vector<8x32xf32> -> vector<8x32xf32>
    %c0_98 = arith.constant 0 : index
    %c0_99 = arith.constant 0 : index
    %193 = vector.load %arg12[%c0_98, %c0_99] : memref<1x32xf32, #tpu.memory_space<vmem>>, vector<1x32xf32>
    %194 = vector.shape_cast %193 : vector<1x32xf32> to vector<32xf32>
    %195 = vector.shape_cast %194 : vector<32xf32> to vector<1x32xf32>
    %196 = vector.broadcast %195 : vector<1x32xf32> to vector<8x32xf32>
    %197 = arith.addf %192, %196 : vector<8x32xf32>
    %198 = arith.addf %139, %197 : vector<8x32xf32>
    %c0_100 = arith.constant 0 : index
    %c0_101 = arith.constant 0 : index
    %c0_102 = arith.constant 0 : index
    %199 = vector.load %arg13[%c0_100, %c0_101, %c0_102] : memref<1x8x32xf32, #tpu.memory_space<vmem>>, vector<1x8x32xf32>
    %200 = vector.shape_cast %199 : vector<1x8x32xf32> to vector<8x32xf32>
    %201 = vector.shape_cast %198 : vector<8x32xf32> to vector<1x8x32xf32>
    tpu.vector_store %arg13[%c0_100, %c0_101, %c0_102], %201 {strides = array<i32>} : memref<1x8x32xf32, #tpu.memory_space<vmem>>, vector<1x8x32xf32>,
    return
  }
  func.func @transform_0(%arg0: i32) -> (i32, i32, i32) {
    %c0_i32 = arith.constant 0 : i32
    %c0_i32_0 = arith.constant 0 : i32
    %c0_i32_1 = arith.constant 0 : i32
    return %arg0, %c0_i32, %c0_i32_0 : i32, i32, i32
  }
  func.func @transform_1(%arg0: i32) -> (i32, i32) {
    %c0_i32 = arith.constant 0 : i32
    %c0_i32_0 = arith.constant 0 : i32
    %c0_i32_1 = arith.constant 0 : i32
    return %c0_i32, %c0_i32_0 : i32, i32
  }
  func.func @transform_2(%arg0: i32) -> (i32, i32) {
    %c0_i32 = arith.constant 0 : i32
    %c0_i32_0 = arith.constant 0 : i32
    %c0_i32_1 = arith.constant 0 : i32
    return %c0_i32, %c0_i32_0 : i32, i32
  }
  func.func @transform_3(%arg0: i32) -> (i32, i32) {
    %c0_i32 = arith.constant 0 : i32
    %c0_i32_0 = arith.constant 0 : i32
    %c0_i32_1 = arith.constant 0 : i32
    return %c0_i32, %c0_i32_0 : i32, i32
  }
  func.func @transform_4(%arg0: i32) -> (i32, i32) {
    %c0_i32 = arith.constant 0 : i32
    %c0_i32_0 = arith.constant 0 : i32
    %c0_i32_1 = arith.constant 0 : i32
    return %c0_i32, %c0_i32_0 : i32, i32
  }
  func.func @transform_5(%arg0: i32) -> (i32, i32) {
    %c0_i32 = arith.constant 0 : i32
    %c0_i32_0 = arith.constant 0 : i32
    %c0_i32_1 = arith.constant 0 : i32
    return %c0_i32, %c0_i32_0 : i32, i32
  }
  func.func @transform_6(%arg0: i32) -> (i32, i32) {
    %c0_i32 = arith.constant 0 : i32
    %c0_i32_0 = arith.constant 0 : i32
    %c0_i32_1 = arith.constant 0 : i32
    return %c0_i32, %c0_i32_0 : i32, i32
  }
  func.func @transform_7(%arg0: i32) -> (i32, i32) {
    %c0_i32 = arith.constant 0 : i32
    %c0_i32_0 = arith.constant 0 : i32
    %c0_i32_1 = arith.constant 0 : i32
    return %c0_i32, %c0_i32_0 : i32, i32
  }
  func.func @transform_8(%arg0: i32) -> (i32, i32) {
    %c0_i32 = arith.constant 0 : i32
    %c0_i32_0 = arith.constant 0 : i32
    %c0_i32_1 = arith.constant 0 : i32
    return %c0_i32, %c0_i32_0 : i32, i32
  }
  func.func @transform_9(%arg0: i32) -> (i32, i32) {
    %c0_i32 = arith.constant 0 : i32
    %c0_i32_0 = arith.constant 0 : i32
    %c0_i32_1 = arith.constant 0 : i32
    return %c0_i32, %c0_i32_0 : i32, i32
  }
  func.func @transform_10(%arg0: i32) -> (i32, i32) {
    %c0_i32 = arith.constant 0 : i32
    %c0_i32_0 = arith.constant 0 : i32
    %c0_i32_1 = arith.constant 0 : i32
    return %c0_i32, %c0_i32_0 : i32, i32
  }
  func.func @transform_11(%arg0: i32) -> (i32, i32) {
    %c0_i32 = arith.constant 0 : i32
    %c0_i32_0 = arith.constant 0 : i32
    %c0_i32_1 = arith.constant 0 : i32
    return %c0_i32, %c0_i32_0 : i32, i32
  }
  func.func @transform_12(%arg0: i32) -> (i32, i32, i32) {
    %c0_i32 = arith.constant 0 : i32
    %c0_i32_0 = arith.constant 0 : i32
    %c0_i32_1 = arith.constant 0 : i32
    return %arg0, %c0_i32, %c0_i32_0 : i32, i32, i32
  }
}

</mosaic_0001>

<llo_original>
// kernel: tpu_custom_call.1
$region0: #{tpu_custom_call.1}
  #allocation0 [shape = 'u32[]', space=smem, size = 0x4, offset = 0x4, fixed_abs, tag = 'smem constant byte address 0x4 - core index']
  #allocation1 [shape = 'u32[144,128]{1,0:T(1,128)}', space=vmem, size = 0x12000, scoped, tag = 'internal scratch']
  #allocation2 [shape = 'f32[4,8,8]{2,1,0:T(8,128)}', space=vmem, size = 0x4000, scoped, tag = 'scratch operand']
  #allocation3 [shape = 'f32[4,8,8]{2,1,0:T(8,128)}', space=vmem, size = 0x4000, scoped, tag = 'scratch operand']
  #allocation4 [shape = 'f32[4,8,8]{2,1,0:T(8,128)}', space=vmem, size = 0x4000, scoped, tag = 'scratch operand']
  #allocation5 [shape = 'f32[8,32]{1,0:T(8,128)}', space=vmem, size = 0x1000, scoped, tag = 'scratch operand']
  %s0 = inlined_call_operand.vmem [shape: f32[2,8,32], index: 0, kind: input, shape index: {}]
  %s1 = inlined_call_operand.vmem [shape: bf16[32,96], index: 1, kind: input, shape index: {}]
  %s2 = inlined_call_operand.vmem [shape: bf16[32,32], index: 2, kind: input, shape index: {}]
  %s3 = inlined_call_operand.vmem [shape: f32[1,32], index: 3, kind: input, shape index: {}]
  %s4 = inlined_call_operand.vmem [shape: f32[1,32], index: 4, kind: input, shape index: {}]
  %s5 = inlined_call_operand.vmem [shape: f32[1,32], index: 5, kind: input, shape index: {}]
  %s6 = inlined_call_operand.vmem [shape: f32[1,32], index: 6, kind: input, shape index: {}]
  %s7 = inlined_call_operand.vmem [shape: f32[1,32], index: 7, kind: input, shape index: {}]
  %s8 = inlined_call_operand.vmem [shape: bf16[32,128], index: 8, kind: input, shape index: {}]
  %s9 = inlined_call_operand.vmem [shape: f32[1,128], index: 9, kind: input, shape index: {}]
  %s10 = inlined_call_operand.vmem [shape: bf16[128,32], index: 10, kind: input, shape index: {}]
  %s11 = inlined_call_operand.vmem [shape: f32[1,32], index: 11, kind: input, shape index: {}]
  %s12 = inlined_call_operand.hbm [shape: f32[2,8,32], index: 12, kind: output, shape index: {}]
  %s13 = sld [smem:[#allocation0]]
  $region81: #{tpu_custom_call.1} parent=0
    _
  %s15 = ssub.s32 1, %s13
  %s16 = scalar_select 0, %s15, %s13
  $region1: #{tpu_custom_call.1} parent=0
    #allocation6 [shape = 'u8[8192]{0}', space=vmem, size = 0x2000, scoped, tag = 'output window, operand 0']
    #allocation7 [shape = 's32[2]{0}', space=sflag, size = 0x8, scoped, tag = 'scoped memory for tpu_custom_call.1']
    %17 = vsyncpa [#allocation7], 0
    %s18 = scalar_lea.sflag [#allocation7], 1
    %19 = vsyncpa %s18, 0
    loop: start=0, step=1, limit=4
    $region2: #{tpu_custom_call.1} parent=1 // loop_pre_header
      _
    $region3: #{tpu_custom_call.1} parent=1 // loop_header
      %s21 = sphi 0, %s25
      %p22 = scmp.ge.s32.totalorder %s21, 4
      %s31 = sphi 0, %s33
      %s34 = sphi 0, %s31
      %s35 = sphi 0, %s34
      %s51 = sphi 0, %s35
      %s55 = sphi 0, %s55
      %s57 = sphi 0, %s55
      %s58 = sphi 0, %s57
      %s72 = sphi 0, %s58
      %s76 = sphi 0, %s76
      %s78 = sphi 0, %s76
      %s79 = sphi 0, %s78
      %s93 = sphi 0, %s79
      %s97 = sphi 0, %s97
      %s99 = sphi 0, %s97
      %s100 = sphi 0, %s99
      %s114 = sphi 0, %s100
      %s118 = sphi 0, %s118
      %s120 = sphi 0, %s118
      %s121 = sphi 0, %s120
      %s135 = sphi 0, %s121
      %s139 = sphi 0, %s139
      %s141 = sphi 0, %s139
      %s142 = sphi 0, %s141
      %s156 = sphi 0, %s142
      %s160 = sphi 0, %s160
      %s162 = sphi 0, %s160
      %s163 = sphi 0, %s162
      %s177 = sphi 0, %s163
      %s181 = sphi 0, %s181
      %s183 = sphi 0, %s181
      %s184 = sphi 0, %s183
      %s198 = sphi 0, %s184
      %s202 = sphi 0, %s202
      %s204 = sphi 0, %s202
      %s205 = sphi 0, %s204
      %s219 = sphi 0, %s205
      %s223 = sphi 0, %s223
      %s225 = sphi 0, %s223
      %s226 = sphi 0, %s225
      %s240 = sphi 0, %s226
      %s244 = sphi 0, %s244
      %s246 = sphi 0, %s244
      %s247 = sphi 0, %s246
      %s261 = sphi 0, %s247
      %s265 = sphi 0, %s265
      %s267 = sphi 0, %s265
      %s268 = sphi 0, %s267
      %s282 = sphi 0, %s268
      %s288 = sphi 0, %s290
      %s291 = sphi 0, %s288
      %s292 = sphi 0, %s291
      %s308 = sphi 0, %s292
    $region4: #{tpu_custom_call.1} parent=1 // loop_header_branch
      %24 = sbr.rel (%p22) target = $region8
    $region5: #{tpu_custom_call.1} parent=1 // loop_body
      %s26 = ssub.s32 %s21, 1
      %s27 = ssub.s32 %s21, 2
      %s28 = sadd.s32 %s21, 1
      %s29 = ssub.s32 %s21, %s28
      %p30 = scmp.eq.s32.totalorder %s29, 0
      %s32 = sadd.s32 %s31, 1
      %s33 = scalar_select %p30, %s31, %s32
      %p36 = pneg %p30
      %p37 = scmp.eq.s32.totalorder %s21, 1
      %p38 = por %p36, %p37
      %p39 = scmp.ne.s32.totalorder %s31, %s34
      %p40 = scmp.eq.s32.totalorder %s21, 0
      %p41 = por %p39, %p40
      %p42 = scmp.ne.s32.totalorder %s31, %s34
      %p43 = scmp.eq.s32.totalorder %s26, 1
      %p44 = por %p42, %p43
      %p45 = scmp.ne.s32.totalorder %s34, %s35
      %p46 = scmp.eq.s32.totalorder %s26, 0
      %p47 = por %p45, %p46
      %p48 = scmp.ne.s32.totalorder %s34, %s35
      %p49 = scmp.eq.s32.totalorder %s27, 1
      %p50 = por %p48, %p49
      %p52 = scmp.ne.s32.totalorder %s35, %s51
      %p53 = scmp.eq.s32.totalorder %s27, 0
      %p54 = por %p52, %p53
      %s56 = sadd.s32 %s55, 1
      %p59 = scmp.eq.s32.totalorder %s21, 1
      %p60 = scmp.ne.s32.totalorder %s55, %s57
      %p61 = scmp.eq.s32.totalorder %s21, 0
      %p62 = por %p60, %p61
      %p63 = scmp.ne.s32.totalorder %s55, %s57
      %p64 = scmp.eq.s32.totalorder %s26, 1
      %p65 = por %p63, %p64
      %p66 = scmp.ne.s32.totalorder %s57, %s58
      %p67 = scmp.eq.s32.totalorder %s26, 0
      %p68 = por %p66, %p67
      %p69 = scmp.ne.s32.totalorder %s57, %s58
      %p70 = scmp.eq.s32.totalorder %s27, 1
      %p71 = por %p69, %p70
      %p73 = scmp.ne.s32.totalorder %s58, %s72
      %p74 = scmp.eq.s32.totalorder %s27, 0
      %p75 = por %p73, %p74
      %s77 = sadd.s32 %s76, 1
      %p80 = scmp.eq.s32.totalorder %s21, 1
      %p81 = scmp.ne.s32.totalorder %s76, %s78
      %p82 = scmp.eq.s32.totalorder %s21, 0
      %p83 = por %p81, %p82
      %p84 = scmp.ne.s32.totalorder %s76, %s78
      %p85 = scmp.eq.s32.totalorder %s26, 1
      %p86 = por %p84, %p85
      %p87 = scmp.ne.s32.totalorder %s78, %s79
      %p88 = scmp.eq.s32.totalorder %s26, 0
      %p89 = por %p87, %p88
      %p90 = scmp.ne.s32.totalorder %s78, %s79
      %p91 = scmp.eq.s32.totalorder %s27, 1
      %p92 = por %p90, %p91
      %p94 = scmp.ne.s32.totalorder %s79, %s93
      %p95 = scmp.eq.s32.totalorder %s27, 0
      %p96 = por %p94, %p95
      %s98 = sadd.s32 %s97, 1
      %p101 = scmp.eq.s32.totalorder %s21, 1
      %p102 = scmp.ne.s32.totalorder %s97, %s99
      %p103 = scmp.eq.s32.totalorder %s21, 0
      %p104 = por %p102, %p103
      %p105 = scmp.ne.s32.totalorder %s97, %s99
      %p106 = scmp.eq.s32.totalorder %s26, 1
      %p107 = por %p105, %p106
      %p108 = scmp.ne.s32.totalorder %s99, %s100
      %p109 = scmp.eq.s32.totalorder %s26, 0
      %p110 = por %p108, %p109
      %p111 = scmp.ne.s32.totalorder %s99, %s100
      %p112 = scmp.eq.s32.totalorder %s27, 1
      %p113 = por %p111, %p112
      %p115 = scmp.ne.s32.totalorder %s100, %s114
      %p116 = scmp.eq.s32.totalorder %s27, 0
      %p117 = por %p115, %p116
      %s119 = sadd.s32 %s118, 1
      %p122 = scmp.eq.s32.totalorder %s21, 1
      %p123 = scmp.ne.s32.totalorder %s118, %s120
      %p124 = scmp.eq.s32.totalorder %s21, 0
      %p125 = por %p123, %p124
      %p126 = scmp.ne.s32.totalorder %s118, %s120
      %p127 = scmp.eq.s32.totalorder %s26, 1
      %p128 = por %p126, %p127
      %p129 = scmp.ne.s32.totalorder %s120, %s121
      %p130 = scmp.eq.s32.totalorder %s26, 0
      %p131 = por %p129, %p130
      %p132 = scmp.ne.s32.totalorder %s120, %s121
      %p133 = scmp.eq.s32.totalorder %s27, 1
      %p134 = por %p132, %p133
      %p136 = scmp.ne.s32.totalorder %s121, %s135
      %p137 = scmp.eq.s32.totalorder %s27, 0
      %p138 = por %p136, %p137
      %s140 = sadd.s32 %s139, 1
      %p143 = scmp.eq.s32.totalorder %s21, 1
      %p144 = scmp.ne.s32.totalorder %s139, %s141
      %p145 = scmp.eq.s32.totalorder %s21, 0
      %p146 = por %p144, %p145
      %p147 = scmp.ne.s32.totalorder %s139, %s141
      %p148 = scmp.eq.s32.totalorder %s26, 1
      %p149 = por %p147, %p148
      %p150 = scmp.ne.s32.totalorder %s141, %s142
      %p151 = scmp.eq.s32.totalorder %s26, 0
      %p152 = por %p150, %p151
      %p153 = scmp.ne.s32.totalorder %s141, %s142
      %p154 = scmp.eq.s32.totalorder %s27, 1
      %p155 = por %p153, %p154
      %p157 = scmp.ne.s32.totalorder %s142, %s156
      %p158 = scmp.eq.s32.totalorder %s27, 0
      %p159 = por %p157, %p158
      %s161 = sadd.s32 %s160, 1
      %p164 = scmp.eq.s32.totalorder %s21, 1
      %p165 = scmp.ne.s32.totalorder %s160, %s162
      %p166 = scmp.eq.s32.totalorder %s21, 0
      %p167 = por %p165, %p166
      %p168 = scmp.ne.s32.totalorder %s160, %s162
      %p169 = scmp.eq.s32.totalorder %s26, 1
      %p170 = por %p168, %p169
      %p171 = scmp.ne.s32.totalorder %s162, %s163
      %p172 = scmp.eq.s32.totalorder %s26, 0
      %p173 = por %p171, %p172
      %p174 = scmp.ne.s32.totalorder %s162, %s163
      %p175 = scmp.eq.s32.totalorder %s27, 1
      %p176 = por %p174, %p175
      %p178 = scmp.ne.s32.totalorder %s163, %s177
      %p179 = scmp.eq.s32.totalorder %s27, 0
      %p180 = por %p178, %p179
      %s182 = sadd.s32 %s181, 1
      %p185 = scmp.eq.s32.totalorder %s21, 1
      %p186 = scmp.ne.s32.totalorder %s181, %s183
      %p187 = scmp.eq.s32.totalorder %s21, 0
      %p188 = por %p186, %p187
      %p189 = scmp.ne.s32.totalorder %s181, %s183
      %p190 = scmp.eq.s32.totalorder %s26, 1
      %p191 = por %p189, %p190
      %p192 = scmp.ne.s32.totalorder %s183, %s184
      %p193 = scmp.eq.s32.totalorder %s26, 0
      %p194 = por %p192, %p193
      %p195 = scmp.ne.s32.totalorder %s183, %s184
      %p196 = scmp.eq.s32.totalorder %s27, 1
      %p197 = por %p195, %p196
      %p199 = scmp.ne.s32.totalorder %s184, %s198
      %p200 = scmp.eq.s32.totalorder %s27, 0
      %p201 = por %p199, %p200
      %s203 = sadd.s32 %s202, 1
      %p206 = scmp.eq.s32.totalorder %s21, 1
      %p207 = scmp.ne.s32.totalorder %s202, %s204
      %p208 = scmp.eq.s32.totalorder %s21, 0
      %p209 = por %p207, %p208
      %p210 = scmp.ne.s32.totalorder %s202, %s204
      %p211 = scmp.eq.s32.totalorder %s26, 1
      %p212 = por %p210, %p211
      %p213 = scmp.ne.s32.totalorder %s204, %s205
      %p214 = scmp.eq.s32.totalorder %s26, 0
      %p215 = por %p213, %p214
      %p216 = scmp.ne.s32.totalorder %s204, %s205
      %p217 = scmp.eq.s32.totalorder %s27, 1
      %p218 = por %p216, %p217
      %p220 = scmp.ne.s32.totalorder %s205, %s219
      %p221 = scmp.eq.s32.totalorder %s27, 0
      %p222 = por %p220, %p221
      %s224 = sadd.s32 %s223, 1
      %p227 = scmp.eq.s32.totalorder %s21, 1
      %p228 = scmp.ne.s32.totalorder %s223, %s225
      %p229 = scmp.eq.s32.totalorder %s21, 0
      %p230 = por %p228, %p229
      %p231 = scmp.ne.s32.totalorder %s223, %s225
      %p232 = scmp.eq.s32.totalorder %s26, 1
      %p233 = por %p231, %p232
      %p234 = scmp.ne.s32.totalorder %s225, %s226
      %p235 = scmp.eq.s32.totalorder %s26, 0
      %p236 = por %p234, %p235
      %p237 = scmp.ne.s32.totalorder %s225, %s226
      %p238 = scmp.eq.s32.totalorder %s27, 1
      %p239 = por %p237, %p238
      %p241 = scmp.ne.s32.totalorder %s226, %s240
      %p242 = scmp.eq.s32.totalorder %s27, 0
      %p243 = por %p241, %p242
      %s245 = sadd.s32 %s244, 1
      %p248 = scmp.eq.s32.totalorder %s21, 1
      %p249 = scmp.ne.s32.totalorder %s244, %s246
      %p250 = scmp.eq.s32.totalorder %s21, 0
      %p251 = por %p249, %p250
      %p252 = scmp.ne.s32.totalorder %s244, %s246
      %p253 = scmp.eq.s32.totalorder %s26, 1
      %p254 = por %p252, %p253
      %p255 = scmp.ne.s32.totalorder %s246, %s247
      %p256 = scmp.eq.s32.totalorder %s26, 0
      %p257 = por %p255, %p256
      %p258 = scmp.ne.s32.totalorder %s246, %s247
      %p259 = scmp.eq.s32.totalorder %s27, 1
      %p260 = por %p258, %p259
      %p262 = scmp.ne.s32.totalorder %s247, %s261
      %p263 = scmp.eq.s32.totalorder %s27, 0
      %p264 = por %p262, %p263
      %s266 = sadd.s32 %s265, 1
      %p269 = scmp.eq.s32.totalorder %s21, 1
      %p270 = scmp.ne.s32.totalorder %s265, %s267
      %p271 = scmp.eq.s32.totalorder %s21, 0
      %p272 = por %p270, %p271
      %p273 = scmp.ne.s32.totalorder %s265, %s267
      %p274 = scmp.eq.s32.totalorder %s26, 1
      %p275 = por %p273, %p274
      %p276 = scmp.ne.s32.totalorder %s267, %s268
      %p277 = scmp.eq.s32.totalorder %s26, 0
      %p278 = por %p276, %p277
      %p279 = scmp.ne.s32.totalorder %s267, %s268
      %p280 = scmp.eq.s32.totalorder %s27, 1
      %p281 = por %p279, %p280
      %p283 = scmp.ne.s32.totalorder %s268, %s282
      %p284 = scmp.eq.s32.totalorder %s27, 0
      %p285 = por %p283, %p284
      %s286 = ssub.s32 %s21, %s28
      %p287 = scmp.eq.s32.totalorder %s286, 0
      %s289 = sadd.s32 %s288, 1
      %s290 = scalar_select %p287, %s288, %s289
      %p293 = pneg %p287
      %p294 = scmp.eq.s32.totalorder %s21, 1
      %p295 = por %p293, %p294
      %p296 = scmp.ne.s32.totalorder %s288, %s291
      %p297 = scmp.eq.s32.totalorder %s21, 0
      %p298 = por %p296, %p297
      %p299 = scmp.ne.s32.totalorder %s288, %s291
      %p300 = scmp.eq.s32.totalorder %s26, 1
      %p301 = por %p299, %p300
      %p302 = scmp.ne.s32.totalorder %s291, %s292
      %p303 = scmp.eq.s32.totalorder %s26, 0
      %p304 = por %p302, %p303
      %p305 = scmp.ne.s32.totalorder %s291, %s292
      %p306 = scmp.eq.s32.totalorder %s27, 1
      %p307 = por %p305, %p306
      %p309 = scmp.ne.s32.totalorder %s292, %s308
      %p310 = scmp.eq.s32.totalorder %s27, 0
      %p311 = por %p309, %p310
      %p312 = scmp.le.s32.totalorder 1, %s21
      %p313 = scmp.lt.s32.totalorder %s21, 3
      %p314 = pnand %p312, %p313
      %p315 = pneg %p314
      // Predicated region
      $region9: #{tpu_custom_call.1} parent=5 // pred_check
        _
      $region10: #{tpu_custom_call.1} parent=5 // pred_check_branch
        %317 = sbr.rel (%p314) target = $region12
      $region11: #{tpu_custom_call.1} parent=5 // pred_region
        %s318 = ssub.s32 %s21, 1
        // Predicated region
        $region13: #{tpu_custom_call.1} parent=11 // pred_check
          %p319 = pneg %p68
        $region14: #{tpu_custom_call.1} parent=11 // pred_check_branch
          %321 = sbr.rel (%p319) target = $region16
        $region15: #{tpu_custom_call.1} parent=11 // pred_region
          _
        $region16: #{tpu_custom_call.1} parent=11 // pred_fallthru
          _
        // Predicated region
        $region17: #{tpu_custom_call.1} parent=11 // pred_check
          %p322 = pneg %p89
        $region18: #{tpu_custom_call.1} parent=11 // pred_check_branch
          %324 = sbr.rel (%p322) target = $region20
        $region19: #{tpu_custom_call.1} parent=11 // pred_region
          _
        $region20: #{tpu_custom_call.1} parent=11 // pred_fallthru
          _
        // Predicated region
        $region21: #{tpu_custom_call.1} parent=11 // pred_check
          %p325 = pneg %p110
        $region22: #{tpu_custom_call.1} parent=11 // pred_check_branch
          %327 = sbr.rel (%p325) target = $region24
        $region23: #{tpu_custom_call.1} parent=11 // pred_region
          _
        $region24: #{tpu_custom_call.1} parent=11 // pred_fallthru
          _
        // Predicated region
        $region25: #{tpu_custom_call.1} parent=11 // pred_check
          %p328 = pneg %p131
        $region26: #{tpu_custom_call.1} parent=11 // pred_check_branch
          %330 = sbr.rel (%p328) target = $region28
        $region27: #{tpu_custom_call.1} parent=11 // pred_region
          _
        $region28: #{tpu_custom_call.1} parent=11 // pred_fallthru
          _
        // Predicated region
        $region29: #{tpu_custom_call.1} parent=11 // pred_check
          %p331 = pneg %p152
        $region30: #{tpu_custom_call.1} parent=11 // pred_check_branch
          %333 = sbr.rel (%p331) target = $region32
        $region31: #{tpu_custom_call.1} parent=11 // pred_region
          _
        $region32: #{tpu_custom_call.1} parent=11 // pred_fallthru
          _
        // Predicated region
        $region33: #{tpu_custom_call.1} parent=11 // pred_check
          %p334 = pneg %p173
        $region34: #{tpu_custom_call.1} parent=11 // pred_check_branch
          %336 = sbr.rel (%p334) target = $region36
        $region35: #{tpu_custom_call.1} parent=11 // pred_region
          _
        $region36: #{tpu_custom_call.1} parent=11 // pred_fallthru
          _
        // Predicated region
        $region37: #{tpu_custom_call.1} parent=11 // pred_check
          %p337 = pneg %p194
        $region38: #{tpu_custom_call.1} parent=11 // pred_check_branch
          %339 = sbr.rel (%p337) target = $region40
        $region39: #{tpu_custom_call.1} parent=11 // pred_region
          _
        $region40: #{tpu_custom_call.1} parent=11 // pred_fallthru
          _
        // Predicated region
        $region41: #{tpu_custom_call.1} parent=11 // pred_check
          %p340 = pneg %p215
        $region42: #{tpu_custom_call.1} parent=11 // pred_check_branch
          %342 = sbr.rel (%p340) target = $region44
        $region43: #{tpu_custom_call.1} parent=11 // pred_region
          _
        $region44: #{tpu_custom_call.1} parent=11 // pred_fallthru
          _
        // Predicated region
        $region45: #{tpu_custom_call.1} parent=11 // pred_check
          %p343 = pneg %p236
        $region46: #{tpu_custom_call.1} parent=11 // pred_check_branch
          %345 = sbr.rel (%p343) target = $region48
        $region47: #{tpu_custom_call.1} parent=11 // pred_region
          _
        $region48: #{tpu_custom_call.1} parent=11 // pred_fallthru
          _
        // Predicated region
        $region49: #{tpu_custom_call.1} parent=11 // pred_check
          %p346 = pneg %p257
        $region50: #{tpu_custom_call.1} parent=11 // pred_check_branch
          %348 = sbr.rel (%p346) target = $region52
        $region51: #{tpu_custom_call.1} parent=11 // pred_region
          _
        $region52: #{tpu_custom_call.1} parent=11 // pred_fallthru
          _
        // Predicated region
        $region53: #{tpu_custom_call.1} parent=11 // pred_check
          %p349 = pneg %p278
        $region54: #{tpu_custom_call.1} parent=11 // pred_check_branch
          %351 = sbr.rel (%p349) target = $region56
        $region55: #{tpu_custom_call.1} parent=11 // pred_region
          _
        $region56: #{tpu_custom_call.1} parent=11 // pred_fallthru
          _
      $region12: #{tpu_custom_call.1} parent=5 // pred_fallthru
        _
      %p352 = scmp.lt.s32.totalorder %s21, 2
      // Predicated region
      $region57: #{tpu_custom_call.1} parent=5 // pred_check
        %p353 = pneg %p352
      $region58: #{tpu_custom_call.1} parent=5 // pred_check_branch
        %355 = sbr.rel (%p353) target = $region60
      $region59: #{tpu_custom_call.1} parent=5 // pred_region
        // Predicated region
        $region61: #{tpu_custom_call.1} parent=59 // pred_check
          %p356 = pneg %p41
        $region62: #{tpu_custom_call.1} parent=59 // pred_check_branch
          %358 = sbr.rel (%p356) target = $region64
        $region63: #{tpu_custom_call.1} parent=59 // pred_region
          %p359 = scmp.lt.s32.totalorder %s21, 1
          %s360 = scalar_select %p359, %s21, 1
          %s361 = smul.addr %s360, 8
          %s362 = scalar_lea.vmem %s0, %s361
        $region64: #{tpu_custom_call.1} parent=59 // pred_fallthru
          _
      $region60: #{tpu_custom_call.1} parent=5 // pred_fallthru
        _
      %p363 = scmp.le.s32.totalorder 1, %s21
      %p364 = scmp.lt.s32.totalorder %s21, 3
      %p365 = pnand %p363, %p364
      %p366 = pneg %p365
      // Predicated region
      $region65: #{tpu_custom_call.1} parent=5 // pred_check
        _
      $region66: #{tpu_custom_call.1} parent=5 // pred_check_branch
        %368 = sbr.rel (%p365) target = $region68
      $region67: #{tpu_custom_call.1} parent=5 // pred_region
        %s369 = ssub.s32 %s21, 1
        %p370 = scmp.lt.s32.totalorder %s26, 1
        %s371 = scalar_select %p370, %s26, 1
        %s372 = smul.addr %s371, 8
        %s373 = scalar_lea.vmem %s0, %s372
        %p374 = pneg %p47
        %p375 = pneg %p44
        %p376 = pneg %p68
        %p377 = pneg %p65
        %p378 = pneg %p89
        %p379 = pneg %p86
        %p380 = pneg %p110
        %p381 = pneg %p107
        %p382 = pneg %p131
        %p383 = pneg %p128
        %p384 = pneg %p152
        %p385 = pneg %p149
        %p386 = pneg %p173
        %p387 = pneg %p170
        %p388 = pneg %p194
        %p389 = pneg %p191
        %p390 = pneg %p215
        %p391 = pneg %p212
        %p392 = pneg %p236
        %p393 = pneg %p233
        %p394 = pneg %p257
        %p395 = pneg %p254
        %p396 = pneg %p278
        %p397 = pneg %p275
        %p398 = pneg %p304
        %p399 = pneg %p301
        %s400 = sand.u32 %s291, 1
        %s401 = scalar_lea.sflag [#allocation7], %s400
        %s402 = sand.u32 %s291, 1
        %s403 = smul.addr %s402, 8
        %s404 = scalar_lea.vmem [#allocation6], %s403
        %p405 = scmp.lt.s32.totalorder %s26, 1
        %s406 = scalar_select %p405, %s26, 1
        %s407 = smul.addr %s406, 8
        %s408 = scalar_lea.vmem %s0, %s407
        %v410 = vld [vmem:[%s408] sm:$0xff]
        %v411 = vld [vmem:[%s4] sm:$0x1]
        %v412 = vld [vmem:[%s5] sm:$0x1]
        %vm413 = vcmask 261120
        %v414 = vsel %vm413, %v410, 0.0
        %415 = vadd.xlane.f32.xlu0 %v414
        %v416 = vpop.xlane.xlu0 %415
        %v417 = vrcp.pop 32.0
        %v418 = vmul.f32 %v416, %v417
        %v419 = vsub.f32 %v410, %v418
        %v420 = vmul.f32 %v419, %v419
        %v421 = vsel %vm413, %v420, 0.0
        %422 = vadd.xlane.f32.xlu0 %v421
        %v423 = vpop.xlane.xlu0 %422
        %v424 = vmul.f32 %v423, %v417
        %v425 = vrsqrt.pop %v424
        %v426 = vmul.f32 %v424, %v425
        %vm427 = vcmp.eq.f32.partialorder %v424, inf
        %v428 = vsel %vm427, %v424, %v426
        %vm429 = vcmp.eq.f32.partialorder %v424, 0.0
        %v430 = vand.u32 %v424, 2147483648
        %v431 = vsel %vm429, %v430, %v428
        %v432 = vadd.f32 %v431, 1e-05
        %v433 = vrcp.pop %v432
        %v434 = vmul.f32 %v419, %v433
        %v436 = vlaneseq
        %v437 = vshrl.u32 %v436, 7
        %v438 = vsub.s32 0, %v437
        %v439 = vrot.slane %v411, %v438
        %v441 = vmul.f32 %v439, %v434
        %v443 = vlaneseq
        %v444 = vshrl.u32 %v443, 7
        %v445 = vsub.s32 0, %v444
        %v446 = vrot.slane %v412, %v445
        %v448 = vadd.f32 %v441, %v446
        %v449 = vpack.c.bf16 %v448, %v448
        %v450 = vld [vmem:[%s1] sm:$0xf]
        %v451 = vld [vmem:[%s1 + $0x4] sm:$0xf]
        %v452 = vld [vmem:[%s1 + $0x8] sm:$0xf]
        %v453 = vld [vmem:[%s1 + $0xc] sm:$0xf]
        %v458 = vunpack.c.l.b16 %v450
        %v459 = vunpack.c.l.b16 %v451
        %v460 = vunpack.c.l.b16 %v452
        %v461 = vunpack.c.l.b16 %v453
        %v462 = vpack.c.b16 %v459, %v458
        %v463 = vpack.c.b16 %v461, %v460
        %v467 = vsel %vm413, %v449, 0
        %469 = vmatprep.subr.bf16.mxu0 0
        %470 = vmatpush1.bf16.msra.mxu0 %v462
        %471 = vmatprep.subr.bf16.mxu0 0
        %472 = vmatpush1.bf16.msra.mxu0 %v463
        %473 = vmatprep.subr.bf16.mxu0 0
        %474 = vmatpush1.bf16.msra.mxu0 0
        %475 = vmatprep.subr.bf16.mxu0 0
        %476 = vmatpush1.bf16.msra.mxu0 0
        %477 = vmatprep.subr.bf16.mxu0 0
        %478 = vmatpush1.bf16.msra.mxu0 0
        %479 = vmatprep.subr.bf16.mxu0 0
        %480 = vmatpush1.bf16.msra.mxu0 0
        %481 = vmatprep.subr.bf16.mxu0 0
        %482 = vmatpush1.bf16.msra.mxu0 0
        %483 = vmatprep.subr.bf16.mxu0 0
        %484 = vmatpush1.bf16.msra.mxu0 0
        %485 = vmatprep.subr.bf16.mxu0 0
        %486 = vmatpush1.bf16.msra.mxu0 0
        %487 = vmatprep.subr.bf16.mxu0 0
        %488 = vmatpush1.bf16.msra.mxu0 0
        %489 = vmatprep.subr.bf16.mxu0 0
        %490 = vmatpush1.bf16.msra.mxu0 0
        %491 = vmatprep.subr.bf16.mxu0 0
        %492 = vmatpush1.bf16.msra.mxu0 0
        %493 = vmatprep.subr.bf16.mxu0 0
        %494 = vmatpush1.bf16.msra.mxu0 0
        %495 = vmatprep.subr.bf16.mxu0 0
        %496 = vmatpush1.bf16.msra.mxu0 0
        %497 = vmatprep.subr.bf16.mxu0 0
        %498 = vmatpush1.bf16.msra.mxu0 0
        %499 = vmatprep.subr.bf16.mxu0 0
        %500 = vmatpush1.bf16.msra.mxu0 0
        %501 = vmatprep.mubr.bf16.mxu0 0
        %502 = vmatmul.mubr.bf16.gmra.mrb[0].mxu0 %v467
        %v503 = vpop.f32.mrb[0].mxu0
        %v504 = vadd.f32 0.0, %v503
        %v505 = vpop.f32.mrb[0].mxu0
        %v506 = vpop.f32.mrb[0].mxu0
        %v507 = vpop.f32.mrb[0].mxu0
        %508 = vdwg.mxu0
        %v509 = vmul.f32 %v504, 0.35355338
        %vm510 = vcmask 64512
        %511 = vst.msk [vmem:[#allocation2] sm:$0xff] %vm510, %v509
        %513 = vrot.lane.b32.xlu0 %v504, 96
        %v514 = vpop.permute.xlu0 %513
        %516 = vst.msk [vmem:[#allocation3] sm:$0xff] %vm510, %v514
        %517 = vrot.lane.b32.xlu0 %v504, 64
        %v518 = vpop.permute.xlu0 %517
        %520 = vst.msk [vmem:[#allocation4] sm:$0xff] %vm510, %v518
        %522 = vrot.lane.b32.xlu0 %v509, 120
        %v523 = vpop.permute.xlu0 %522
        %s525 = scalar_lea.vmem [#allocation2], 8
        %526 = vst.msk [vmem:[%s525] sm:$0xff] %vm510, %v523
        %527 = vrot.lane.b32.xlu0 %v504, 88
        %v528 = vpop.permute.xlu0 %527
        %s530 = scalar_lea.vmem [#allocation3], 8
        %531 = vst.msk [vmem:[%s530] sm:$0xff] %vm510, %v528
        %532 = vrot.lane.b32.xlu0 %v504, 56
        %v533 = vpop.permute.xlu0 %532
        %s535 = scalar_lea.vmem [#allocation4], 8
        %536 = vst.msk [vmem:[%s535] sm:$0xff] %vm510, %v533
        %537 = vrot.lane.b32.xlu0 %v509, 112
        %v538 = vpop.permute.xlu0 %537
        %s540 = scalar_lea.vmem [#allocation2], 16
        %541 = vst.msk [vmem:[%s540] sm:$0xff] %vm510, %v538
        %542 = vrot.lane.b32.xlu0 %v504, 80
        %v543 = vpop.permute.xlu0 %542
        %s545 = scalar_lea.vmem [#allocation3], 16
        %546 = vst.msk [vmem:[%s545] sm:$0xff] %vm510, %v543
        %547 = vrot.lane.b32.xlu0 %v504, 48
        %v548 = vpop.permute.xlu0 %547
        %s550 = scalar_lea.vmem [#allocation4], 16
        %551 = vst.msk [vmem:[%s550] sm:$0xff] %vm510, %v548
        %552 = vrot.lane.b32.xlu0 %v509, 104
        %v553 = vpop.permute.xlu0 %552
        %s555 = scalar_lea.vmem [#allocation2], 24
        %556 = vst.msk [vmem:[%s555] sm:$0xff] %vm510, %v553
        %557 = vrot.lane.b32.xlu0 %v504, 72
        %v558 = vpop.permute.xlu0 %557
        %s560 = scalar_lea.vmem [#allocation3], 24
        %561 = vst.msk [vmem:[%s560] sm:$0xff] %vm510, %v558
        %562 = vrot.lane.b32.xlu0 %v504, 40
        %v563 = vpop.permute.xlu0 %562
        %s565 = scalar_lea.vmem [#allocation4], 24
        %566 = vst.msk [vmem:[%s565] sm:$0xff] %vm510, %v563
        %v567 = vlaneseq
        %v568 = vshrl.u32 %v567, 7
        %v569 = vlaneseq
        %v570 = vand.u32 %v569, 127
        %vm571 = vcmp.ge.s32.totalorder %v568, %v570
        %v572 = vsel %vm571, 0.0, -1e+30
        %v573 = vld [vmem:[#allocation2] sm:$0xff]
        %v574 = vld [vmem:[#allocation2 + $0x8] sm:$0xff]
        %v575 = vld [vmem:[#allocation2 + $0x10] sm:$0xff]
        %v576 = vld [vmem:[#allocation2 + $0x18] sm:$0xff]
        %v577 = vpack.c.bf16 %v573, %v573
        %v578 = vpack.c.bf16 %v574, %v574
        %v579 = vpack.c.bf16 %v575, %v575
        %v580 = vpack.c.bf16 %v576, %v576
        %v581 = vld [vmem:[#allocation3] sm:$0xff]
        %v582 = vld [vmem:[#allocation3 + $0x8] sm:$0xff]
        %v583 = vld [vmem:[#allocation3 + $0x10] sm:$0xff]
        %v584 = vld [vmem:[#allocation3 + $0x18] sm:$0xff]
        %v585 = vpack.c.bf16 %v581, %v581
        %v586 = vpack.c.bf16 %v582, %v582
        %v587 = vpack.c.bf16 %v583, %v583
        %v588 = vpack.c.bf16 %v584, %v584
        %v589 = vld [vmem:[#allocation4] sm:$0xff]
        %v590 = vld [vmem:[#allocation4 + $0x8] sm:$0xff]
        %v591 = vld [vmem:[#allocation4 + $0x10] sm:$0xff]
        %v592 = vld [vmem:[#allocation4 + $0x18] sm:$0xff]
        %v593 = vpack.c.bf16 %v589, %v589
        %v594 = vpack.c.bf16 %v590, %v590
        %v595 = vpack.c.bf16 %v591, %v591
        %v596 = vpack.c.bf16 %v592, %v592
        %v598 = vsel %vm510, %v577, 0
        %v601 = vsel %vm510, %v585, 0
        %603 = vmatprep.subr.bf16.mxu0 0
        %604 = vmatpush1.bf16.xpose.msra.mxu0 %v601
        %605 = vmatprep.subr.bf16.mxu0 0
        %606 = vmatpush1.bf16.xpose.msra.mxu0 0
        %607 = vmatprep.subr.bf16.mxu0 0
        %608 = vmatpush1.bf16.xpose.msra.mxu0 0
        %609 = vmatprep.subr.bf16.mxu0 0
        %610 = vmatpush1.bf16.xpose.msra.mxu0 0
        %611 = vmatprep.subr.bf16.mxu0 0
        %612 = vmatpush1.bf16.xpose.msra.mxu0 0
        %613 = vmatprep.subr.bf16.mxu0 0
        %614 = vmatpush1.bf16.xpose.msra.mxu0 0
        %615 = vmatprep.subr.bf16.mxu0 0
        %616 = vmatpush1.bf16.xpose.msra.mxu0 0
        %617 = vmatprep.subr.bf16.mxu0 0
        %618 = vmatpush1.bf16.xpose.msra.mxu0 0
        %619 = vmatprep.subr.bf16.mxu0 0
        %620 = vmatpush1.bf16.xpose.msra.mxu0 0
        %621 = vmatprep.subr.bf16.mxu0 0
        %622 = vmatpush1.bf16.xpose.msra.mxu0 0
        %623 = vmatprep.subr.bf16.mxu0 0
        %624 = vmatpush1.bf16.xpose.msra.mxu0 0
        %625 = vmatprep.subr.bf16.mxu0 0
        %626 = vmatpush1.bf16.xpose.msra.mxu0 0
        %627 = vmatprep.subr.bf16.mxu0 0
        %628 = vmatpush1.bf16.xpose.msra.mxu0 0
        %629 = vmatprep.subr.bf16.mxu0 0
        %630 = vmatpush1.bf16.xpose.msra.mxu0 0
        %631 = vmatprep.subr.bf16.mxu0 0
        %632 = vmatpush1.bf16.xpose.msra.mxu0 0
        %633 = vmatprep.subr.bf16.mxu0 0
        %634 = vmatpush1.bf16.xpose.msra.mxu0 0
        %635 = vmatprep.mubr.bf16.mxu0 0
        %636 = vmatmul.mubr.bf16.gmra.mrb[0].mxu0 %v598
        %v637 = vpop.f32.mrb[0].mxu0
        %v638 = vadd.f32 %v572, %v637
        %v639 = vpop.f32.mrb[0].mxu0
        %v640 = vpop.f32.mrb[0].mxu0
        %v641 = vpop.f32.mrb[0].mxu0
        %642 = vdwg.mxu0
        %v644 = vsel %vm510, %v578, 0
        %v647 = vsel %vm510, %v586, 0
        %649 = vmatprep.subr.bf16.mxu0 0
        %650 = vmatpush1.bf16.xpose.msra.mxu0 %v647
        %651 = vmatprep.subr.bf16.mxu0 0
        %652 = vmatpush1.bf16.xpose.msra.mxu0 0
        %653 = vmatprep.subr.bf16.mxu0 0
        %654 = vmatpush1.bf16.xpose.msra.mxu0 0
        %655 = vmatprep.subr.bf16.mxu0 0
        %656 = vmatpush1.bf16.xpose.msra.mxu0 0
        %657 = vmatprep.subr.bf16.mxu0 0
        %658 = vmatpush1.bf16.xpose.msra.mxu0 0
        %659 = vmatprep.subr.bf16.mxu0 0
        %660 = vmatpush1.bf16.xpose.msra.mxu0 0
        %661 = vmatprep.subr.bf16.mxu0 0
        %662 = vmatpush1.bf16.xpose.msra.mxu0 0
        %663 = vmatprep.subr.bf16.mxu0 0
        %664 = vmatpush1.bf16.xpose.msra.mxu0 0
        %665 = vmatprep.subr.bf16.mxu0 0
        %666 = vmatpush1.bf16.xpose.msra.mxu0 0
        %667 = vmatprep.subr.bf16.mxu0 0
        %668 = vmatpush1.bf16.xpose.msra.mxu0 0
        %669 = vmatprep.subr.bf16.mxu0 0
        %670 = vmatpush1.bf16.xpose.msra.mxu0 0
        %671 = vmatprep.subr.bf16.mxu0 0
        %672 = vmatpush1.bf16.xpose.msra.mxu0 0
        %673 = vmatprep.subr.bf16.mxu0 0
        %674 = vmatpush1.bf16.xpose.msra.mxu0 0
        %675 = vmatprep.subr.bf16.mxu0 0
        %676 = vmatpush1.bf16.xpose.msra.mxu0 0
        %677 = vmatprep.subr.bf16.mxu0 0
        %678 = vmatpush1.bf16.xpose.msra.mxu0 0
        %679 = vmatprep.subr.bf16.mxu0 0
        %680 = vmatpush1.bf16.xpose.msra.mxu0 0
        %681 = vmatprep.mubr.bf16.mxu0 0
        %682 = vmatmul.mubr.bf16.gmra.mrb[0].mxu0 %v644
        %v683 = vpop.f32.mrb[0].mxu0
        %v684 = vadd.f32 %v572, %v683
        %v685 = vpop.f32.mrb[0].mxu0
        %v686 = vpop.f32.mrb[0].mxu0
        %v687 = vpop.f32.mrb[0].mxu0
        %688 = vdwg.mxu0
        %v690 = vsel %vm510, %v579, 0
        %v693 = vsel %vm510, %v587, 0
        %695 = vmatprep.subr.bf16.mxu0 0
        %696 = vmatpush1.bf16.xpose.msra.mxu0 %v693
        %697 = vmatprep.subr.bf16.mxu0 0
        %698 = vmatpush1.bf16.xpose.msra.mxu0 0
        %699 = vmatprep.subr.bf16.mxu0 0
        %700 = vmatpush1.bf16.xpose.msra.mxu0 0
        %701 = vmatprep.subr.bf16.mxu0 0
        %702 = vmatpush1.bf16.xpose.msra.mxu0 0
        %703 = vmatprep.subr.bf16.mxu0 0
        %704 = vmatpush1.bf16.xpose.msra.mxu0 0
        %705 = vmatprep.subr.bf16.mxu0 0
        %706 = vmatpush1.bf16.xpose.msra.mxu0 0
        %707 = vmatprep.subr.bf16.mxu0 0
        %708 = vmatpush1.bf16.xpose.msra.mxu0 0
        %709 = vmatprep.subr.bf16.mxu0 0
        %710 = vmatpush1.bf16.xpose.msra.mxu0 0
        %711 = vmatprep.subr.bf16.mxu0 0
        %712 = vmatpush1.bf16.xpose.msra.mxu0 0
        %713 = vmatprep.subr.bf16.mxu0 0
        %714 = vmatpush1.bf16.xpose.msra.mxu0 0
        %715 = vmatprep.subr.bf16.mxu0 0
        %716 = vmatpush1.bf16.xpose.msra.mxu0 0
        %717 = vmatprep.subr.bf16.mxu0 0
        %718 = vmatpush1.bf16.xpose.msra.mxu0 0
        %719 = vmatprep.subr.bf16.mxu0 0
        %720 = vmatpush1.bf16.xpose.msra.mxu0 0
        %721 = vmatprep.subr.bf16.mxu0 0
        %722 = vmatpush1.bf16.xpose.msra.mxu0 0
        %723 = vmatprep.subr.bf16.mxu0 0
        %724 = vmatpush1.bf16.xpose.msra.mxu0 0
        %725 = vmatprep.subr.bf16.mxu0 0
        %726 = vmatpush1.bf16.xpose.msra.mxu0 0
        %727 = vmatprep.mubr.bf16.mxu0 0
        %728 = vmatmul.mubr.bf16.gmra.mrb[0].mxu0 %v690
        %v729 = vpop.f32.mrb[0].mxu0
        %v730 = vadd.f32 %v572, %v729
        %v731 = vpop.f32.mrb[0].mxu0
        %v732 = vpop.f32.mrb[0].mxu0
        %v733 = vpop.f32.mrb[0].mxu0
        %734 = vdwg.mxu0
        %v736 = vsel %vm510, %v580, 0
        %v739 = vsel %vm510, %v588, 0
        %741 = vmatprep.subr.bf16.mxu0 0
        %742 = vmatpush1.bf16.xpose.msra.mxu0 %v739
        %743 = vmatprep.subr.bf16.mxu0 0
        %744 = vmatpush1.bf16.xpose.msra.mxu0 0
        %745 = vmatprep.subr.bf16.mxu0 0
        %746 = vmatpush1.bf16.xpose.msra.mxu0 0
        %747 = vmatprep.subr.bf16.mxu0 0
        %748 = vmatpush1.bf16.xpose.msra.mxu0 0
        %749 = vmatprep.subr.bf16.mxu0 0
        %750 = vmatpush1.bf16.xpose.msra.mxu0 0
        %751 = vmatprep.subr.bf16.mxu0 0
        %752 = vmatpush1.bf16.xpose.msra.mxu0 0
        %753 = vmatprep.subr.bf16.mxu0 0
        %754 = vmatpush1.bf16.xpose.msra.mxu0 0
        %755 = vmatprep.subr.bf16.mxu0 0
        %756 = vmatpush1.bf16.xpose.msra.mxu0 0
        %757 = vmatprep.subr.bf16.mxu0 0
        %758 = vmatpush1.bf16.xpose.msra.mxu0 0
        %759 = vmatprep.subr.bf16.mxu0 0
        %760 = vmatpush1.bf16.xpose.msra.mxu0 0
        %761 = vmatprep.subr.bf16.mxu0 0
        %762 = vmatpush1.bf16.xpose.msra.mxu0 0
        %763 = vmatprep.subr.bf16.mxu0 0
        %764 = vmatpush1.bf16.xpose.msra.mxu0 0
        %765 = vmatprep.subr.bf16.mxu0 0
        %766 = vmatpush1.bf16.xpose.msra.mxu0 0
        %767 = vmatprep.subr.bf16.mxu0 0
        %768 = vmatpush1.bf16.xpose.msra.mxu0 0
        %769 = vmatprep.subr.bf16.mxu0 0
        %770 = vmatpush1.bf16.xpose.msra.mxu0 0
        %771 = vmatprep.subr.bf16.mxu0 0
        %772 = vmatpush1.bf16.xpose.msra.mxu0 0
        %773 = vmatprep.mubr.bf16.mxu0 0
        %774 = vmatmul.mubr.bf16.gmra.mrb[0].mxu0 %v736
        %v775 = vpop.f32.mrb[0].mxu0
        %v776 = vadd.f32 %v572, %v775
        %v777 = vpop.f32.mrb[0].mxu0
        %v778 = vpop.f32.mrb[0].mxu0
        %v779 = vpop.f32.mrb[0].mxu0
        %780 = vdwg.mxu0
        %v781 = vsel %vm510, %v638, -inf
        %782 = vmax.xlane.f32.xlu0 %v781
        %v783 = vpop.xlane.xlu0 %782
        %v784 = vsel %vm510, %v684, -inf
        %785 = vmax.xlane.f32.xlu0 %v784
        %v786 = vpop.xlane.xlu0 %785
        %v787 = vsel %vm510, %v730, -inf
        %788 = vmax.xlane.f32.xlu0 %v787
        %v789 = vpop.xlane.xlu0 %788
        %v790 = vsel %vm510, %v776, -inf
        %791 = vmax.xlane.f32.xlu0 %v790
        %v792 = vpop.xlane.xlu0 %791
        %v793 = vsub.f32 %v638, %v783
        %v794 = vsub.f32 %v684, %v786
        %v795 = vsub.f32 %v730, %v789
        %v796 = vsub.f32 %v776, %v792
        %v797 = vmul.f32 %v793, 1.442695
        %v798 = vpow.pop %v797
        %v799 = vmul.f32 %v794, 1.442695
        %v800 = vpow.pop %v799
        %v801 = vmul.f32 %v795, 1.442695
        %v802 = vpow.pop %v801
        %v803 = vmul.f32 %v796, 1.442695
        %v804 = vpow.pop %v803
        %v805 = vsel %vm510, %v798, 0.0
        %806 = vadd.xlane.f32.xlu0 %v805
        %v807 = vpop.xlane.xlu0 %806
        %v808 = vsel %vm510, %v800, 0.0
        %809 = vadd.xlane.f32.xlu0 %v808
        %v810 = vpop.xlane.xlu0 %809
        %v811 = vsel %vm510, %v802, 0.0
        %812 = vadd.xlane.f32.xlu0 %v811
        %v813 = vpop.xlane.xlu0 %812
        %v814 = vsel %vm510, %v804, 0.0
        %815 = vadd.xlane.f32.xlu0 %v814
        %v816 = vpop.xlane.xlu0 %815
        %v817 = vrcp.pop %v807
        %v818 = vrcp.pop %v810
        %v819 = vrcp.pop %v813
        %v820 = vrcp.pop %v816
        %v821 = vmul.f32 %v798, %v817
        %v822 = vmul.f32 %v800, %v818
        %v823 = vmul.f32 %v802, %v819
        %v824 = vmul.f32 %v804, %v820
        %v825 = vpack.c.bf16 %v821, %v821
        %v826 = vpack.c.bf16 %v822, %v822
        %v827 = vpack.c.bf16 %v823, %v823
        %v828 = vpack.c.bf16 %v824, %v824
        %v830 = vsel %vm510, %v825, 0
        %vm832 = vcmask 1043456
        %v834 = vsel %vm832, %v593, 0
        %836 = vmatprep.subr.bf16.mxu0 0
        %837 = vmatpush1.bf16.msra.mxu0 %v834
        %838 = vmatprep.subr.bf16.mxu0 0
        %839 = vmatpush1.bf16.msra.mxu0 0
        %840 = vmatprep.subr.bf16.mxu0 0
        %841 = vmatpush1.bf16.msra.mxu0 0
        %842 = vmatprep.subr.bf16.mxu0 0
        %843 = vmatpush1.bf16.msra.mxu0 0
        %844 = vmatprep.subr.bf16.mxu0 0
        %845 = vmatpush1.bf16.msra.mxu0 0
        %846 = vmatprep.subr.bf16.mxu0 0
        %847 = vmatpush1.bf16.msra.mxu0 0
        %848 = vmatprep.subr.bf16.mxu0 0
        %849 = vmatpush1.bf16.msra.mxu0 0
        %850 = vmatprep.subr.bf16.mxu0 0
        %851 = vmatpush1.bf16.msra.mxu0 0
        %852 = vmatprep.subr.bf16.mxu0 0
        %853 = vmatpush1.bf16.msra.mxu0 0
        %854 = vmatprep.subr.bf16.mxu0 0
        %855 = vmatpush1.bf16.msra.mxu0 0
        %856 = vmatprep.subr.bf16.mxu0 0
        %857 = vmatpush1.bf16.msra.mxu0 0
        %858 = vmatprep.subr.bf16.mxu0 0
        %859 = vmatpush1.bf16.msra.mxu0 0
        %860 = vmatprep.subr.bf16.mxu0 0
        %861 = vmatpush1.bf16.msra.mxu0 0
        %862 = vmatprep.subr.bf16.mxu0 0
        %863 = vmatpush1.bf16.msra.mxu0 0
        %864 = vmatprep.subr.bf16.mxu0 0
        %865 = vmatpush1.bf16.msra.mxu0 0
        %866 = vmatprep.subr.bf16.mxu0 0
        %867 = vmatpush1.bf16.msra.mxu0 0
        %868 = vmatprep.mubr.bf16.mxu0 0
        %869 = vmatmul.mubr.bf16.gmra.mrb[0].mxu0 %v830
        %v870 = vpop.f32.mrb[0].mxu0
        %v871 = vadd.f32 0.0, %v870
        %v872 = vpop.f32.mrb[0].mxu0
        %v873 = vpop.f32.mrb[0].mxu0
        %v874 = vpop.f32.mrb[0].mxu0
        %875 = vdwg.mxu0
        %v877 = vsel %vm510, %v826, 0
        %v880 = vsel %vm832, %v594, 0
        %882 = vmatprep.subr.bf16.mxu0 0
        %883 = vmatpush1.bf16.msra.mxu0 %v880
        %884 = vmatprep.subr.bf16.mxu0 0
        %885 = vmatpush1.bf16.msra.mxu0 0
        %886 = vmatprep.subr.bf16.mxu0 0
        %887 = vmatpush1.bf16.msra.mxu0 0
        %888 = vmatprep.subr.bf16.mxu0 0
        %889 = vmatpush1.bf16.msra.mxu0 0
        %890 = vmatprep.subr.bf16.mxu0 0
        %891 = vmatpush1.bf16.msra.mxu0 0
        %892 = vmatprep.subr.bf16.mxu0 0
        %893 = vmatpush1.bf16.msra.mxu0 0
        %894 = vmatprep.subr.bf16.mxu0 0
        %895 = vmatpush1.bf16.msra.mxu0 0
        %896 = vmatprep.subr.bf16.mxu0 0
        %897 = vmatpush1.bf16.msra.mxu0 0
        %898 = vmatprep.subr.bf16.mxu0 0
        %899 = vmatpush1.bf16.msra.mxu0 0
        %900 = vmatprep.subr.bf16.mxu0 0
        %901 = vmatpush1.bf16.msra.mxu0 0
        %902 = vmatprep.subr.bf16.mxu0 0
        %903 = vmatpush1.bf16.msra.mxu0 0
        %904 = vmatprep.subr.bf16.mxu0 0
        %905 = vmatpush1.bf16.msra.mxu0 0
        %906 = vmatprep.subr.bf16.mxu0 0
        %907 = vmatpush1.bf16.msra.mxu0 0
        %908 = vmatprep.subr.bf16.mxu0 0
        %909 = vmatpush1.bf16.msra.mxu0 0
        %910 = vmatprep.subr.bf16.mxu0 0
        %911 = vmatpush1.bf16.msra.mxu0 0
        %912 = vmatprep.subr.bf16.mxu0 0
        %913 = vmatpush1.bf16.msra.mxu0 0
        %914 = vmatprep.mubr.bf16.mxu0 0
        %915 = vmatmul.mubr.bf16.gmra.mrb[0].mxu0 %v877
        %v916 = vpop.f32.mrb[0].mxu0
        %v917 = vadd.f32 0.0, %v916
        %v918 = vpop.f32.mrb[0].mxu0
        %v919 = vpop.f32.mrb[0].mxu0
        %v920 = vpop.f32.mrb[0].mxu0
        %921 = vdwg.mxu0
        %v923 = vsel %vm510, %v827, 0
        %v926 = vsel %vm832, %v595, 0
        %928 = vmatprep.subr.bf16.mxu0 0
        %929 = vmatpush1.bf16.msra.mxu0 %v926
        %930 = vmatprep.subr.bf16.mxu0 0
        %931 = vmatpush1.bf16.msra.mxu0 0
        %932 = vmatprep.subr.bf16.mxu0 0
        %933 = vmatpush1.bf16.msra.mxu0 0
        %934 = vmatprep.subr.bf16.mxu0 0
        %935 = vmatpush1.bf16.msra.mxu0 0
        %936 = vmatprep.subr.bf16.mxu0 0
        %937 = vmatpush1.bf16.msra.mxu0 0
        %938 = vmatprep.subr.bf16.mxu0 0
        %939 = vmatpush1.bf16.msra.mxu0 0
        %940 = vmatprep.subr.bf16.mxu0 0
        %941 = vmatpush1.bf16.msra.mxu0 0
        %942 = vmatprep.subr.bf16.mxu0 0
        %943 = vmatpush1.bf16.msra.mxu0 0
        %944 = vmatprep.subr.bf16.mxu0 0
        %945 = vmatpush1.bf16.msra.mxu0 0
        %946 = vmatprep.subr.bf16.mxu0 0
        %947 = vmatpush1.bf16.msra.mxu0 0
        %948 = vmatprep.subr.bf16.mxu0 0
        %949 = vmatpush1.bf16.msra.mxu0 0
        %950 = vmatprep.subr.bf16.mxu0 0
        %951 = vmatpush1.bf16.msra.mxu0 0
        %952 = vmatprep.subr.bf16.mxu0 0
        %953 = vmatpush1.bf16.msra.mxu0 0
        %954 = vmatprep.subr.bf16.mxu0 0
        %955 = vmatpush1.bf16.msra.mxu0 0
        %956 = vmatprep.subr.bf16.mxu0 0
        %957 = vmatpush1.bf16.msra.mxu0 0
        %958 = vmatprep.subr.bf16.mxu0 0
        %959 = vmatpush1.bf16.msra.mxu0 0
        %960 = vmatprep.mubr.bf16.mxu0 0
        %961 = vmatmul.mubr.bf16.gmra.mrb[0].mxu0 %v923
        %v962 = vpop.f32.mrb[0].mxu0
        %v963 = vadd.f32 0.0, %v962
        %v964 = vpop.f32.mrb[0].mxu0
        %v965 = vpop.f32.mrb[0].mxu0
        %v966 = vpop.f32.mrb[0].mxu0
        %967 = vdwg.mxu0
        %v969 = vsel %vm510, %v828, 0
        %v972 = vsel %vm832, %v596, 0
        %974 = vmatprep.subr.bf16.mxu0 0
        %975 = vmatpush1.bf16.msra.mxu0 %v972
        %976 = vmatprep.subr.bf16.mxu0 0
        %977 = vmatpush1.bf16.msra.mxu0 0
        %978 = vmatprep.subr.bf16.mxu0 0
        %979 = vmatpush1.bf16.msra.mxu0 0
        %980 = vmatprep.subr.bf16.mxu0 0
        %981 = vmatpush1.bf16.msra.mxu0 0
        %982 = vmatprep.subr.bf16.mxu0 0
        %983 = vmatpush1.bf16.msra.mxu0 0
        %984 = vmatprep.subr.bf16.mxu0 0
        %985 = vmatpush1.bf16.msra.mxu0 0
        %986 = vmatprep.subr.bf16.mxu0 0
        %987 = vmatpush1.bf16.msra.mxu0 0
        %988 = vmatprep.subr.bf16.mxu0 0
        %989 = vmatpush1.bf16.msra.mxu0 0
        %990 = vmatprep.subr.bf16.mxu0 0
        %991 = vmatpush1.bf16.msra.mxu0 0
        %992 = vmatprep.subr.bf16.mxu0 0
        %993 = vmatpush1.bf16.msra.mxu0 0
        %994 = vmatprep.subr.bf16.mxu0 0
        %995 = vmatpush1.bf16.msra.mxu0 0
        %996 = vmatprep.subr.bf16.mxu0 0
        %997 = vmatpush1.bf16.msra.mxu0 0
        %998 = vmatprep.subr.bf16.mxu0 0
        %999 = vmatpush1.bf16.msra.mxu0 0
        %1000 = vmatprep.subr.bf16.mxu0 0
        %1001 = vmatpush1.bf16.msra.mxu0 0
        %1002 = vmatprep.subr.bf16.mxu0 0
        %1003 = vmatpush1.bf16.msra.mxu0 0
        %1004 = vmatprep.subr.bf16.mxu0 0
        %1005 = vmatpush1.bf16.msra.mxu0 0
        %1006 = vmatprep.mubr.bf16.mxu0 0
        %1007 = vmatmul.mubr.bf16.gmra.mrb[0].mxu0 %v969
        %v1008 = vpop.f32.mrb[0].mxu0
        %v1009 = vadd.f32 0.0, %v1008
        %v1010 = vpop.f32.mrb[0].mxu0
        %v1011 = vpop.f32.mrb[0].mxu0
        %v1012 = vpop.f32.mrb[0].mxu0
        %1013 = vdwg.mxu0
        %1014 = vst.msk [vmem:[#allocation5] sm:$0xff] %vm510, %v871
        %1016 = vrot.lane.b32.xlu0 %v917, 8
        %v1017 = vpop.permute.xlu0 %1016
        %vm1019 = vcmask 130112
        %1020 = vst.msk [vmem:[#allocation5] sm:$0xff] %vm1019, %v1017
        %1022 = vrot.lane.b32.xlu0 %v963, 16
        %v1023 = vpop.permute.xlu0 %1022
        %vm1025 = vcmask 195712
        %1026 = vst.msk [vmem:[#allocation5] sm:$0xff] %vm1025, %v1023
        %1028 = vrot.lane.b32.xlu0 %v1009, 24
        %v1029 = vpop.permute.xlu0 %1028
        %vm1031 = vcmask 261312
        %1032 = vst.msk [vmem:[#allocation5] sm:$0xff] %vm1031, %v1029
        %v1033 = vld [vmem:[#allocation5] sm:$0xff]
        %v1034 = vpack.c.bf16 %v1033, %v1033
        %v1035 = vld [vmem:[%s2] sm:$0xf]
        %v1036 = vld [vmem:[%s2 + $0x4] sm:$0xf]
        %v1037 = vld [vmem:[%s2 + $0x8] sm:$0xf]
        %v1038 = vld [vmem:[%s2 + $0xc] sm:$0xf]
        %v1039 = vld [vmem:[%s3] sm:$0x1]
        %v1041 = vlaneseq
        %v1042 = vshrl.u32 %v1041, 7
        %v1043 = vsub.s32 0, %v1042
        %v1044 = vrot.slane %v1039, %v1043
        %v1050 = vunpack.c.l.b16 %v1035
        %v1051 = vunpack.c.l.b16 %v1036
        %v1052 = vunpack.c.l.b16 %v1037
        %v1053 = vunpack.c.l.b16 %v1038
        %v1054 = vpack.c.b16 %v1051, %v1050
        %v1055 = vpack.c.b16 %v1053, %v1052
        %v1059 = vsel %vm413, %v1034, 0
        %1061 = vmatprep.subr.bf16.mxu0 0
        %1062 = vmatpush1.bf16.msra.mxu0 %v1054
        %1063 = vmatprep.subr.bf16.mxu0 0
        %1064 = vmatpush1.bf16.msra.mxu0 %v1055
        %1065 = vmatprep.subr.bf16.mxu0 0
        %1066 = vmatpush1.bf16.msra.mxu0 0
        %1067 = vmatprep.subr.bf16.mxu0 0
        %1068 = vmatpush1.bf16.msra.mxu0 0
        %1069 = vmatprep.subr.bf16.mxu0 0
        %1070 = vmatpush1.bf16.msra.mxu0 0
        %1071 = vmatprep.subr.bf16.mxu0 0
        %1072 = vmatpush1.bf16.msra.mxu0 0
        %1073 = vmatprep.subr.bf16.mxu0 0
        %1074 = vmatpush1.bf16.msra.mxu0 0
        %1075 = vmatprep.subr.bf16.mxu0 0
        %1076 = vmatpush1.bf16.msra.mxu0 0
        %1077 = vmatprep.subr.bf16.mxu0 0
        %1078 = vmatpush1.bf16.msra.mxu0 0
        %1079 = vmatprep.subr.bf16.mxu0 0
        %1080 = vmatpush1.bf16.msra.mxu0 0
        %1081 = vmatprep.subr.bf16.mxu0 0
        %1082 = vmatpush1.bf16.msra.mxu0 0
        %1083 = vmatprep.subr.bf16.mxu0 0
        %1084 = vmatpush1.bf16.msra.mxu0 0
        %1085 = vmatprep.subr.bf16.mxu0 0
        %1086 = vmatpush1.bf16.msra.mxu0 0
        %1087 = vmatprep.subr.bf16.mxu0 0
        %1088 = vmatpush1.bf16.msra.mxu0 0
        %1089 = vmatprep.subr.bf16.mxu0 0
        %1090 = vmatpush1.bf16.msra.mxu0 0
        %1091 = vmatprep.subr.bf16.mxu0 0
        %1092 = vmatpush1.bf16.msra.mxu0 0
        %1093 = vmatprep.mubr.bf16.mxu0 0
        %1094 = vmatmul.mubr.bf16.gmra.mrb[0].mxu0 %v1059
        %v1095 = vpop.f32.mrb[0].mxu0
        %v1096 = vadd.f32 %v1044, %v1095
        %v1097 = vpop.f32.mrb[0].mxu0
        %v1098 = vpop.f32.mrb[0].mxu0
        %v1099 = vpop.f32.mrb[0].mxu0
        %1100 = vdwg.mxu0
        %v1101 = vadd.f32 %v410, %v1096
        %v1102 = vld [vmem:[%s6] sm:$0x1]
        %v1103 = vld [vmem:[%s7] sm:$0x1]
        %v1104 = vsel %vm413, %v1101, 0.0
        %1105 = vadd.xlane.f32.xlu0 %v1104
        %v1106 = vpop.xlane.xlu0 %1105
        %v1107 = vmul.f32 %v1106, %v417
        %v1108 = vsub.f32 %v1101, %v1107
        %v1109 = vmul.f32 %v1108, %v1108
        %v1110 = vsel %vm413, %v1109, 0.0
        %1111 = vadd.xlane.f32.xlu0 %v1110
        %v1112 = vpop.xlane.xlu0 %1111
        %v1113 = vmul.f32 %v1112, %v417
        %v1114 = vrsqrt.pop %v1113
        %v1115 = vmul.f32 %v1113, %v1114
        %vm1116 = vcmp.eq.f32.partialorder %v1113, inf
        %v1117 = vsel %vm1116, %v1113, %v1115
        %vm1118 = vcmp.eq.f32.partialorder %v1113, 0.0
        %v1119 = vand.u32 %v1113, 2147483648
        %v1120 = vsel %vm1118, %v1119, %v1117
        %v1121 = vadd.f32 %v1120, 1e-05
        %v1122 = vrcp.pop %v1121
        %v1123 = vmul.f32 %v1108, %v1122
        %v1125 = vlaneseq
        %v1126 = vshrl.u32 %v1125, 7
        %v1127 = vsub.s32 0, %v1126
        %v1128 = vrot.slane %v1102, %v1127
        %v1130 = vmul.f32 %v1128, %v1123
        %v1132 = vlaneseq
        %v1133 = vshrl.u32 %v1132, 7
        %v1134 = vsub.s32 0, %v1133
        %v1135 = vrot.slane %v1103, %v1134
        %v1137 = vadd.f32 %v1130, %v1135
        %v1138 = vpack.c.bf16 %v1137, %v1137
        %v1139 = vld [vmem:[%s8] sm:$0xf]
        %v1140 = vld [vmem:[%s8 + $0x4] sm:$0xf]
        %v1141 = vld [vmem:[%s8 + $0x8] sm:$0xf]
        %v1142 = vld [vmem:[%s8 + $0xc] sm:$0xf]
        %v1143 = vld [vmem:[%s9] sm:$0x1]
        %v1145 = vlaneseq
        %v1146 = vshrl.u32 %v1145, 7
        %v1147 = vsub.s32 0, %v1146
        %v1148 = vrot.slane %v1143, %v1147
        %v1154 = vunpack.c.l.b16 %v1139
        %v1155 = vunpack.c.l.b16 %v1140
        %v1156 = vunpack.c.l.b16 %v1141
        %v1157 = vunpack.c.l.b16 %v1142
        %v1158 = vpack.c.b16 %v1155, %v1154
        %v1159 = vpack.c.b16 %v1157, %v1156
        %v1163 = vsel %vm413, %v1138, 0
        %1165 = vmatprep.subr.bf16.mxu0 0
        %1166 = vmatpush1.bf16.msra.mxu0 %v1158
        %1167 = vmatprep.subr.bf16.mxu0 0
        %1168 = vmatpush1.bf16.msra.mxu0 %v1159
        %1169 = vmatprep.subr.bf16.mxu0 0
        %1170 = vmatpush1.bf16.msra.mxu0 0
        %1171 = vmatprep.subr.bf16.mxu0 0
        %1172 = vmatpush1.bf16.msra.mxu0 0
        %1173 = vmatprep.subr.bf16.mxu0 0
        %1174 = vmatpush1.bf16.msra.mxu0 0
        %1175 = vmatprep.subr.bf16.mxu0 0
        %1176 = vmatpush1.bf16.msra.mxu0 0
        %1177 = vmatprep.subr.bf16.mxu0 0
        %1178 = vmatpush1.bf16.msra.mxu0 0
        %1179 = vmatprep.subr.bf16.mxu0 0
        %1180 = vmatpush1.bf16.msra.mxu0 0
        %1181 = vmatprep.subr.bf16.mxu0 0
        %1182 = vmatpush1.bf16.msra.mxu0 0
        %1183 = vmatprep.subr.bf16.mxu0 0
        %1184 = vmatpush1.bf16.msra.mxu0 0
        %1185 = vmatprep.subr.bf16.mxu0 0
        %1186 = vmatpush1.bf16.msra.mxu0 0
        %1187 = vmatprep.subr.bf16.mxu0 0
        %1188 = vmatpush1.bf16.msra.mxu0 0
        %1189 = vmatprep.subr.bf16.mxu0 0
        %1190 = vmatpush1.bf16.msra.mxu0 0
        %1191 = vmatprep.subr.bf16.mxu0 0
        %1192 = vmatpush1.bf16.msra.mxu0 0
        %1193 = vmatprep.subr.bf16.mxu0 0
        %1194 = vmatpush1.bf16.msra.mxu0 0
        %1195 = vmatprep.subr.bf16.mxu0 0
        %1196 = vmatpush1.bf16.msra.mxu0 0
        %1197 = vmatprep.mubr.bf16.mxu0 0
        %1198 = vmatmul.mubr.bf16.gmra.mrb[0].mxu0 %v1163
        %v1199 = vpop.f32.mrb[0].mxu0
        %v1200 = vadd.f32 %v1148, %v1199
        %v1201 = vpop.f32.mrb[0].mxu0
        %v1202 = vpop.f32.mrb[0].mxu0
        %v1203 = vpop.f32.mrb[0].mxu0
        %1204 = vdwg.mxu0
        %v1205 = vmul.f32 %v1200, 0.5
        %v1206 = vmul.f32 %v1200, 0.044715
        %v1207 = vmul.f32 %v1206, %v1200
        %v1208 = vmul.f32 %v1207, %v1200
        %v1209 = vadd.f32 %v1200, %v1208
        %v1210 = vmul.f32 %v1209, 0.7978846
        %v1211 = vtanh.pop %v1210
        %v1212 = vadd.f32 %v1211, 1.0
        %v1213 = vmul.f32 %v1205, %v1212
        %v1214 = vpack.c.bf16 %v1213, %v1213
        %v1215 = vld [vmem:[%s10] sm:$0xf]
        %v1216 = vld [vmem:[%s10 + $0x4] sm:$0xf]
        %v1217 = vld [vmem:[%s10 + $0x8] sm:$0xf]
        %v1218 = vld [vmem:[%s10 + $0xc] sm:$0xf]
        %v1219 = vld [vmem:[%s10 + $0x10] sm:$0xf]
        %v1220 = vld [vmem:[%s10 + $0x14] sm:$0xf]
        %v1221 = vld [vmem:[%s10 + $0x18] sm:$0xf]
        %v1222 = vld [vmem:[%s10 + $0x1c] sm:$0xf]
        %v1223 = vld [vmem:[%s10 + $0x20] sm:$0xf]
        %v1224 = vld [vmem:[%s10 + $0x24] sm:$0xf]
        %v1225 = vld [vmem:[%s10 + $0x28] sm:$0xf]
        %v1226 = vld [vmem:[%s10 + $0x2c] sm:$0xf]
        %v1227 = vld [vmem:[%s10 + $0x30] sm:$0xf]
        %v1228 = vld [vmem:[%s10 + $0x34] sm:$0xf]
        %v1229 = vld [vmem:[%s10 + $0x38] sm:$0xf]
        %v1230 = vld [vmem:[%s10 + $0x3c] sm:$0xf]
        %v1231 = vld [vmem:[%s11] sm:$0x1]
        %v1233 = vlaneseq
        %v1234 = vshrl.u32 %v1233, 7
        %v1235 = vsub.s32 0, %v1234
        %v1236 = vrot.slane %v1231, %v1235
        %v1254 = vunpack.c.l.b16 %v1215
        %v1255 = vunpack.c.l.b16 %v1216
        %v1256 = vunpack.c.l.b16 %v1217
        %v1257 = vunpack.c.l.b16 %v1218
        %v1258 = vunpack.c.l.b16 %v1219
        %v1259 = vunpack.c.l.b16 %v1220
        %v1260 = vunpack.c.l.b16 %v1221
        %v1261 = vunpack.c.l.b16 %v1222
        %v1262 = vunpack.c.l.b16 %v1223
        %v1263 = vunpack.c.l.b16 %v1224
        %v1264 = vunpack.c.l.b16 %v1225
        %v1265 = vunpack.c.l.b16 %v1226
        %v1266 = vunpack.c.l.b16 %v1227
        %v1267 = vunpack.c.l.b16 %v1228
        %v1268 = vunpack.c.l.b16 %v1229
        %v1269 = vunpack.c.l.b16 %v1230
        %v1270 = vpack.c.b16 %v1255, %v1254
        %v1271 = vpack.c.b16 %v1257, %v1256
        %v1272 = vpack.c.b16 %v1259, %v1258
        %v1273 = vpack.c.b16 %v1261, %v1260
        %v1274 = vpack.c.b16 %v1263, %v1262
        %v1275 = vpack.c.b16 %v1265, %v1264
        %v1276 = vpack.c.b16 %v1267, %v1266
        %v1277 = vpack.c.b16 %v1269, %v1268
        %1286 = vmatprep.subr.bf16.mxu0 0
        %1287 = vmatpush1.bf16.msra.mxu0 %v1270
        %1288 = vmatprep.subr.bf16.mxu0 0
        %1289 = vmatpush1.bf16.msra.mxu0 %v1271
        %1290 = vmatprep.subr.bf16.mxu0 0
        %1291 = vmatpush1.bf16.msra.mxu0 %v1272
        %1292 = vmatprep.subr.bf16.mxu0 0
        %1293 = vmatpush1.bf16.msra.mxu0 %v1273
        %1294 = vmatprep.subr.bf16.mxu0 0
        %1295 = vmatpush1.bf16.msra.mxu0 %v1274
        %1296 = vmatprep.subr.bf16.mxu0 0
        %1297 = vmatpush1.bf16.msra.mxu0 %v1275
        %1298 = vmatprep.subr.bf16.mxu0 0
        %1299 = vmatpush1.bf16.msra.mxu0 %v1276
        %1300 = vmatprep.subr.bf16.mxu0 0
        %1301 = vmatpush1.bf16.msra.mxu0 %v1277
        %1302 = vmatprep.subr.bf16.mxu0 0
        %1303 = vmatpush1.bf16.msra.mxu0 0
        %1304 = vmatprep.subr.bf16.mxu0 0
        %1305 = vmatpush1.bf16.msra.mxu0 0
        %1306 = vmatprep.subr.bf16.mxu0 0
        %1307 = vmatpush1.bf16.msra.mxu0 0
        %1308 = vmatprep.subr.bf16.mxu0 0
        %1309 = vmatpush1.bf16.msra.mxu0 0
        %1310 = vmatprep.subr.bf16.mxu0 0
        %1311 = vmatpush1.bf16.msra.mxu0 0
        %1312 = vmatprep.subr.bf16.mxu0 0
        %1313 = vmatpush1.bf16.msra.mxu0 0
        %1314 = vmatprep.subr.bf16.mxu0 0
        %1315 = vmatpush1.bf16.msra.mxu0 0
        %1316 = vmatprep.subr.bf16.mxu0 0
        %1317 = vmatpush1.bf16.msra.mxu0 0
        %1318 = vmatprep.mubr.bf16.mxu0 0
        %1319 = vmatmul.mubr.bf16.gmra.mrb[0].mxu0 %v1214
        %v1320 = vpop.f32.mrb[0].mxu0
        %v1321 = vadd.f32 %v1236, %v1320
        %v1322 = vpop.f32.mrb[0].mxu0
        %v1323 = vpop.f32.mrb[0].mxu0
        %v1324 = vpop.f32.mrb[0].mxu0
        %1325 = vdwg.mxu0
        %v1326 = vadd.f32 %v1101, %v1321
        %1327 = vst.msk [vmem:[%s404] sm:$0xff] %vm413, %v1326
        %s1328 = sand.u32 %s291, 1
        %s1329 = scalar_lea.sflag [#allocation7], %s1328
        %s1330 = sand.u32 %s291, 1
        %s1331 = smul.addr %s1330, 8
        %s1332 = scalar_lea.vmem [#allocation6], %s1331
        // Predicated region
        $region69: #{tpu_custom_call.1} parent=67 // pred_check
          %p1333 = pneg %p301
        $region70: #{tpu_custom_call.1} parent=67 // pred_check_branch
          %1335 = sbr.rel (%p1333) target = $region72
        $region71: #{tpu_custom_call.1} parent=67 // pred_region
          %s1337 = ssub.s32 128, 128
          %1338 = vsyncadd %s1329, %s1337
          %s1339 = smul.addr %s26, 128
          %s1340 = scalar_lea.hbm %s12, %s1339
          %s1342 = sshll.u32 %s1332, 4
          %s1343 = int_to_ptr.vmem [resolvable:$true] %s1342
          %1345 = dma.vmem_to_hbm [thread:$0]  %s1343, 128, %s1340, %s1329
        $region72: #{tpu_custom_call.1} parent=67 // pred_fallthru
          _
      $region68: #{tpu_custom_call.1} parent=5 // pred_fallthru
        _
      %p1346 = scmp.le.s32.totalorder 2, %s21
      // Predicated region
      $region73: #{tpu_custom_call.1} parent=5 // pred_check
        %p1347 = pneg %p1346
      $region74: #{tpu_custom_call.1} parent=5 // pred_check_branch
        %1349 = sbr.rel (%p1347) target = $region76
      $region75: #{tpu_custom_call.1} parent=5 // pred_region
        %s1350 = ssub.s32 %s21, 2
        // Predicated region
        $region77: #{tpu_custom_call.1} parent=75 // pred_check
          %p1351 = pneg %p307
        $region78: #{tpu_custom_call.1} parent=75 // pred_check_branch
          %1353 = sbr.rel (%p1351) target = $region80
        $region79: #{tpu_custom_call.1} parent=75 // pred_region
          %s1354 = sand.u32 %s292, 1
          %s1355 = scalar_lea.sflag [#allocation7], %s1354
          %s1356 = sand.u32 %s292, 1
          %s1357 = smul.addr %s1356, 8
          %s1358 = scalar_lea.vmem [#allocation6], %s1357
          %1359 = dma.done %s1355, 128
        $region80: #{tpu_custom_call.1} parent=75 // pred_fallthru
          _
      $region76: #{tpu_custom_call.1} parent=5 // pred_fallthru
        _
    $region6: #{tpu_custom_call.1} parent=1 // loop_footer
      %s25 = sadd.s32 1, %s21
    $region7: #{tpu_custom_call.1} parent=1 // loop_footer_branch
      %20 = sbr.rel target = $region3
    $region8: #{tpu_custom_call.1} parent=1 // loop_exit
      _
    %1360 = vsyncpa [#allocation7], 1
    %s1361 = scalar_lea.sflag [#allocation7], 1
    %1362 = vsyncpa %s1361, 1

// kernel: tpu_custom_call.1
$region0: #{tpu_custom_call.1}
  #allocation0 [shape = 'u32[]', space=smem, size = 0x4, offset = 0x4, fixed_abs, tag = 'smem constant byte address 0x4 - core index']
  #allocation1 [shape = 'u32[144,128]{1,0:T(1,128)}', space=vmem, size = 0x12000, scoped, tag = 'internal scratch']
  #allocation2 [shape = 'f32[4,8,8]{2,1,0:T(8,128)}', space=vmem, size = 0x4000, scoped, tag = 'scratch operand']
  #allocation3 [shape = 'f32[4,8,8]{2,1,0:T(8,128)}', space=vmem, size = 0x4000, scoped, tag = 'scratch operand']
  #allocation4 [shape = 'f32[4,8,8]{2,1,0:T(8,128)}', space=vmem, size = 0x4000, scoped, tag = 'scratch operand']
  #allocation5 [shape = 'f32[8,32]{1,0:T(8,128)}', space=vmem, size = 0x1000, scoped, tag = 'scratch operand']
  %s0 = inlined_call_operand.vmem [shape: f32[2,8,32], index: 0, kind: input, shape index: {}]
  %s1 = inlined_call_operand.vmem [shape: bf16[32,96], index: 1, kind: input, shape index: {}]
  %s2 = inlined_call_operand.vmem [shape: bf16[32,32], index: 2, kind: input, shape index: {}]
  %s3 = inlined_call_operand.vmem [shape: f32[1,32], index: 3, kind: input, shape index: {}]
  %s4 = inlined_call_operand.vmem [shape: f32[1,32], index: 4, kind: input, shape index: {}]
  %s5 = inlined_call_operand.vmem [shape: f32[1,32], index: 5, kind: input, shape index: {}]
  %s6 = inlined_call_operand.vmem [shape: f32[1,32], index: 6, kind: input, shape index: {}]
  %s7 = inlined_call_operand.vmem [shape: f32[1,32], index: 7, kind: input, shape index: {}]
  %s8 = inlined_call_operand.vmem [shape: bf16[32,128], index: 8, kind: input, shape index: {}]
  %s9 = inlined_call_operand.vmem [shape: f32[1,128], index: 9, kind: input, shape index: {}]
  %s10 = inlined_call_operand.vmem [shape: bf16[128,32], index: 10, kind: input, shape index: {}]
  %s11 = inlined_call_operand.vmem [shape: f32[1,32], index: 11, kind: input, shape index: {}]
  %s12 = inlined_call_operand.hbm [shape: f32[2,8,32], index: 12, kind: output, shape index: {}]
  %s13 = sld [smem:[#allocation0]]
  $region81: #{tpu_custom_call.1} parent=0
    _
  %s15 = ssub.s32 1, %s13
  %s16 = scalar_select 0, %s15, %s13
  $region1: #{tpu_custom_call.1} parent=0
    #allocation6 [shape = 'u8[8192]{0}', space=vmem, size = 0x2000, scoped, tag = 'output window, operand 0']
    #allocation7 [shape = 's32[2]{0}', space=sflag, size = 0x8, scoped, tag = 'scoped memory for tpu_custom_call.1']
    %17 = vsyncpa [#allocation7], 0
    %s18 = scalar_lea.sflag [#allocation7], 1
    %19 = vsyncpa %s18, 0
    loop: start=0, step=1, limit=4
    $region2: #{tpu_custom_call.1} parent=1 // loop_pre_header
      _
    $region3: #{tpu_custom_call.1} parent=1 // loop_header
      %s21 = sphi 0, %s25
      %p22 = scmp.ge.s32.totalorder %s21, 4
      %s31 = sphi 0, %s33
      %s34 = sphi 0, %s31
      %s35 = sphi 0, %s34
      %s51 = sphi 0, %s35
      %s55 = sphi 0, %s55
      %s57 = sphi 0, %s55
      %s58 = sphi 0, %s57
      %s72 = sphi 0, %s58
      %s76 = sphi 0, %s76
      %s78 = sphi 0, %s76
      %s79 = sphi 0, %s78
      %s93 = sphi 0, %s79
      %s97 = sphi 0, %s97
      %s99 = sphi 0, %s97
      %s100 = sphi 0, %s99
      %s114 = sphi 0, %s100
      %s118 = sphi 0, %s118
      %s120 = sphi 0, %s118
      %s121 = sphi 0, %s120
      %s135 = sphi 0, %s121
      %s139 = sphi 0, %s139
      %s141 = sphi 0, %s139
      %s142 = sphi 0, %s141
      %s156 = sphi 0, %s142
      %s160 = sphi 0, %s160
      %s162 = sphi 0, %s160
      %s163 = sphi 0, %s162
      %s177 = sphi 0, %s163
      %s181 = sphi 0, %s181
      %s183 = sphi 0, %s181
      %s184 = sphi 0, %s183
      %s198 = sphi 0, %s184
      %s202 = sphi 0, %s202
      %s204 = sphi 0, %s202
      %s205 = sphi 0, %s204
      %s219 = sphi 0, %s205
      %s223 = sphi 0, %s223
      %s225 = sphi 0, %s223
      %s226 = sphi 0, %s225
      %s240 = sphi 0, %s226
      %s244 = sphi 0, %s244
      %s246 = sphi 0, %s244
      %s247 = sphi 0, %s246
      %s261 = sphi 0, %s247
      %s265 = sphi 0, %s265
      %s267 = sphi 0, %s265
      %s268 = sphi 0, %s267
      %s282 = sphi 0, %s268
      %s288 = sphi 0, %s290
      %s291 = sphi 0, %s288
      %s292 = sphi 0, %s291
      %s308 = sphi 0, %s292
    $region4: #{tpu_custom_call.1} parent=1 // loop_header_branch
      %24 = sbr.rel (%p22) target = $region8
    $region5: #{tpu_custom_call.1} parent=1 // loop_body
      %s26 = ssub.s32 %s21, 1
      %s27 = ssub.s32 %s21, 2
      %s28 = sadd.s32 %s21, 1
      %s29 = ssub.s32 %s21, %s28
      %p30 = scmp.eq.s32.totalorder %s29, 0
      %s32 = sadd.s32 %s31, 1
      %s33 = scalar_select %p30, %s31, %s32
      %p36 = pneg %p30
      %p37 = scmp.eq.s32.totalorder %s21, 1
      %p38 = por %p36, %p37
      %p39 = scmp.ne.s32.totalorder %s31, %s34
      %p40 = scmp.eq.s32.totalorder %s21, 0
      %p41 = por %p39, %p40
      %p42 = scmp.ne.s32.totalorder %s31, %s34
      %p43 = scmp.eq.s32.totalorder %s26, 1
      %p44 = por %p42, %p43
      %p45 = scmp.ne.s32.totalorder %s34, %s35
      %p46 = scmp.eq.s32.totalorder %s26, 0
      %p47 = por %p45, %p46
      %p48 = scmp.ne.s32.totalorder %s34, %s35
      %p49 = scmp.eq.s32.totalorder %s27, 1
      %p50 = por %p48, %p49
      %p52 = scmp.ne.s32.totalorder %s35, %s51
      %p53 = scmp.eq.s32.totalorder %s27, 0
      %p54 = por %p52, %p53
      %s56 = sadd.s32 %s55, 1
      %p59 = scmp.eq.s32.totalorder %s21, 1
      %p60 = scmp.ne.s32.totalorder %s55, %s57
      %p61 = scmp.eq.s32.totalorder %s21, 0
      %p62 = por %p60, %p61
      %p63 = scmp.ne.s32.totalorder %s55, %s57
      %p64 = scmp.eq.s32.totalorder %s26, 1
      %p65 = por %p63, %p64
      %p66 = scmp.ne.s32.totalorder %s57, %s58
      %p67 = scmp.eq.s32.totalorder %s26, 0
      %p68 = por %p66, %p67
      %p69 = scmp.ne.s32.totalorder %s57, %s58
      %p70 = scmp.eq.s32.totalorder %s27, 1
      %p71 = por %p69, %p70
      %p73 = scmp.ne.s32.totalorder %s58, %s72
      %p74 = scmp.eq.s32.totalorder %s27, 0
      %p75 = por %p73, %p74
      %s77 = sadd.s32 %s76, 1
      %p80 = scmp.eq.s32.totalorder %s21, 1
      %p81 = scmp.ne.s32.totalorder %s76, %s78
      %p82 = scmp.eq.s32.totalorder %s21, 0
      %p83 = por %p81, %p82
      %p84 = scmp.ne.s32.totalorder %s76, %s78
      %p85 = scmp.eq.s32.totalorder %s26, 1
      %p86 = por %p84, %p85
      %p87 = scmp.ne.s32.totalorder %s78, %s79
      %p88 = scmp.eq.s32.totalorder %s26, 0
      %p89 = por %p87, %p88
      %p90 = scmp.ne.s32.totalorder %s78, %s79
      %p91 = scmp.eq.s32.totalorder %s27, 1
      %p92 = por %p90, %p91
      %p94 = scmp.ne.s32.totalorder %s79, %s93
      %p95 = scmp.eq.s32.totalorder %s27, 0
      %p96 = por %p94, %p95
      %s98 = sadd.s32 %s97, 1
      %p101 = scmp.eq.s32.totalorder %s21, 1
      %p102 = scmp.ne.s32.totalorder %s97, %s99
      %p103 = scmp.eq.s32.totalorder %s21, 0
      %p104 = por %p102, %p103
      %p105 = scmp.ne.s32.totalorder %s97, %s99
      %p106 = scmp.eq.s32.totalorder %s26, 1
      %p107 = por %p105, %p106
      %p108 = scmp.ne.s32.totalorder %s99, %s100
      %p109 = scmp.eq.s32.totalorder %s26, 0
      %p110 = por %p108, %p109
      %p111 = scmp.ne.s32.totalorder %s99, %s100
      %p112 = scmp.eq.s32.totalorder %s27, 1
      %p113 = por %p111, %p112
      %p115 = scmp.ne.s32.totalorder %s100, %s114
      %p116 = scmp.eq.s32.totalorder %s27, 0
      %p117 = por %p115, %p116
      %s119 = sadd.s32 %s118, 1
      %p122 = scmp.eq.s32.totalorder %s21, 1
      %p123 = scmp.ne.s32.totalorder %s118, %s120
      %p124 = scmp.eq.s32.totalorder %s21, 0
      %p125 = por %p123, %p124
      %p126 = scmp.ne.s32.totalorder %s118, %s120
      %p127 = scmp.eq.s32.totalorder %s26, 1
      %p128 = por %p126, %p127
      %p129 = scmp.ne.s32.totalorder %s120, %s121
      %p130 = scmp.eq.s32.totalorder %s26, 0
      %p131 = por %p129, %p130
      %p132 = scmp.ne.s32.totalorder %s120, %s121
      %p133 = scmp.eq.s32.totalorder %s27, 1
      %p134 = por %p132, %p133
      %p136 = scmp.ne.s32.totalorder %s121, %s135
      %p137 = scmp.eq.s32.totalorder %s27, 0
      %p138 = por %p136, %p137
      %s140 = sadd.s32 %s139, 1
      %p143 = scmp.eq.s32.totalorder %s21, 1
      %p144 = scmp.ne.s32.totalorder %s139, %s141
      %p145 = scmp.eq.s32.totalorder %s21, 0
      %p146 = por %p144, %p145
      %p147 = scmp.ne.s32.totalorder %s139, %s141
      %p148 = scmp.eq.s32.totalorder %s26, 1
      %p149 = por %p147, %p148
      %p150 = scmp.ne.s32.totalorder %s141, %s142
      %p151 = scmp.eq.s32.totalorder %s26, 0
      %p152 = por %p150, %p151
      %p153 = scmp.ne.s32.totalorder %s141, %s142
      %p154 = scmp.eq.s32.totalorder %s27, 1
      %p155 = por %p153, %p154
      %p157 = scmp.ne.s32.totalorder %s142, %s156
      %p158 = scmp.eq.s32.totalorder %s27, 0
      %p159 = por %p157, %p158
      %s161 = sadd.s32 %s160, 1
      %p164 = scmp.eq.s32.totalorder %s21, 1
      %p165 = scmp.ne.s32.totalorder %s160, %s162
      %p166 = scmp.eq.s32.totalorder %s21, 0
      %p167 = por %p165, %p166
      %p168 = scmp.ne.s32.totalorder %s160, %s162
      %p169 = scmp.eq.s32.totalorder %s26, 1
      %p170 = por %p168, %p169
      %p171 = scmp.ne.s32.totalorder %s162, %s163
      %p172 = scmp.eq.s32.totalorder %s26, 0
      %p173 = por %p171, %p172
      %p174 = scmp.ne.s32.totalorder %s162, %s163
      %p175 = scmp.eq.s32.totalorder %s27, 1
      %p176 = por %p174, %p175
      %p178 = scmp.ne.s32.totalorder %s163, %s177
      %p179 = scmp.eq.s32.totalorder %s27, 0
      %p180 = por %p178, %p179
      %s182 = sadd.s32 %s181, 1
      %p185 = scmp.eq.s32.totalorder %s21, 1
      %p186 = scmp.ne.s32.totalorder %s181, %s183
      %p187 = scmp.eq.s32.totalorder %s21, 0
      %p188 = por %p186, %p187
      %p189 = scmp.ne.s32.totalorder %s181, %s183
      %p190 = scmp.eq.s32.totalorder %s26, 1
      %p191 = por %p189, %p190
      %p192 = scmp.ne.s32.totalorder %s183, %s184
      %p193 = scmp.eq.s32.totalorder %s26, 0
      %p194 = por %p192, %p193
      %p195 = scmp.ne.s32.totalorder %s183, %s184
      %p196 = scmp.eq.s32.totalorder %s27, 1
      %p197 = por %p195, %p196
      %p199 = scmp.ne.s32.totalorder %s184, %s198
      %p200 = scmp.eq.s32.totalorder %s27, 0
      %p201 = por %p199, %p200
      %s203 = sadd.s32 %s202, 1
      %p206 = scmp.eq.s32.totalorder %s21, 1
      %p207 = scmp.ne.s32.totalorder %s202, %s204
      %p208 = scmp.eq.s32.totalorder %s21, 0
      %p209 = por %p207, %p208
      %p210 = scmp.ne.s32.totalorder %s202, %s204
      %p211 = scmp.eq.s32.totalorder %s26, 1
      %p212 = por %p210, %p211
      %p213 = scmp.ne.s32.totalorder %s204, %s205
      %p214 = scmp.eq.s32.totalorder %s26, 0
      %p215 = por %p213, %p214
      %p216 = scmp.ne.s32.totalorder %s204, %s205
      %p217 = scmp.eq.s32.totalorder %s27, 1
      %p218 = por %p216, %p217
      %p220 = scmp.ne.s32.totalorder %s205, %s219
      %p221 = scmp.eq.s32.totalorder %s27, 0
      %p222 = por %p220, %p221
      %s224 = sadd.s32 %s223, 1
      %p227 = scmp.eq.s32.totalorder %s21, 1
      %p228 = scmp.ne.s32.totalorder %s223, %s225
      %p229 = scmp.eq.s32.totalorder %s21, 0
      %p230 = por %p228, %p229
      %p231 = scmp.ne.s32.totalorder %s223, %s225
      %p232 = scmp.eq.s32.totalorder %s26, 1
      %p233 = por %p231, %p232
      %p234 = scmp.ne.s32.totalorder %s225, %s226
      %p235 = scmp.eq.s32.totalorder %s26, 0
      %p236 = por %p234, %p235
      %p237 = scmp.ne.s32.totalorder %s225, %s226
      %p238 = scmp.eq.s32.totalorder %s27, 1
      %p239 = por %p237, %p238
      %p241 = scmp.ne.s32.totalorder %s226, %s240
      %p242 = scmp.eq.s32.totalorder %s27, 0
      %p243 = por %p241, %p242
      %s245 = sadd.s32 %s244, 1
      %p248 = scmp.eq.s32.totalorder %s21, 1
      %p249 = scmp.ne.s32.totalorder %s244, %s246
      %p250 = scmp.eq.s32.totalorder %s21, 0
      %p251 = por %p249, %p250
      %p252 = scmp.ne.s32.totalorder %s244, %s246
      %p253 = scmp.eq.s32.totalorder %s26, 1
      %p254 = por %p252, %p253
      %p255 = scmp.ne.s32.totalorder %s246, %s247
      %p256 = scmp.eq.s32.totalorder %s26, 0
      %p257 = por %p255, %p256
      %p258 = scmp.ne.s32.totalorder %s246, %s247
      %p259 = scmp.eq.s32.totalorder %s27, 1
      %p260 = por %p258, %p259
      %p262 = scmp.ne.s32.totalorder %s247, %s261
      %p263 = scmp.eq.s32.totalorder %s27, 0
      %p264 = por %p262, %p263
      %s266 = sadd.s32 %s265, 1
      %p269 = scmp.eq.s32.totalorder %s21, 1
      %p270 = scmp.ne.s32.totalorder %s265, %s267
      %p271 = scmp.eq.s32.totalorder %s21, 0
      %p272 = por %p270, %p271
      %p273 = scmp.ne.s32.totalorder %s265, %s267
      %p274 = scmp.eq.s32.totalorder %s26, 1
      %p275 = por %p273, %p274
      %p276 = scmp.ne.s32.totalorder %s267, %s268
      %p277 = scmp.eq.s32.totalorder %s26, 0
      %p278 = por %p276, %p277
      %p279 = scmp.ne.s32.totalorder %s267, %s268
      %p280 = scmp.eq.s32.totalorder %s27, 1
      %p281 = por %p279, %p280
      %p283 = scmp.ne.s32.totalorder %s268, %s282
      %p284 = scmp.eq.s32.totalorder %s27, 0
      %p285 = por %p283, %p284
      %s286 = ssub.s32 %s21, %s28
      %p287 = scmp.eq.s32.totalorder %s286, 0
      %s289 = sadd.s32 %s288, 1
      %s290 = scalar_select %p287, %s288, %s289
      %p293 = pneg %p287
      %p294 = scmp.eq.s32.totalorder %s21, 1
      %p295 = por %p293, %p294
      %p296 = scmp.ne.s32.totalorder %s288, %s291
      %p297 = scmp.eq.s32.totalorder %s21, 0
      %p298 = por %p296, %p297
      %p299 = scmp.ne.s32.totalorder %s288, %s291
      %p300 = scmp.eq.s32.totalorder %s26, 1
      %p301 = por %p299, %p300
      %p302 = scmp.ne.s32.totalorder %s291, %s292
      %p303 = scmp.eq.s32.totalorder %s26, 0
      %p304 = por %p302, %p303
      %p305 = scmp.ne.s32.totalorder %s291, %s292
      %p306 = scmp.eq.s32.totalorder %s27, 1
      %p307 = por %p305, %p306
      %p309 = scmp.ne.s32.totalorder %s292, %s308
      %p310 = scmp.eq.s32.totalorder %s27, 0
      %p311 = por %p309, %p310
      %p312 = scmp.le.s32.totalorder 1, %s21
      %p313 = scmp.lt.s32.totalorder %s21, 3
      %p314 = pnand %p312, %p313
      %p315 = pneg %p314
      // Predicated region
      $region9: #{tpu_custom_call.1} parent=5 // pred_check
        _
      $region10: #{tpu_custom_call.1} parent=5 // pred_check_branch
        %317 = sbr.rel (%p314) target = $region12
      $region11: #{tpu_custom_call.1} parent=5 // pred_region
        %s318 = ssub.s32 %s21, 1
        // Predicated region
        $region13: #{tpu_custom_call.1} parent=11 // pred_check
          %p319 = pneg %p68
        $region14: #{tpu_custom_call.1} parent=11 // pred_check_branch
          %321 = sbr.rel (%p319) target = $region16
        $region15: #{tpu_custom_call.1} parent=11 // pred_region
          _
        $region16: #{tpu_custom_call.1} parent=11 // pred_fallthru
          _
        // Predicated region
        $region17: #{tpu_custom_call.1} parent=11 // pred_check
          %p322 = pneg %p89
        $region18: #{tpu_custom_call.1} parent=11 // pred_check_branch
          %324 = sbr.rel (%p322) target = $region20
        $region19: #{tpu_custom_call.1} parent=11 // pred_region
          _
        $region20: #{tpu_custom_call.1} parent=11 // pred_fallthru
          _
        // Predicated region
        $region21: #{tpu_custom_call.1} parent=11 // pred_check
          %p325 = pneg %p110
        $region22: #{tpu_custom_call.1} parent=11 // pred_check_branch
          %327 = sbr.rel (%p325) target = $region24
        $region23: #{tpu_custom_call.1} parent=11 // pred_region
          _
        $region24: #{tpu_custom_call.1} parent=11 // pred_fallthru
          _
        // Predicated region
        $region25: #{tpu_custom_call.1} parent=11 // pred_check
          %p328 = pneg %p131
        $region26: #{tpu_custom_call.1} parent=11 // pred_check_branch
          %330 = sbr.rel (%p328) target = $region28
        $region27: #{tpu_custom_call.1} parent=11 // pred_region
          _
        $region28: #{tpu_custom_call.1} parent=11 // pred_fallthru
          _
        // Predicated region
        $region29: #{tpu_custom_call.1} parent=11 // pred_check
          %p331 = pneg %p152
        $region30: #{tpu_custom_call.1} parent=11 // pred_check_branch
          %333 = sbr.rel (%p331) target = $region32
        $region31: #{tpu_custom_call.1} parent=11 // pred_region
          _
        $region32: #{tpu_custom_call.1} parent=11 // pred_fallthru
          _
        // Predicated region
        $region33: #{tpu_custom_call.1} parent=11 // pred_check
          %p334 = pneg %p173
        $region34: #{tpu_custom_call.1} parent=11 // pred_check_branch
          %336 = sbr.rel (%p334) target = $region36
        $region35: #{tpu_custom_call.1} parent=11 // pred_region
          _
        $region36: #{tpu_custom_call.1} parent=11 // pred_fallthru
          _
        // Predicated region
        $region37: #{tpu_custom_call.1} parent=11 // pred_check
          %p337 = pneg %p194
        $region38: #{tpu_custom_call.1} parent=11 // pred_check_branch
          %339 = sbr.rel (%p337) target = $region40
        $region39: #{tpu_custom_call.1} parent=11 // pred_region
          _
        $region40: #{tpu_custom_call.1} parent=11 // pred_fallthru
          _
        // Predicated region
        $region41: #{tpu_custom_call.1} parent=11 // pred_check
          %p340 = pneg %p215
        $region42: #{tpu_custom_call.1} parent=11 // pred_check_branch
          %342 = sbr.rel (%p340) target = $region44
        $region43: #{tpu_custom_call.1} parent=11 // pred_region
          _
        $region44: #{tpu_custom_call.1} parent=11 // pred_fallthru
          _
        // Predicated region
        $region45: #{tpu_custom_call.1} parent=11 // pred_check
          %p343 = pneg %p236
        $region46: #{tpu_custom_call.1} parent=11 // pred_check_branch
          %345 = sbr.rel (%p343) target = $region48
        $region47: #{tpu_custom_call.1} parent=11 // pred_region
          _
        $region48: #{tpu_custom_call.1} parent=11 // pred_fallthru
          _
        // Predicated region
        $region49: #{tpu_custom_call.1} parent=11 // pred_check
          %p346 = pneg %p257
        $region50: #{tpu_custom_call.1} parent=11 // pred_check_branch
          %348 = sbr.rel (%p346) target = $region52
        $region51: #{tpu_custom_call.1} parent=11 // pred_region
          _
        $region52: #{tpu_custom_call.1} parent=11 // pred_fallthru
          _
        // Predicated region
        $region53: #{tpu_custom_call.1} parent=11 // pred_check
          %p349 = pneg %p278
        $region54: #{tpu_custom_call.1} parent=11 // pred_check_branch
          %351 = sbr.rel (%p349) target = $region56
        $region55: #{tpu_custom_call.1} parent=11 // pred_region
          _
        $region56: #{tpu_custom_call.1} parent=11 // pred_fallthru
          _
      $region12: #{tpu_custom_call.1} parent=5 // pred_fallthru
        _
      %p352 = scmp.lt.s32.totalorder %s21, 2
      // Predicated region
      $region57: #{tpu_custom_call.1} parent=5 // pred_check
        %p353 = pneg %p352
      $region58: #{tpu_custom_call.1} parent=5 // pred_check_branch
        %355 = sbr.rel (%p353) target = $region60
      $region59: #{tpu_custom_call.1} parent=5 // pred_region
        // Predicated region
        $region61: #{tpu_custom_call.1} parent=59 // pred_check
          %p356 = pneg %p41
        $region62: #{tpu_custom_call.1} parent=59 // pred_check_branch
          %358 = sbr.rel (%p356) target = $region64
        $region63: #{tpu_custom_call.1} parent=59 // pred_region
          %p359 = scmp.lt.s32.totalorder %s21, 1
          %s360 = scalar_select %p359, %s21, 1
          %s361 = smul.addr %s360, 8
          %s362 = scalar_lea.vmem %s0, %s361
        $region64: #{tpu_custom_call.1} parent=59 // pred_fallthru
          _
      $region60: #{tpu_custom_call.1} parent=5 // pred_fallthru
        _
      %p363 = scmp.le.s32.totalorder 1, %s21
      %p364 = scmp.lt.s32.totalorder %s21, 3
      %p365 = pnand %p363, %p364
      %p366 = pneg %p365
      // Predicated region
      $region65: #{tpu_custom_call.1} parent=5 // pred_check
        _
      $region66: #{tpu_custom_call.1} parent=5 // pred_check_branch
        %368 = sbr.rel (%p365) target = $region68
      $region67: #{tpu_custom_call.1} parent=5 // pred_region
        %s369 = ssub.s32 %s21, 1
        %p370 = scmp.lt.s32.totalorder %s26, 1
        %s371 = scalar_select %p370, %s26, 1
        %s372 = smul.addr %s371, 8
        %s373 = scalar_lea.vmem %s0, %s372
        %p374 = pneg %p47
        %p375 = pneg %p44
        %p376 = pneg %p68
        %p377 = pneg %p65
        %p378 = pneg %p89
        %p379 = pneg %p86
        %p380 = pneg %p110
        %p381 = pneg %p107
        %p382 = pneg %p131
        %p383 = pneg %p128
        %p384 = pneg %p152
        %p385 = pneg %p149
        %p386 = pneg %p173
        %p387 = pneg %p170
        %p388 = pneg %p194
        %p389 = pneg %p191
        %p390 = pneg %p215
        %p391 = pneg %p212
        %p392 = pneg %p236
        %p393 = pneg %p233
        %p394 = pneg %p257
        %p395 = pneg %p254
        %p396 = pneg %p278
        %p397 = pneg %p275
        %p398 = pneg %p304
        %p399 = pneg %p301
        %s400 = sand.u32 %s291, 1
        %s401 = scalar_lea.sflag [#allocation7], %s400
        %s402 = sand.u32 %s291, 1
        %s403 = smul.addr %s402, 8
        %s404 = scalar_lea.vmem [#allocation6], %s403
        %p405 = scmp.lt.s32.totalorder %s26, 1
        %s406 = scalar_select %p405, %s26, 1
        %s407 = smul.addr %s406, 8
        %s408 = scalar_lea.vmem %s0, %s407
        %v410 = vld [vmem:[%s408] sm:$0xff]
        %v411 = vld [vmem:[%s4] sm:$0x1]
        %v412 = vld [vmem:[%s5] sm:$0x1]
        %vm413 = vcmask 261120
        %v414 = vsel %vm413, %v410, 0.0
        %415 = vadd.xlane.f32.xlu0 %v414
        %v416 = vpop.xlane.xlu0 %415
        %v417 = vrcp.pop 32.0
        %v418 = vmul.f32 %v416, %v417
        %v419 = vsub.f32 %v410, %v418
        %v420 = vmul.f32 %v419, %v419
        %v421 = vsel %vm413, %v420, 0.0
        %422 = vadd.xlane.f32.xlu0 %v421
        %v423 = vpop.xlane.xlu0 %422
        %v424 = vmul.f32 %v423, %v417
        %v425 = vrsqrt.pop %v424
        %v426 = vmul.f32 %v424, %v425
        %vm427 = vcmp.eq.f32.partialorder %v424, inf
        %v428 = vsel %vm427, %v424, %v426
        %vm429 = vcmp.eq.f32.partialorder %v424, 0.0
        %v430 = vand.u32 %v424, 2147483648
        %v431 = vsel %vm429, %v430, %v428
        %v432 = vadd.f32 %v431, 1e-05
        %v433 = vrcp.pop %v432
        %v434 = vmul.f32 %v419, %v433
        %v436 = vlaneseq
        %v437 = vshrl.u32 %v436, 7
        %v438 = vsub.s32 0, %v437
        %v439 = vrot.slane %v411, %v438
        %v441 = vmul.f32 %v439, %v434
        %v443 = vlaneseq
        %v444 = vshrl.u32 %v443, 7
        %v445 = vsub.s32 0, %v444
        %v446 = vrot.slane %v412, %v445
        %v448 = vadd.f32 %v441, %v446
        %v449 = vpack.c.bf16 %v448, %v448
        %v450 = vld [vmem:[%s1] sm:$0xf]
        %v451 = vld [vmem:[%s1 + $0x4] sm:$0xf]
        %v452 = vld [vmem:[%s1 + $0x8] sm:$0xf]
        %v453 = vld [vmem:[%s1 + $0xc] sm:$0xf]
        %v458 = vunpack.c.l.b16 %v450
        %v459 = vunpack.c.l.b16 %v451
        %v460 = vunpack.c.l.b16 %v452
        %v461 = vunpack.c.l.b16 %v453
        %v462 = vpack.c.b16 %v459, %v458
        %v463 = vpack.c.b16 %v461, %v460
        %v467 = vsel %vm413, %v449, 0
        %469 = vmatprep.subr.bf16.mxu0 0
        %470 = vmatpush1.bf16.msra.mxu0 %v462
        %471 = vmatprep.subr.bf16.mxu0 0
        %472 = vmatpush1.bf16.msra.mxu0 %v463
        %473 = vmatprep.subr.bf16.mxu0 0
        %474 = vmatpush1.bf16.msra.mxu0 0
        %475 = vmatprep.subr.bf16.mxu0 0
        %476 = vmatpush1.bf16.msra.mxu0 0
        %477 = vmatprep.subr.bf16.mxu0 0
        %478 = vmatpush1.bf16.msra.mxu0 0
        %479 = vmatprep.subr.bf16.mxu0 0
        %480 = vmatpush1.bf16.msra.mxu0 0
        %481 = vmatprep.subr.bf16.mxu0 0
        %482 = vmatpush1.bf16.msra.mxu0 0
        %483 = vmatprep.subr.bf16.mxu0 0
        %484 = vmatpush1.bf16.msra.mxu0 0
        %485 = vmatprep.subr.bf16.mxu0 0
        %486 = vmatpush1.bf16.msra.mxu0 0
        %487 = vmatprep.subr.bf16.mxu0 0
        %488 = vmatpush1.bf16.msra.mxu0 0
        %489 = vmatprep.subr.bf16.mxu0 0
        %490 = vmatpush1.bf16.msra.mxu0 0
        %491 = vmatprep.subr.bf16.mxu0 0
        %492 = vmatpush1.bf16.msra.mxu0 0
        %493 = vmatprep.subr.bf16.mxu0 0
        %494 = vmatpush1.bf16.msra.mxu0 0
        %495 = vmatprep.subr.bf16.mxu0 0
        %496 = vmatpush1.bf16.msra.mxu0 0
        %497 = vmatprep.subr.bf16.mxu0 0
        %498 = vmatpush1.bf16.msra.mxu0 0
        %499 = vmatprep.subr.bf16.mxu0 0
        %500 = vmatpush1.bf16.msra.mxu0 0
        %501 = vmatprep.mubr.bf16.mxu0 0
        %502 = vmatmul.mubr.bf16.gmra.mrb[0].mxu0 %v467
        %v503 = vpop.f32.mrb[0].mxu0
        %v504 = vadd.f32 0.0, %v503
        %v505 = vpop.f32.mrb[0].mxu0
        %v506 = vpop.f32.mrb[0].mxu0
        %v507 = vpop.f32.mrb[0].mxu0
        %508 = vdwg.mxu0
        %v509 = vmul.f32 %v504, 0.35355338
        %vm510 = vcmask 64512
        %511 = vst.msk [vmem:[#allocation2] sm:$0xff] %vm510, %v509
        %513 = vrot.lane.b32.xlu0 %v504, 96
        %v514 = vpop.permute.xlu0 %513
        %516 = vst.msk [vmem:[#allocation3] sm:$0xff] %vm510, %v514
        %517 = vrot.lane.b32.xlu0 %v504, 64
        %v518 = vpop.permute.xlu0 %517
        %520 = vst.msk [vmem:[#allocation4] sm:$0xff] %vm510, %v518
        %522 = vrot.lane.b32.xlu0 %v509, 120
        %v523 = vpop.permute.xlu0 %522
        %s525 = scalar_lea.vmem [#allocation2], 8
        %526 = vst.msk [vmem:[%s525] sm:$0xff] %vm510, %v523
        %527 = vrot.lane.b32.xlu0 %v504, 88
        %v528 = vpop.permute.xlu0 %527
        %s530 = scalar_lea.vmem [#allocation3], 8
        %531 = vst.msk [vmem:[%s530] sm:$0xff] %vm510, %v528
        %532 = vrot.lane.b32.xlu0 %v504, 56
        %v533 = vpop.permute.xlu0 %532
        %s535 = scalar_lea.vmem [#allocation4], 8
        %536 = vst.msk [vmem:[%s535] sm:$0xff] %vm510, %v533
        %537 = vrot.lane.b32.xlu0 %v509, 112
        %v538 = vpop.permute.xlu0 %537
        %s540 = scalar_lea.vmem [#allocation2], 16
        %541 = vst.msk [vmem:[%s540] sm:$0xff] %vm510, %v538
        %542 = vrot.lane.b32.xlu0 %v504, 80
        %v543 = vpop.permute.xlu0 %542
        %s545 = scalar_lea.vmem [#allocation3], 16
        %546 = vst.msk [vmem:[%s545] sm:$0xff] %vm510, %v543
        %547 = vrot.lane.b32.xlu0 %v504, 48
        %v548 = vpop.permute.xlu0 %547
        %s550 = scalar_lea.vmem [#allocation4], 16
        %551 = vst.msk [vmem:[%s550] sm:$0xff] %vm510, %v548
        %552 = vrot.lane.b32.xlu0 %v509, 104
        %v553 = vpop.permute.xlu0 %552
        %s555 = scalar_lea.vmem [#allocation2], 24
        %556 = vst.msk [vmem:[%s555] sm:$0xff] %vm510, %v553
        %557 = vrot.lane.b32.xlu0 %v504, 72
        %v558 = vpop.permute.xlu0 %557
        %s560 = scalar_lea.vmem [#allocation3], 24
        %561 = vst.msk [vmem:[%s560] sm:$0xff] %vm510, %v558
        %562 = vrot.lane.b32.xlu0 %v504, 40
        %v563 = vpop.permute.xlu0 %562
        %s565 = scalar_lea.vmem [#allocation4], 24
        %566 = vst.msk [vmem:[%s565] sm:$0xff] %vm510, %v563
        %v567 = vlaneseq
        %v568 = vshrl.u32 %v567, 7
        %v569 = vlaneseq
        %v570 = vand.u32 %v569, 127
        %vm571 = vcmp.ge.s32.totalorder %v568, %v570
        %v572 = vsel %vm571, 0.0, -1e+30
        %v573 = vld [vmem:[#allocation2] sm:$0xff]
        %v574 = vld [vmem:[#allocation2 + $0x8] sm:$0xff]
        %v575 = vld [vmem:[#allocation2 + $0x10] sm:$0xff]
        %v576 = vld [vmem:[#allocation2 + $0x18] sm:$0xff]
        %v577 = vpack.c.bf16 %v573, %v573
        %v578 = vpack.c.bf16 %v574, %v574
        %v579 = vpack.c.bf16 %v575, %v575
        %v580 = vpack.c.bf16 %v576, %v576
        %v581 = vld [vmem:[#allocation3] sm:$0xff]
        %v582 = vld [vmem:[#allocation3 + $0x8] sm:$0xff]
        %v583 = vld [vmem:[#allocation3 + $0x10] sm:$0xff]
        %v584 = vld [vmem:[#allocation3 + $0x18] sm:$0xff]
        %v585 = vpack.c.bf16 %v581, %v581
        %v586 = vpack.c.bf16 %v582, %v582
        %v587 = vpack.c.bf16 %v583, %v583
        %v588 = vpack.c.bf16 %v584, %v584
        %v589 = vld [vmem:[#allocation4] sm:$0xff]
        %v590 = vld [vmem:[#allocation4 + $0x8] sm:$0xff]
        %v591 = vld [vmem:[#allocation4 + $0x10] sm:$0xff]
        %v592 = vld [vmem:[#allocation4 + $0x18] sm:$0xff]
        %v593 = vpack.c.bf16 %v589, %v589
        %v594 = vpack.c.bf16 %v590, %v590
        %v595 = vpack.c.bf16 %v591, %v591
        %v596 = vpack.c.bf16 %v592, %v592
        %v598 = vsel %vm510, %v577, 0
        %v601 = vsel %vm510, %v585, 0
        %603 = vmatprep.subr.bf16.mxu0 0
        %604 = vmatpush1.bf16.xpose.msra.mxu0 %v601
        %605 = vmatprep.subr.bf16.mxu0 0
        %606 = vmatpush1.bf16.xpose.msra.mxu0 0
        %607 = vmatprep.subr.bf16.mxu0 0
        %608 = vmatpush1.bf16.xpose.msra.mxu0 0
        %609 = vmatprep.subr.bf16.mxu0 0
        %610 = vmatpush1.bf16.xpose.msra.mxu0 0
        %611 = vmatprep.subr.bf16.mxu0 0
        %612 = vmatpush1.bf16.xpose.msra.mxu0 0
        %613 = vmatprep.subr.bf16.mxu0 0
        %614 = vmatpush1.bf16.xpose.msra.mxu0 0
        %615 = vmatprep.subr.bf16.mxu0 0
        %616 = vmatpush1.bf16.xpose.msra.mxu0 0
        %617 = vmatprep.subr.bf16.mxu0 0
        %618 = vmatpush1.bf16.xpose.msra.mxu0 0
        %619 = vmatprep.subr.bf16.mxu0 0
        %620 = vmatpush1.bf16.xpose.msra.mxu0 0
        %621 = vmatprep.subr.bf16.mxu0 0
        %622 = vmatpush1.bf16.xpose.msra.mxu0 0
        %623 = vmatprep.subr.bf16.mxu0 0
        %624 = vmatpush1.bf16.xpose.msra.mxu0 0
        %625 = vmatprep.subr.bf16.mxu0 0
        %626 = vmatpush1.bf16.xpose.msra.mxu0 0
        %627 = vmatprep.subr.bf16.mxu0 0
        %628 = vmatpush1.bf16.xpose.msra.mxu0 0
        %629 = vmatprep.subr.bf16.mxu0 0
        %630 = vmatpush1.bf16.xpose.msra.mxu0 0
        %631 = vmatprep.subr.bf16.mxu0 0
        %632 = vmatpush1.bf16.xpose.msra.mxu0 0
        %633 = vmatprep.subr.bf16.mxu0 0
        %634 = vmatpush1.bf16.xpose.msra.mxu0 0
        %635 = vmatprep.mubr.bf16.mxu0 0
        %636 = vmatmul.mubr.bf16.gmra.mrb[0].mxu0 %v598
        %v637 = vpop.f32.mrb[0].mxu0
        %v638 = vadd.f32 %v572, %v637
        %v639 = vpop.f32.mrb[0].mxu0
        %v640 = vpop.f32.mrb[0].mxu0
        %v641 = vpop.f32.mrb[0].mxu0
        %642 = vdwg.mxu0
        %v644 = vsel %vm510, %v578, 0
        %v647 = vsel %vm510, %v586, 0
        %649 = vmatprep.subr.bf16.mxu0 0
        %650 = vmatpush1.bf16.xpose.msra.mxu0 %v647
        %651 = vmatprep.subr.bf16.mxu0 0
        %652 = vmatpush1.bf16.xpose.msra.mxu0 0
        %653 = vmatprep.subr.bf16.mxu0 0
        %654 = vmatpush1.bf16.xpose.msra.mxu0 0
        %655 = vmatprep.subr.bf16.mxu0 0
        %656 = vmatpush1.bf16.xpose.msra.mxu0 0
        %657 = vmatprep.subr.bf16.mxu0 0
        %658 = vmatpush1.bf16.xpose.msra.mxu0 0
        %659 = vmatprep.subr.bf16.mxu0 0
        %660 = vmatpush1.bf16.xpose.msra.mxu0 0
        %661 = vmatprep.subr.bf16.mxu0 0
        %662 = vmatpush1.bf16.xpose.msra.mxu0 0
        %663 = vmatprep.subr.bf16.mxu0 0
        %664 = vmatpush1.bf16.xpose.msra.mxu0 0
        %665 = vmatprep.subr.bf16.mxu0 0
        %666 = vmatpush1.bf16.xpose.msra.mxu0 0
        %667 = vmatprep.subr.bf16.mxu0 0
        %668 = vmatpush1.bf16.xpose.msra.mxu0 0
        %669 = vmatprep.subr.bf16.mxu0 0
        %670 = vmatpush1.bf16.xpose.msra.mxu0 0
        %671 = vmatprep.subr.bf16.mxu0 0
        %672 = vmatpush1.bf16.xpose.msra.mxu0 0
        %673 = vmatprep.subr.bf16.mxu0 0
        %674 = vmatpush1.bf16.xpose.msra.mxu0 0
        %675 = vmatprep.subr.bf16.mxu0 0
        %676 = vmatpush1.bf16.xpose.msra.mxu0 0
        %677 = vmatprep.subr.bf16.mxu0 0
        %678 = vmatpush1.bf16.xpose.msra.mxu0 0
        %679 = vmatprep.subr.bf16.mxu0 0
        %680 = vmatpush1.bf16.xpose.msra.mxu0 0
        %681 = vmatprep.mubr.bf16.mxu0 0
        %682 = vmatmul.mubr.bf16.gmra.mrb[0].mxu0 %v644
        %v683 = vpop.f32.mrb[0].mxu0
        %v684 = vadd.f32 %v572, %v683
        %v685 = vpop.f32.mrb[0].mxu0
        %v686 = vpop.f32.mrb[0].mxu0
        %v687 = vpop.f32.mrb[0].mxu0
        %688 = vdwg.mxu0
        %v690 = vsel %vm510, %v579, 0
        %v693 = vsel %vm510, %v587, 0
        %695 = vmatprep.subr.bf16.mxu0 0
        %696 = vmatpush1.bf16.xpose.msra.mxu0 %v693
        %697 = vmatprep.subr.bf16.mxu0 0
        %698 = vmatpush1.bf16.xpose.msra.mxu0 0
        %699 = vmatprep.subr.bf16.mxu0 0
        %700 = vmatpush1.bf16.xpose.msra.mxu0 0
        %701 = vmatprep.subr.bf16.mxu0 0
        %702 = vmatpush1.bf16.xpose.msra.mxu0 0
        %703 = vmatprep.subr.bf16.mxu0 0
        %704 = vmatpush1.bf16.xpose.msra.mxu0 0
        %705 = vmatprep.subr.bf16.mxu0 0
        %706 = vmatpush1.bf16.xpose.msra.mxu0 0
        %707 = vmatprep.subr.bf16.mxu0 0
        %708 = vmatpush1.bf16.xpose.msra.mxu0 0
        %709 = vmatprep.subr.bf16.mxu0 0
        %710 = vmatpush1.bf16.xpose.msra.mxu0 0
        %711 = vmatprep.subr.bf16.mxu0 0
        %712 = vmatpush1.bf16.xpose.msra.mxu0 0
        %713 = vmatprep.subr.bf16.mxu0 0
        %714 = vmatpush1.bf16.xpose.msra.mxu0 0
        %715 = vmatprep.subr.bf16.mxu0 0
        %716 = vmatpush1.bf16.xpose.msra.mxu0 0
        %717 = vmatprep.subr.bf16.mxu0 0
        %718 = vmatpush1.bf16.xpose.msra.mxu0 0
        %719 = vmatprep.subr.bf16.mxu0 0
        %720 = vmatpush1.bf16.xpose.msra.mxu0 0
        %721 = vmatprep.subr.bf16.mxu0 0
        %722 = vmatpush1.bf16.xpose.msra.mxu0 0
        %723 = vmatprep.subr.bf16.mxu0 0
        %724 = vmatpush1.bf16.xpose.msra.mxu0 0
        %725 = vmatprep.subr.bf16.mxu0 0
        %726 = vmatpush1.bf16.xpose.msra.mxu0 0
        %727 = vmatprep.mubr.bf16.mxu0 0
        %728 = vmatmul.mubr.bf16.gmra.mrb[0].mxu0 %v690
        %v729 = vpop.f32.mrb[0].mxu0
        %v730 = vadd.f32 %v572, %v729
        %v731 = vpop.f32.mrb[0].mxu0
        %v732 = vpop.f32.mrb[0].mxu0
        %v733 = vpop.f32.mrb[0].mxu0
        %734 = vdwg.mxu0
        %v736 = vsel %vm510, %v580, 0
        %v739 = vsel %vm510, %v588, 0
        %741 = vmatprep.subr.bf16.mxu0 0
        %742 = vmatpush1.bf16.xpose.msra.mxu0 %v739
        %743 = vmatprep.subr.bf16.mxu0 0
        %744 = vmatpush1.bf16.xpose.msra.mxu0 0
        %745 = vmatprep.subr.bf16.mxu0 0
        %746 = vmatpush1.bf16.xpose.msra.mxu0 0
        %747 = vmatprep.subr.bf16.mxu0 0
        %748 = vmatpush1.bf16.xpose.msra.mxu0 0
        %749 = vmatprep.subr.bf16.mxu0 0
        %750 = vmatpush1.bf16.xpose.msra.mxu0 0
        %751 = vmatprep.subr.bf16.mxu0 0
        %752 = vmatpush1.bf16.xpose.msra.mxu0 0
        %753 = vmatprep.subr.bf16.mxu0 0
        %754 = vmatpush1.bf16.xpose.msra.mxu0 0
        %755 = vmatprep.subr.bf16.mxu0 0
        %756 = vmatpush1.bf16.xpose.msra.mxu0 0
        %757 = vmatprep.subr.bf16.mxu0 0
        %758 = vmatpush1.bf16.xpose.msra.mxu0 0
        %759 = vmatprep.subr.bf16.mxu0 0
        %760 = vmatpush1.bf16.xpose.msra.mxu0 0
        %761 = vmatprep.subr.bf16.mxu0 0
        %762 = vmatpush1.bf16.xpose.msra.mxu0 0
        %763 = vmatprep.subr.bf16.mxu0 0
        %764 = vmatpush1.bf16.xpose.msra.mxu0 0
        %765 = vmatprep.subr.bf16.mxu0 0
        %766 = vmatpush1.bf16.xpose.msra.mxu0 0
        %767 = vmatprep.subr.bf16.mxu0 0
        %768 = vmatpush1.bf16.xpose.msra.mxu0 0
        %769 = vmatprep.subr.bf16.mxu0 0
        %770 = vmatpush1.bf16.xpose.msra.mxu0 0
        %771 = vmatprep.subr.bf16.mxu0 0
        %772 = vmatpush1.bf16.xpose.msra.mxu0 0
        %773 = vmatprep.mubr.bf16.mxu0 0
        %774 = vmatmul.mubr.bf16.gmra.mrb[0].mxu0 %v736
        %v775 = vpop.f32.mrb[0].mxu0
        %v776 = vadd.f32 %v572, %v775
        %v777 = vpop.f32.mrb[0].mxu0
        %v778 = vpop.f32.mrb[0].mxu0
        %v779 = vpop.f32.mrb[0].mxu0
        %780 = vdwg.mxu0
        %v781 = vsel %vm510, %v638, -inf
        %782 = vmax.xlane.f32.xlu0 %v781
        %v783 = vpop.xlane.xlu0 %782
        %v784 = vsel %vm510, %v684, -inf
        %785 = vmax.xlane.f32.xlu0 %v784
        %v786 = vpop.xlane.xlu0 %785
        %v787 = vsel %vm510, %v730, -inf
        %788 = vmax.xlane.f32.xlu0 %v787
        %v789 = vpop.xlane.xlu0 %788
        %v790 = vsel %vm510, %v776, -inf
        %791 = vmax.xlane.f32.xlu0 %v790
        %v792 = vpop.xlane.xlu0 %791
        %v793 = vsub.f32 %v638, %v783
        %v794 = vsub.f32 %v684, %v786
        %v795 = vsub.f32 %v730, %v789
        %v796 = vsub.f32 %v776, %v792
        %v797 = vmul.f32 %v793, 1.442695
        %v798 = vpow.pop %v797
        %v799 = vmul.f32 %v794, 1.442695
        %v800 = vpow.pop %v799
        %v801 = vmul.f32 %v795, 1.442695
        %v802 = vpow.pop %v801
        %v803 = vmul.f32 %v796, 1.442695
        %v804 = vpow.pop %v803
        %v805 = vsel %vm510, %v798, 0.0
        %806 = vadd.xlane.f32.xlu0 %v805
        %v807 = vpop.xlane.xlu0 %806
        %v808 = vsel %vm510, %v800, 0.0
        %809 = vadd.xlane.f32.xlu0 %v808
        %v810 = vpop.xlane.xlu0 %809
        %v811 = vsel %vm510, %v802, 0.0
        %812 = vadd.xlane.f32.xlu0 %v811
        %v813 = vpop.xlane.xlu0 %812
        %v814 = vsel %vm510, %v804, 0.0
        %815 = vadd.xlane.f32.xlu0 %v814
        %v816 = vpop.xlane.xlu0 %815
        %v817 = vrcp.pop %v807
        %v818 = vrcp.pop %v810
        %v819 = vrcp.pop %v813
        %v820 = vrcp.pop %v816
        %v821 = vmul.f32 %v798, %v817
        %v822 = vmul.f32 %v800, %v818
        %v823 = vmul.f32 %v802, %v819
        %v824 = vmul.f32 %v804, %v820
        %v825 = vpack.c.bf16 %v821, %v821
        %v826 = vpack.c.bf16 %v822, %v822
        %v827 = vpack.c.bf16 %v823, %v823
        %v828 = vpack.c.bf16 %v824, %v824
        %v830 = vsel %vm510, %v825, 0
        %vm832 = vcmask 1043456
        %v834 = vsel %vm832, %v593, 0
        %836 = vmatprep.subr.bf16.mxu0 0
        %837 = vmatpush1.bf16.msra.mxu0 %v834
        %838 = vmatprep.subr.bf16.mxu0 0
        %839 = vmatpush1.bf16.msra.mxu0 0
        %840 = vmatprep.subr.bf16.mxu0 0
        %841 = vmatpush1.bf16.msra.mxu0 0
        %842 = vmatprep.subr.bf16.mxu0 0
        %843 = vmatpush1.bf16.msra.mxu0 0
        %844 = vmatprep.subr.bf16.mxu0 0
        %845 = vmatpush1.bf16.msra.mxu0 0
        %846 = vmatprep.subr.bf16.mxu0 0
        %847 = vmatpush1.bf16.msra.mxu0 0
        %848 = vmatprep.subr.bf16.mxu0 0
        %849 = vmatpush1.bf16.msra.mxu0 0
        %850 = vmatprep.subr.bf16.mxu0 0
        %851 = vmatpush1.bf16.msra.mxu0 0
        %852 = vmatprep.subr.bf16.mxu0 0
        %853 = vmatpush1.bf16.msra.mxu0 0
        %854 = vmatprep.subr.bf16.mxu0 0
        %855 = vmatpush1.bf16.msra.mxu0 0
        %856 = vmatprep.subr.bf16.mxu0 0
        %857 = vmatpush1.bf16.msra.mxu0 0
        %858 = vmatprep.subr.bf16.mxu0 0
        %859 = vmatpush1.bf16.msra.mxu0 0
        %860 = vmatprep.subr.bf16.mxu0 0
        %861 = vmatpush1.bf16.msra.mxu0 0
        %862 = vmatprep.subr.bf16.mxu0 0
        %863 = vmatpush1.bf16.msra.mxu0 0
        %864 = vmatprep.subr.bf16.mxu0 0
        %865 = vmatpush1.bf16.msra.mxu0 0
        %866 = vmatprep.subr.bf16.mxu0 0
        %867 = vmatpush1.bf16.msra.mxu0 0
        %868 = vmatprep.mubr.bf16.mxu0 0
        %869 = vmatmul.mubr.bf16.gmra.mrb[0].mxu0 %v830
        %v870 = vpop.f32.mrb[0].mxu0
        %v871 = vadd.f32 0.0, %v870
        %v872 = vpop.f32.mrb[0].mxu0
        %v873 = vpop.f32.mrb[0].mxu0
        %v874 = vpop.f32.mrb[0].mxu0
        %875 = vdwg.mxu0
        %v877 = vsel %vm510, %v826, 0
        %v880 = vsel %vm832, %v594, 0
        %882 = vmatprep.subr.bf16.mxu0 0
        %883 = vmatpush1.bf16.msra.mxu0 %v880
        %884 = vmatprep.subr.bf16.mxu0 0
        %885 = vmatpush1.bf16.msra.mxu0 0
        %886 = vmatprep.subr.bf16.mxu0 0
        %887 = vmatpush1.bf16.msra.mxu0 0
        %888 = vmatprep.subr.bf16.mxu0 0
        %889 = vmatpush1.bf16.msra.mxu0 0
        %890 = vmatprep.subr.bf16.mxu0 0
        %891 = vmatpush1.bf16.msra.mxu0 0
        %892 = vmatprep.subr.bf16.mxu0 0
        %893 = vmatpush1.bf16.msra.mxu0 0
        %894 = vmatprep.subr.bf16.mxu0 0
        %895 = vmatpush1.bf16.msra.mxu0 0
        %896 = vmatprep.subr.bf16.mxu0 0
        %897 = vmatpush1.bf16.msra.mxu0 0
        %898 = vmatprep.subr.bf16.mxu0 0
        %899 = vmatpush1.bf16.msra.mxu0 0
        %900 = vmatprep.subr.bf16.mxu0 0
        %901 = vmatpush1.bf16.msra.mxu0 0
        %902 = vmatprep.subr.bf16.mxu0 0
        %903 = vmatpush1.bf16.msra.mxu0 0
        %904 = vmatprep.subr.bf16.mxu0 0
        %905 = vmatpush1.bf16.msra.mxu0 0
        %906 = vmatprep.subr.bf16.mxu0 0
        %907 = vmatpush1.bf16.msra.mxu0 0
        %908 = vmatprep.subr.bf16.mxu0 0
        %909 = vmatpush1.bf16.msra.mxu0 0
        %910 = vmatprep.subr.bf16.mxu0 0
        %911 = vmatpush1.bf16.msra.mxu0 0
        %912 = vmatprep.subr.bf16.mxu0 0
        %913 = vmatpush1.bf16.msra.mxu0 0
        %914 = vmatprep.mubr.bf16.mxu0 0
        %915 = vmatmul.mubr.bf16.gmra.mrb[0].mxu0 %v877
        %v916 = vpop.f32.mrb[0].mxu0
        %v917 = vadd.f32 0.0, %v916
        %v918 = vpop.f32.mrb[0].mxu0
        %v919 = vpop.f32.mrb[0].mxu0
        %v920 = vpop.f32.mrb[0].mxu0
        %921 = vdwg.mxu0
        %v923 = vsel %vm510, %v827, 0
        %v926 = vsel %vm832, %v595, 0
        %928 = vmatprep.subr.bf16.mxu0 0
        %929 = vmatpush1.bf16.msra.mxu0 %v926
        %930 = vmatprep.subr.bf16.mxu0 0
        %931 = vmatpush1.bf16.msra.mxu0 0
        %932 = vmatprep.subr.bf16.mxu0 0
        %933 = vmatpush1.bf16.msra.mxu0 0
        %934 = vmatprep.subr.bf16.mxu0 0
        %935 = vmatpush1.bf16.msra.mxu0 0
        %936 = vmatprep.subr.bf16.mxu0 0
        %937 = vmatpush1.bf16.msra.mxu0 0
        %938 = vmatprep.subr.bf16.mxu0 0
        %939 = vmatpush1.bf16.msra.mxu0 0
        %940 = vmatprep.subr.bf16.mxu0 0
        %941 = vmatpush1.bf16.msra.mxu0 0
        %942 = vmatprep.subr.bf16.mxu0 0
        %943 = vmatpush1.bf16.msra.mxu0 0
        %944 = vmatprep.subr.bf16.mxu0 0
        %945 = vmatpush1.bf16.msra.mxu0 0
        %946 = vmatprep.subr.bf16.mxu0 0
        %947 = vmatpush1.bf16.msra.mxu0 0
        %948 = vmatprep.subr.bf16.mxu0 0
        %949 = vmatpush1.bf16.msra.mxu0 0
        %950 = vmatprep.subr.bf16.mxu0 0
        %951 = vmatpush1.bf16.msra.mxu0 0
        %952 = vmatprep.subr.bf16.mxu0 0
        %953 = vmatpush1.bf16.msra.mxu0 0
        %954 = vmatprep.subr.bf16.mxu0 0
        %955 = vmatpush1.bf16.msra.mxu0 0
        %956 = vmatprep.subr.bf16.mxu0 0
        %957 = vmatpush1.bf16.msra.mxu0 0
        %958 = vmatprep.subr.bf16.mxu0 0
        %959 = vmatpush1.bf16.msra.mxu0 0
        %960 = vmatprep.mubr.bf16.mxu0 0
        %961 = vmatmul.mubr.bf16.gmra.mrb[0].mxu0 %v923
        %v962 = vpop.f32.mrb[0].mxu0
        %v963 = vadd.f32 0.0, %v962
        %v964 = vpop.f32.mrb[0].mxu0
        %v965 = vpop.f32.mrb[0].mxu0
        %v966 = vpop.f32.mrb[0].mxu0
        %967 = vdwg.mxu0
        %v969 = vsel %vm510, %v828, 0
        %v972 = vsel %vm832, %v596, 0
        %974 = vmatprep.subr.bf16.mxu0 0
        %975 = vmatpush1.bf16.msra.mxu0 %v972
        %976 = vmatprep.subr.bf16.mxu0 0
        %977 = vmatpush1.bf16.msra.mxu0 0
        %978 = vmatprep.subr.bf16.mxu0 0
        %979 = vmatpush1.bf16.msra.mxu0 0
        %980 = vmatprep.subr.bf16.mxu0 0
        %981 = vmatpush1.bf16.msra.mxu0 0
        %982 = vmatprep.subr.bf16.mxu0 0
        %983 = vmatpush1.bf16.msra.mxu0 0
        %984 = vmatprep.subr.bf16.mxu0 0
        %985 = vmatpush1.bf16.msra.mxu0 0
        %986 = vmatprep.subr.bf16.mxu0 0
        %987 = vmatpush1.bf16.msra.mxu0 0
        %988 = vmatprep.subr.bf16.mxu0 0
        %989 = vmatpush1.bf16.msra.mxu0 0
        %990 = vmatprep.subr.bf16.mxu0 0
        %991 = vmatpush1.bf16.msra.mxu0 0
        %992 = vmatprep.subr.bf16.mxu0 0
        %993 = vmatpush1.bf16.msra.mxu0 0
        %994 = vmatprep.subr.bf16.mxu0 0
        %995 = vmatpush1.bf16.msra.mxu0 0
        %996 = vmatprep.subr.bf16.mxu0 0
        %997 = vmatpush1.bf16.msra.mxu0 0
        %998 = vmatprep.subr.bf16.mxu0 0
        %999 = vmatpush1.bf16.msra.mxu0 0
        %1000 = vmatprep.subr.bf16.mxu0 0
        %1001 = vmatpush1.bf16.msra.mxu0 0
        %1002 = vmatprep.subr.bf16.mxu0 0
        %1003 = vmatpush1.bf16.msra.mxu0 0
        %1004 = vmatprep.subr.bf16.mxu0 0
        %1005 = vmatpush1.bf16.msra.mxu0 0
        %1006 = vmatprep.mubr.bf16.mxu0 0
        %1007 = vmatmul.mubr.bf16.gmra.mrb[0].mxu0 %v969
        %v1008 = vpop.f32.mrb[0].mxu0
        %v1009 = vadd.f32 0.0, %v1008
        %v1010 = vpop.f32.mrb[0].mxu0
        %v1011 = vpop.f32.mrb[0].mxu0
        %v1012 = vpop.f32.mrb[0].mxu0
        %1013 = vdwg.mxu0
        %1014 = vst.msk [vmem:[#allocation5] sm:$0xff] %vm510, %v871
        %1016 = vrot.lane.b32.xlu0 %v917, 8
        %v1017 = vpop.permute.xlu0 %1016
        %vm1019 = vcmask 130112
        %1020 = vst.msk [vmem:[#allocation5] sm:$0xff] %vm1019, %v1017
        %1022 = vrot.lane.b32.xlu0 %v963, 16
        %v1023 = vpop.permute.xlu0 %1022
        %vm1025 = vcmask 195712
        %1026 = vst.msk [vmem:[#allocation5] sm:$0xff] %vm1025, %v1023
        %1028 = vrot.lane.b32.xlu0 %v1009, 24
        %v1029 = vpop.permute.xlu0 %1028
        %vm1031 = vcmask 261312
        %1032 = vst.msk [vmem:[#allocation5] sm:$0xff] %vm1031, %v1029
        %v1033 = vld [vmem:[#allocation5] sm:$0xff]
        %v1034 = vpack.c.bf16 %v1033, %v1033
        %v1035 = vld [vmem:[%s2] sm:$0xf]
        %v1036 = vld [vmem:[%s2 + $0x4] sm:$0xf]
        %v1037 = vld [vmem:[%s2 + $0x8] sm:$0xf]
        %v1038 = vld [vmem:[%s2 + $0xc] sm:$0xf]
        %v1039 = vld [vmem:[%s3] sm:$0x1]
        %v1041 = vlaneseq
        %v1042 = vshrl.u32 %v1041, 7
        %v1043 = vsub.s32 0, %v1042
        %v1044 = vrot.slane %v1039, %v1043
        %v1050 = vunpack.c.l.b16 %v1035
        %v1051 = vunpack.c.l.b16 %v1036
        %v1052 = vunpack.c.l.b16 %v1037
        %v1053 = vunpack.c.l.b16 %v1038
        %v1054 = vpack.c.b16 %v1051, %v1050
        %v1055 = vpack.c.b16 %v1053, %v1052
        %v1059 = vsel %vm413, %v1034, 0
        %1061 = vmatprep.subr.bf16.mxu0 0
        %1062 = vmatpush1.bf16.msra.mxu0 %v1054
        %1063 = vmatprep.subr.bf16.mxu0 0
        %1064 = vmatpush1.bf16.msra.mxu0 %v1055
        %1065 = vmatprep.subr.bf16.mxu0 0
        %1066 = vmatpush1.bf16.msra.mxu0 0
        %1067 = vmatprep.subr.bf16.mxu0 0
        %1068 = vmatpush1.bf16.msra.mxu0 0
        %1069 = vmatprep.subr.bf16.mxu0 0
        %1070 = vmatpush1.bf16.msra.mxu0 0
        %1071 = vmatprep.subr.bf16.mxu0 0
        %1072 = vmatpush1.bf16.msra.mxu0 0
        %1073 = vmatprep.subr.bf16.mxu0 0
        %1074 = vmatpush1.bf16.msra.mxu0 0
        %1075 = vmatprep.subr.bf16.mxu0 0
        %1076 = vmatpush1.bf16.msra.mxu0 0
        %1077 = vmatprep.subr.bf16.mxu0 0
        %1078 = vmatpush1.bf16.msra.mxu0 0
        %1079 = vmatprep.subr.bf16.mxu0 0
        %1080 = vmatpush1.bf16.msra.mxu0 0
        %1081 = vmatprep.subr.bf16.mxu0 0
        %1082 = vmatpush1.bf16.msra.mxu0 0
        %1083 = vmatprep.subr.bf16.mxu0 0
        %1084 = vmatpush1.bf16.msra.mxu0 0
        %1085 = vmatprep.subr.bf16.mxu0 0
        %1086 = vmatpush1.bf16.msra.mxu0 0
        %1087 = vmatprep.subr.bf16.mxu0 0
        %1088 = vmatpush1.bf16.msra.mxu0 0
        %1089 = vmatprep.subr.bf16.mxu0 0
        %1090 = vmatpush1.bf16.msra.mxu0 0
        %1091 = vmatprep.subr.bf16.mxu0 0
        %1092 = vmatpush1.bf16.msra.mxu0 0
        %1093 = vmatprep.mubr.bf16.mxu0 0
        %1094 = vmatmul.mubr.bf16.gmra.mrb[0].mxu0 %v1059
        %v1095 = vpop.f32.mrb[0].mxu0
        %v1096 = vadd.f32 %v1044, %v1095
        %v1097 = vpop.f32.mrb[0].mxu0
        %v1098 = vpop.f32.mrb[0].mxu0
        %v1099 = vpop.f32.mrb[0].mxu0
        %1100 = vdwg.mxu0
        %v1101 = vadd.f32 %v410, %v1096
        %v1102 = vld [vmem:[%s6] sm:$0x1]
        %v1103 = vld [vmem:[%s7] sm:$0x1]
        %v1104 = vsel %vm413, %v1101, 0.0
        %1105 = vadd.xlane.f32.xlu0 %v1104
        %v1106 = vpop.xlane.xlu0 %1105
        %v1107 = vmul.f32 %v1106, %v417
        %v1108 = vsub.f32 %v1101, %v1107
        %v1109 = vmul.f32 %v1108, %v1108
        %v1110 = vsel %vm413, %v1109, 0.0
        %1111 = vadd.xlane.f32.xlu0 %v1110
        %v1112 = vpop.xlane.xlu0 %1111
        %v1113 = vmul.f32 %v1112, %v417
        %v1114 = vrsqrt.pop %v1113
        %v1115 = vmul.f32 %v1113, %v1114
        %vm1116 = vcmp.eq.f32.partialorder %v1113, inf
        %v1117 = vsel %vm1116, %v1113, %v1115
        %vm1118 = vcmp.eq.f32.partialorder %v1113, 0.0
        %v1119 = vand.u32 %v1113, 2147483648
        %v1120 = vsel %vm1118, %v1119, %v1117
        %v1121 = vadd.f32 %v1120, 1e-05
        %v1122 = vrcp.pop %v1121
        %v1123 = vmul.f32 %v1108, %v1122
        %v1125 = vlaneseq
        %v1126 = vshrl.u32 %v1125, 7
        %v1127 = vsub.s32 0, %v1126
        %v1128 = vrot.slane %v1102, %v1127
        %v1130 = vmul.f32 %v1128, %v1123
        %v1132 = vlaneseq
        %v1133 = vshrl.u32 %v1132, 7
        %v1134 = vsub.s32 0, %v1133
        %v1135 = vrot.slane %v1103, %v1134
        %v1137 = vadd.f32 %v1130, %v1135
        %v1138 = vpack.c.bf16 %v1137, %v1137
        %v1139 = vld [vmem:[%s8] sm:$0xf]
        %v1140 = vld [vmem:[%s8 + $0x4] sm:$0xf]
        %v1141 = vld [vmem:[%s8 + $0x8] sm:$0xf]
        %v1142 = vld [vmem:[%s8 + $0xc] sm:$0xf]
        %v1143 = vld [vmem:[%s9] sm:$0x1]
        %v1145 = vlaneseq
        %v1146 = vshrl.u32 %v1145, 7
        %v1147 = vsub.s32 0, %v1146
        %v1148 = vrot.slane %v1143, %v1147
        %v1154 = vunpack.c.l.b16 %v1139
        %v1155 = vunpack.c.l.b16 %v1140
        %v1156 = vunpack.c.l.b16 %v1141
        %v1157 = vunpack.c.l.b16 %v1142
        %v1158 = vpack.c.b16 %v1155, %v1154
        %v1159 = vpack.c.b16 %v1157, %v1156
        %v1163 = vsel %vm413, %v1138, 0
        %1165 = vmatprep.subr.bf16.mxu0 0
        %1166 = vmatpush1.bf16.msra.mxu0 %v1158
        %1167 = vmatprep.subr.bf16.mxu0 0
        %1168 = vmatpush1.bf16.msra.mxu0 %v1159
        %1169 = vmatprep.subr.bf16.mxu0 0
        %1170 = vmatpush1.bf16.msra.mxu0 0
        %1171 = vmatprep.subr.bf16.mxu0 0
        %1172 = vmatpush1.bf16.msra.mxu0 0
        %1173 = vmatprep.subr.bf16.mxu0 0
        %1174 = vmatpush1.bf16.msra.mxu0 0
        %1175 = vmatprep.subr.bf16.mxu0 0
        %1176 = vmatpush1.bf16.msra.mxu0 0
        %1177 = vmatprep.subr.bf16.mxu0 0
        %1178 = vmatpush1.bf16.msra.mxu0 0
        %1179 = vmatprep.subr.bf16.mxu0 0
        %1180 = vmatpush1.bf16.msra.mxu0 0
        %1181 = vmatprep.subr.bf16.mxu0 0
        %1182 = vmatpush1.bf16.msra.mxu0 0
        %1183 = vmatprep.subr.bf16.mxu0 0
        %1184 = vmatpush1.bf16.msra.mxu0 0
        %1185 = vmatprep.subr.bf16.mxu0 0
        %1186 = vmatpush1.bf16.msra.mxu0 0
        %1187 = vmatprep.subr.bf16.mxu0 0
        %1188 = vmatpush1.bf16.msra.mxu0 0
        %1189 = vmatprep.subr.bf16.mxu0 0
        %1190 = vmatpush1.bf16.msra.mxu0 0
        %1191 = vmatprep.subr.bf16.mxu0 0
        %1192 = vmatpush1.bf16.msra.mxu0 0
        %1193 = vmatprep.subr.bf16.mxu0 0
        %1194 = vmatpush1.bf16.msra.mxu0 0
        %1195 = vmatprep.subr.bf16.mxu0 0
        %1196 = vmatpush1.bf16.msra.mxu0 0
        %1197 = vmatprep.mubr.bf16.mxu0 0
        %1198 = vmatmul.mubr.bf16.gmra.mrb[0].mxu0 %v1163
        %v1199 = vpop.f32.mrb[0].mxu0
        %v1200 = vadd.f32 %v1148, %v1199
        %v1201 = vpop.f32.mrb[0].mxu0
        %v1202 = vpop.f32.mrb[0].mxu0
        %v1203 = vpop.f32.mrb[0].mxu0
        %1204 = vdwg.mxu0
        %v1205 = vmul.f32 %v1200, 0.5
        %v1206 = vmul.f32 %v1200, 0.044715
        %v1207 = vmul.f32 %v1206, %v1200
        %v1208 = vmul.f32 %v1207, %v1200
        %v1209 = vadd.f32 %v1200, %v1208
        %v1210 = vmul.f32 %v1209, 0.7978846
        %v1211 = vtanh.pop %v1210
        %v1212 = vadd.f32 %v1211, 1.0
        %v1213 = vmul.f32 %v1205, %v1212
        %v1214 = vpack.c.bf16 %v1213, %v1213
        %v1215 = vld [vmem:[%s10] sm:$0xf]
        %v1216 = vld [vmem:[%s10 + $0x4] sm:$0xf]
        %v1217 = vld [vmem:[%s10 + $0x8] sm:$0xf]
        %v1218 = vld [vmem:[%s10 + $0xc] sm:$0xf]
        %v1219 = vld [vmem:[%s10 + $0x10] sm:$0xf]
        %v1220 = vld [vmem:[%s10 + $0x14] sm:$0xf]
        %v1221 = vld [vmem:[%s10 + $0x18] sm:$0xf]
        %v1222 = vld [vmem:[%s10 + $0x1c] sm:$0xf]
        %v1223 = vld [vmem:[%s10 + $0x20] sm:$0xf]
        %v1224 = vld [vmem:[%s10 + $0x24] sm:$0xf]
        %v1225 = vld [vmem:[%s10 + $0x28] sm:$0xf]
        %v1226 = vld [vmem:[%s10 + $0x2c] sm:$0xf]
        %v1227 = vld [vmem:[%s10 + $0x30] sm:$0xf]
        %v1228 = vld [vmem:[%s10 + $0x34] sm:$0xf]
        %v1229 = vld [vmem:[%s10 + $0x38] sm:$0xf]
        %v1230 = vld [vmem:[%s10 + $0x3c] sm:$0xf]
        %v1231 = vld [vmem:[%s11] sm:$0x1]
        %v1233 = vlaneseq
        %v1234 = vshrl.u32 %v1233, 7
        %v1235 = vsub.s32 0, %v1234
        %v1236 = vrot.slane %v1231, %v1235
        %v1254 = vunpack.c.l.b16 %v1215
        %v1255 = vunpack.c.l.b16 %v1216
        %v1256 = vunpack.c.l.b16 %v1217
        %v1257 = vunpack.c.l.b16 %v1218
        %v1258 = vunpack.c.l.b16 %v1219
        %v1259 = vunpack.c.l.b16 %v1220
        %v1260 = vunpack.c.l.b16 %v1221
        %v1261 = vunpack.c.l.b16 %v1222
        %v1262 = vunpack.c.l.b16 %v1223
        %v1263 = vunpack.c.l.b16 %v1224
        %v1264 = vunpack.c.l.b16 %v1225
        %v1265 = vunpack.c.l.b16 %v1226
        %v1266 = vunpack.c.l.b16 %v1227
        %v1267 = vunpack.c.l.b16 %v1228
        %v1268 = vunpack.c.l.b16 %v1229
        %v1269 = vunpack.c.l.b16 %v1230
        %v1270 = vpack.c.b16 %v1255, %v1254
        %v1271 = vpack.c.b16 %v1257, %v1256
        %v1272 = vpack.c.b16 %v1259, %v1258
        %v1273 = vpack.c.b16 %v1261, %v1260
        %v1274 = vpack.c.b16 %v1263, %v1262
        %v1275 = vpack.c.b16 %v1265, %v1264
        %v1276 = vpack.c.b16 %v1267, %v1266
        %v1277 = vpack.c.b16 %v1269, %v1268
        %1286 = vmatprep.subr.bf16.mxu0 0
        %1287 = vmatpush1.bf16.msra.mxu0 %v1270
        %1288 = vmatprep.subr.bf16.mxu0 0
        %1289 = vmatpush1.bf16.msra.mxu0 %v1271
        %1290 = vmatprep.subr.bf16.mxu0 0
        %1291 = vmatpush1.bf16.msra.mxu0 %v1272
        %1292 = vmatprep.subr.bf16.mxu0 0
        %1293 = vmatpush1.bf16.msra.mxu0 %v1273
        %1294 = vmatprep.subr.bf16.mxu0 0
        %1295 = vmatpush1.bf16.msra.mxu0 %v1274
        %1296 = vmatprep.subr.bf16.mxu0 0
        %1297 = vmatpush1.bf16.msra.mxu0 %v1275
        %1298 = vmatprep.subr.bf16.mxu0 0
        %1299 = vmatpush1.bf16.msra.mxu0 %v1276
        %1300 = vmatprep.subr.bf16.mxu0 0
        %1301 = vmatpush1.bf16.msra.mxu0 %v1277
        %1302 = vmatprep.subr.bf16.mxu0 0
        %1303 = vmatpush1.bf16.msra.mxu0 0
        %1304 = vmatprep.subr.bf16.mxu0 0
        %1305 = vmatpush1.bf16.msra.mxu0 0
        %1306 = vmatprep.subr.bf16.mxu0 0
        %1307 = vmatpush1.bf16.msra.mxu0 0
        %1308 = vmatprep.subr.bf16.mxu0 0
        %1309 = vmatpush1.bf16.msra.mxu0 0
        %1310 = vmatprep.subr.bf16.mxu0 0
        %1311 = vmatpush1.bf16.msra.mxu0 0
        %1312 = vmatprep.subr.bf16.mxu0 0
        %1313 = vmatpush1.bf16.msra.mxu0 0
        %1314 = vmatprep.subr.bf16.mxu0 0
        %1315 = vmatpush1.bf16.msra.mxu0 0
        %1316 = vmatprep.subr.bf16.mxu0 0
        %1317 = vmatpush1.bf16.msra.mxu0 0
        %1318 = vmatprep.mubr.bf16.mxu0 0
        %1319 = vmatmul.mubr.bf16.gmra.mrb[0].mxu0 %v1214
        %v1320 = vpop.f32.mrb[0].mxu0
        %v1321 = vadd.f32 %v1236, %v1320
        %v1322 = vpop.f32.mrb[0].mxu0
        %v1323 = vpop.f32.mrb[0].mxu0
        %v1324 = vpop.f32.mrb[0].mxu0
        %1325 = vdwg.mxu0
        %v1326 = vadd.f32 %v1101, %v1321
        %1327 = vst.msk [vmem:[%s404] sm:$0xff] %vm413, %v1326
        %s1328 = sand.u32 %s291, 1
        %s1329 = scalar_lea.sflag [#allocation7], %s1328
        %s1330 = sand.u32 %s291, 1
        %s1331 = smul.addr %s1330, 8
        %s1332 = scalar_lea.vmem [#allocation6], %s1331
        // Predicated region
        $region69: #{tpu_custom_call.1} parent=67 // pred_check
          %p1333 = pneg %p301
        $region70: #{tpu_custom_call.1} parent=67 // pred_check_branch
          %1335 = sbr.rel (%p1333) target = $region72
        $region71: #{tpu_custom_call.1} parent=67 // pred_region
          %s1337 = ssub.s32 128, 128
          %1338 = vsyncadd %s1329, %s1337
          %s1339 = smul.addr %s26, 128
          %s1340 = scalar_lea.hbm %s12, %s1339
          %s1342 = sshll.u32 %s1332, 4
          %s1343 = int_to_ptr.vmem [resolvable:$true] %s1342
          %1345 = dma.vmem_to_hbm [thread:$0]  %s1343, 128, %s1340, %s1329
        $region72: #{tpu_custom_call.1} parent=67 // pred_fallthru
          _
      $region68: #{tpu_custom_call.1} parent=5 // pred_fallthru
        _
      %p1346 = scmp.le.s32.totalorder 2, %s21
      // Predicated region
      $region73: #{tpu_custom_call.1} parent=5 // pred_check
        %p1347 = pneg %p1346
      $region74: #{tpu_custom_call.1} parent=5 // pred_check_branch
        %1349 = sbr.rel (%p1347) target = $region76
      $region75: #{tpu_custom_call.1} parent=5 // pred_region
        %s1350 = ssub.s32 %s21, 2
        // Predicated region
        $region77: #{tpu_custom_call.1} parent=75 // pred_check
          %p1351 = pneg %p307
        $region78: #{tpu_custom_call.1} parent=75 // pred_check_branch
          %1353 = sbr.rel (%p1351) target = $region80
        $region79: #{tpu_custom_call.1} parent=75 // pred_region
          %s1354 = sand.u32 %s292, 1
          %s1355 = scalar_lea.sflag [#allocation7], %s1354
          %s1356 = sand.u32 %s292, 1
          %s1357 = smul.addr %s1356, 8
          %s1358 = scalar_lea.vmem [#allocation6], %s1357
          %1359 = dma.done %s1355, 128
        $region80: #{tpu_custom_call.1} parent=75 // pred_fallthru
          _
      $region76: #{tpu_custom_call.1} parent=5 // pred_fallthru
        _
    $region6: #{tpu_custom_call.1} parent=1 // loop_footer
      %s25 = sadd.s32 1, %s21
    $region7: #{tpu_custom_call.1} parent=1 // loop_footer_branch
      %20 = sbr.rel target = $region3
    $region8: #{tpu_custom_call.1} parent=1 // loop_exit
      _
    %1360 = vsyncpa [#allocation7], 1
    %s1361 = scalar_lea.sflag [#allocation7], 1
    %1362 = vsyncpa %s1361, 1

</llo_original>
